<compile_context>
chip_gen: v5e
topology: v5e:2x2
jax: 0.10.0
libtpu: 0.0.40
codegen_flags: <defaults>
</compile_context>

<pallas_src>
import functools

import jax
import jax.numpy as jnp
from jax import lax
from jax.experimental import pallas as pl
from jax.experimental.pallas import tpu as pltpu


# ---------------------------------------------------------------------------
# helpers
# ---------------------------------------------------------------------------
def _round_up(x, m):
    return ((x + m - 1) // m) * m


def _default_episode_block(n_way, n_episodes):
    # Enough episodes per grid step that the scores slab is >= 128 lanes wide
    # (lane-dense writeback), rounded to a sublane multiple of 8, but never
    # more than the (rounded-up) episode count.
    blk = _round_up(max(1, -(-128 // n_way)), 8)
    return min(blk, _round_up(n_episodes, 8))


def _pad_leading(x, n_pad):
    if x.shape[0] == n_pad:
        return x
    cfg = [(0, n_pad - x.shape[0])] + [(0, 0)] * (x.ndim - 1)
    return jnp.pad(x, cfg)


# ---------------------------------------------------------------------------
# shared in-kernel math (per episode block)
# ---------------------------------------------------------------------------
def _prototypes_and_qp(zs_ref, zq_ref):
    zs = zs_ref[...].astype(jnp.float32)            # (E_blk, n_way, n_sup, D)
    zq = zq_ref[...].astype(jnp.float32)            # (E_blk, Q, D)
    proto = jnp.mean(zs, axis=2)                    # (E_blk, n_way, D)
    # Batched MXU matmul; both operands contract their last (lane-minor) dim,
    # which is the MXU-native RHS-transposed feed -> no explicit transpose.
    qp = jnp.einsum("eqd,ewd->eqw", zq, proto,
                    preferred_element_type=jnp.float32)     # (E_blk, Q, n_way)
    pp = jnp.sum(proto * proto, axis=-1)            # (E_blk, n_way)
    return zq, qp, pp


# ---------------------------------------------------------------------------
# Kernel A: scores forward, lane-dense (Q, E_blk*n_way) slab per grid step
# ---------------------------------------------------------------------------
def _proto_scores_kernel(zs_ref, zq_ref, out_ref):
    """out[0, q, e*n_way + w] = -||z_query[e,q] - proto[e,w]||^2 (f32)."""
    zq, qp, pp = _prototypes_and_qp(zs_ref, zq_ref)
    qq = jnp.sum(zq * zq, axis=-1, keepdims=True)           # (E_blk, Q, 1)
    scores = 2.0 * qp - qq - pp[:, None, :]                 # (E_blk, Q, n_way)
    e_blk, _, n_way = scores.shape
    # Trace-time unrolled slab assembly at static lane offsets: the output
    # block (and its HBM DMA) stays lane-dense.
    for e in range(e_blk):
        out_ref[0, :, e * n_way:(e + 1) * n_way] = scores[e].astype(out_ref.dtype)


# ---------------------------------------------------------------------------
# Kernel B: fused forward + cross-entropy, loss-only (no scores writeback)
# ---------------------------------------------------------------------------
def _proto_ce_loss_kernel(zs_ref, zq_ref, y_ref, loss_ref):
    """Per-episode mean CE.  ||q||^2 cancels in CE -> skipped entirely."""
    _, qp, pp = _prototypes_and_qp(zs_ref, zq_ref)
    logits = 2.0 * qp - pp[:, None, :]                      # (E_blk, Q, n_way)
    m = jnp.max(logits, axis=-1, keepdims=True)             # (E_blk, Q, 1)
    lse = m + jnp.log(jnp.sum(jnp.exp(logits - m), axis=-1, keepdims=True))
    cols = lax.broadcasted_iota(jnp.int32, logits.shape, 2)
    onehot = (cols == y_ref[...][:, :, None]).astype(jnp.float32)
    picked = jnp.sum(onehot * logits, axis=-1, keepdims=True)   # (E_blk, Q, 1)
    nll = lse - picked                                          # (E_blk, Q, 1)
    inv_q = 1.0 / logits.shape[1]                               # trace-time const
    loss_ref[...] = jnp.sum(nll, axis=1) * inv_q                # (E_blk, 1)


# ---------------------------------------------------------------------------
# wrappers
# ---------------------------------------------------------------------------
@functools.partial(jax.jit, static_argnames=("episode_block",))
def meta_metric_forward(z_support, z_query, *, episode_block=None):
    """Prototypical forward (module's abstract `forward`), episode-batched.

    z_support: (E, n_way, n_support, D) or (n_way, n_support, D)
    z_query:   (E, Q, D)                or (Q, D)      with Q = n_way*n_query
    returns scores (E, Q, n_way) (or (Q, n_way) unbatched), float32.
    """
    unbatched = z_support.ndim == 3
    if unbatched:
        z_support = z_support[None]
        z_query = z_query[None]
    n_episodes, n_way, n_sup, d = z_support.shape
    _, q, d2 = z_query.shape
    assert d == d2 and z_query.shape[0] == n_episodes

    e_blk = episode_block or _default_episode_block(n_way, n_episodes)
    e_pad = _round_up(n_episodes, e_blk)
    n_blocks = e_pad // e_blk
    zs = _pad_leading(z_support, e_pad)
    zq = _pad_leading(z_query, e_pad)

    slab = pl.pallas_call(
        _proto_scores_kernel,
        out_shape=jax.ShapeDtypeStruct((n_blocks, q, e_blk * n_way), jnp.float32),
        grid_spec=pltpu.PrefetchScalarGridSpec(
            num_scalar_prefetch=0,
            grid=(n_blocks,),
            in_specs=[
                pl.BlockSpec((e_blk, n_way, n_sup, d), lambda b: (b, 0, 0, 0)),
                pl.BlockSpec((e_blk, q, d), lambda b: (b, 0, 0)),
            ],
            out_specs=pl.BlockSpec((1, q, e_blk * n_way), lambda b: (b, 0, 0)),
        ),
        compiler_params=pltpu.CompilerParams(
            dimension_semantics=("parallel",)),   # megacore-shard episode blocks (v7x)
    )(zs, zq)

    # (n_blocks, Q, E_blk*n_way) -> (E, Q, n_way): wrapper-side layout plumbing.
    scores = slab.reshape(n_blocks, q, e_blk, n_way).transpose(0, 2, 1, 3)
    scores = scores.reshape(e_pad, q, n_way)[:n_episodes]
    return scores[0] if unbatched else scores


@functools.partial(jax.jit, static_argnames=("episode_block",))
def meta_metric_loss(z_support, z_query, y, *, episode_block=None):
    """Fused forward + F.cross_entropy(scores, y) (mean over queries).

    Returns per-episode losses of shape (E,) (scalar for unbatched inputs).
    NOTE: like the PyTorch path, labels are trusted; out-of-range labels give
    loss = logsumexp(scores) instead of raising (compare-based one-hot, no
    OOB gather).
    """
    unbatched = z_support.ndim == 3
    if unbatched:
        z_support = z_support[None]
        z_query = z_query[None]
        y = y[None]
    n_episodes, n_way, n_sup, d = z_support.shape
    _, q, _ = z_query.shape
    y = y.reshape(n_episodes, q).astype(jnp.int32)

    e_blk = episode_block or _default_episode_block(n_way, n_episodes)
    e_pad = _round_up(n_episodes, e_blk)
    n_blocks = e_pad // e_blk
    zs = _pad_leading(z_support, e_pad)
    zq = _pad_leading(z_query, e_pad)
    yp = _pad_leading(y, e_pad)

    losses = pl.pallas_call(
        _proto_ce_loss_kernel,
        out_shape=jax.ShapeDtypeStruct((e_pad, 1), jnp.float32),
        grid_spec=pltpu.PrefetchScalarGridSpec(
            num_scalar_prefetch=0,
            grid=(n_blocks,),
            in_specs=[
                pl.BlockSpec((e_blk, n_way, n_sup, d), lambda b: (b, 0, 0, 0)),
                pl.BlockSpec((e_blk, q, d), lambda b: (b, 0, 0)),
                pl.BlockSpec((e_blk, q), lambda b: (b, 0)),
            ],
            out_specs=pl.BlockSpec((e_blk, 1), lambda b: (b, 0)),
        ),
        compiler_params=pltpu.CompilerParams(
            dimension_semantics=("parallel",)),
    )(zs, zq, yp)

    per_episode = losses[:n_episodes, 0]
    return per_episode[0] if unbatched else per_episode


# ---------------------------------------------------------------------------
if __name__ == "__main__":
    n_way, n_support, n_query, feature_dim = 4, 8, 4, 32
    n_episodes = 64                       # 2 grid steps at E_blk = 32
    q = n_way * n_query

    key = jax.random.PRNGKey(0)
    k1, k2 = jax.random.split(key)
    z_support = jax.random.normal(
        k1, (n_episodes, n_way, n_support, feature_dim), jnp.float32)
    z_query = jax.random.normal(k2, (n_episodes, q, feature_dim), jnp.float32)
    y = jnp.tile(jnp.repeat(jnp.arange(n_way, dtype=jnp.int32), n_query)[None, :],
                 (n_episodes, 1))

    scores = meta_metric_forward(z_support, z_query)        # (E, Q, n_way)
    losses = meta_metric_loss(z_support, z_query, y)        # (E,)
    # single-episode API (matches the module's per-episode contract)
    s0 = meta_metric_forward(z_support[0], z_query[0])      # (Q, n_way)
    l0 = meta_metric_loss(z_support[0], z_query[0], y[0])   # scalar
    jax.block_until_ready((scores, losses, s0, l0))

    # plain-JAX reference (mirrors the PyTorch module per episode)
    proto = jnp.mean(z_support, axis=2)                                     # (E, W, D)
    ref_scores = -jnp.sum((z_query[:, :, None, :] - proto[:, None, :, :]) ** 2, axis=-1)
    ref_lse = jax.nn.logsumexp(ref_scores, axis=-1)                         # (E, Q)
    ref_picked = jnp.take_along_axis(ref_scores, y[..., None], axis=-1)[..., 0]
    ref_losses = jnp.mean(ref_lse - ref_picked, axis=-1)                    # (E,)

    assert jnp.allclose(scores, ref_scores, atol=1e-4, rtol=1e-4)
    assert jnp.allclose(losses, ref_losses, atol=1e-4, rtol=1e-4)
    assert jnp.allclose(s0, ref_scores[0], atol=1e-4, rtol=1e-4)
    assert jnp.allclose(l0, ref_losses[0], atol=1e-4, rtol=1e-4)
    assert jnp.allclose(jnp.mean(losses), jnp.mean(ref_losses), atol=1e-4)

    print("KERNEL_OK")
</pallas_src>

<mosaic_0001>
module attributes {stable_mosaic.version = 11 : i64} {
  func.func @_proto_scores_kernel(%arg0: i32, %arg1: memref<32x4x8x32xf32, #tpu.memory_space<vmem>>, %arg2: memref<32x16x32xf32, #tpu.memory_space<vmem>>, %arg3: memref<1x16x128xf32, #tpu.memory_space<vmem>>) attributes {dimension_semantics = [#tpu.dimension_semantics<parallel>], iteration_bounds = array<i64: 2>, scalar_prefetch = 0 : i64, scratch_operands = 0 : i64, tpu.core_type = #tpu.core_type<tc>, window_params = [{transform_indices = @transform_0, window_bounds = array<i64: 32, 4, 8, 32>}, {transform_indices = @transform_1, window_bounds = array<i64: 32, 16, 32>}, {transform_indices = @transform_2, window_bounds = array<i64: 1, 16, 128>}]} {
    %c0 = arith.constant 0 : index
    %c0_0 = arith.constant 0 : index
    %c0_1 = arith.constant 0 : index
    %c0_2 = arith.constant 0 : index
    %0 = vector.load %arg1[%c0, %c0_0, %c0_1, %c0_2] : memref<32x4x8x32xf32, #tpu.memory_space<vmem>>, vector<32x4x8x32xf32>
    %c0_3 = arith.constant 0 : index
    %c0_4 = arith.constant 0 : index
    %c0_5 = arith.constant 0 : index
    %1 = vector.load %arg2[%c0_3, %c0_4, %c0_5] : memref<32x16x32xf32, #tpu.memory_space<vmem>>, vector<32x16x32xf32>
    %cst = arith.constant dense<0.000000e+00> : vector<32x4x32xf32>
    %2 = vector.multi_reduction <add>, %0, %cst [2] : vector<32x4x8x32xf32> to vector<32x4x32xf32>
    %cst_6 = arith.constant 8.000000e+00 : f32
    %3 = vector.broadcast %cst_6 : f32 to vector<32x4x32xf32>
    %4 = arith.divf %2, %3 : vector<32x4x32xf32>
    "tpu.trace_start"() <{level = 10 : i32, message = "eqd,ewd->eqw"}> : () -> ()
    %cst_7 = arith.constant dense<0.000000e+00> : vector<32x16x4xf32>
    %5 = tpu.matmul %1, %4, %cst_7 {dimension_numbers = #tpu.dot_dimension_numbers<[2], [2], [1], [1], [0, 0, 0, 1, 1, 1], [0], [0]>} : vector<32x16x32xf32>, vector<32x4x32xf32>, vector<32x16x4xf32> -> vector<32x16x4xf32>
    "tpu.trace_stop"() : () -> ()
    %6 = arith.mulf %4, %4 : vector<32x4x32xf32>
    %cst_8 = arith.constant dense<0.000000e+00> : vector<32x4xf32>
    %7 = vector.multi_reduction <add>, %6, %cst_8 [2] : vector<32x4x32xf32> to vector<32x4xf32>
    %8 = arith.mulf %1, %1 : vector<32x16x32xf32>
    %cst_9 = arith.constant dense<0.000000e+00> : vector<32x16xf32>
    %9 = vector.multi_reduction <add>, %8, %cst_9 [2] : vector<32x16x32xf32> to vector<32x16xf32>
    %10 = vector.shape_cast %9 : vector<32x16xf32> to vector<32x16x1xf32>
    %cst_10 = arith.constant 2.000000e+00 : f32
    %11 = vector.broadcast %cst_10 : f32 to vector<32x16x4xf32>
    %12 = arith.mulf %11, %5 : vector<32x16x4xf32>
    %13 = vector.broadcast %10 : vector<32x16x1xf32> to vector<32x16x4xf32>
    %14 = arith.subf %12, %13 : vector<32x16x4xf32>
    %15 = vector.shape_cast %7 : vector<32x4xf32> to vector<32x1x4xf32>
    %16 = vector.broadcast %15 : vector<32x1x4xf32> to vector<32x16x4xf32>
    %17 = arith.subf %14, %16 : vector<32x16x4xf32>
    %18 = vector.extract_strided_slice %17 {offsets = [0, 0, 0], sizes = [1, 16, 4], strides = [1, 1, 1]} : vector<32x16x4xf32> to vector<1x16x4xf32>
    %19 = vector.shape_cast %18 : vector<1x16x4xf32> to vector<16x4xf32>
    %c0_11 = arith.constant 0 : index
    %c0_12 = arith.constant 0 : index
    %c0_13 = arith.constant 0 : index
    %20 = vector.load %arg3[%c0_11, %c0_12, %c0_13] : memref<1x16x128xf32, #tpu.memory_space<vmem>>, vector<1x16x4xf32>
    %21 = vector.shape_cast %20 : vector<1x16x4xf32> to vector<16x4xf32>
    %22 = vector.shape_cast %19 : vector<16x4xf32> to vector<1x16x4xf32>
    tpu.vector_store %arg3[%c0_11, %c0_12, %c0_13], %22 {strides = array<i32>} : memref<1x16x128xf32, #tpu.memory_space<vmem>>, vector<1x16x4xf32>,
    %23 = vector.extract_strided_slice %17 {offsets = [1, 0, 0], sizes = [1, 16, 4], strides = [1, 1, 1]} : vector<32x16x4xf32> to vector<1x16x4xf32>
    %24 = vector.shape_cast %23 : vector<1x16x4xf32> to vector<16x4xf32>
    %c0_14 = arith.constant 0 : index
    %c0_15 = arith.constant 0 : index
    %c4 = arith.constant 4 : index
    %25 = vector.load %arg3[%c0_14, %c0_15, %c4] : memref<1x16x128xf32, #tpu.memory_space<vmem>>, vector<1x16x4xf32>
    %26 = vector.shape_cast %25 : vector<1x16x4xf32> to vector<16x4xf32>
    %27 = vector.shape_cast %24 : vector<16x4xf32> to vector<1x16x4xf32>
    tpu.vector_store %arg3[%c0_14, %c0_15, %c4], %27 {strides = array<i32>} : memref<1x16x128xf32, #tpu.memory_space<vmem>>, vector<1x16x4xf32>,
    %28 = vector.extract_strided_slice %17 {offsets = [2, 0, 0], sizes = [1, 16, 4], strides = [1, 1, 1]} : vector<32x16x4xf32> to vector<1x16x4xf32>
    %29 = vector.shape_cast %28 : vector<1x16x4xf32> to vector<16x4xf32>
    %c0_16 = arith.constant 0 : index
    %c0_17 = arith.constant 0 : index
    %c8 = arith.constant 8 : index
    %30 = vector.load %arg3[%c0_16, %c0_17, %c8] : memref<1x16x128xf32, #tpu.memory_space<vmem>>, vector<1x16x4xf32>
    %31 = vector.shape_cast %30 : vector<1x16x4xf32> to vector<16x4xf32>
    %32 = vector.shape_cast %29 : vector<16x4xf32> to vector<1x16x4xf32>
    tpu.vector_store %arg3[%c0_16, %c0_17, %c8], %32 {strides = array<i32>} : memref<1x16x128xf32, #tpu.memory_space<vmem>>, vector<1x16x4xf32>,
    %33 = vector.extract_strided_slice %17 {offsets = [3, 0, 0], sizes = [1, 16, 4], strides = [1, 1, 1]} : vector<32x16x4xf32> to vector<1x16x4xf32>
    %34 = vector.shape_cast %33 : vector<1x16x4xf32> to vector<16x4xf32>
    %c0_18 = arith.constant 0 : index
    %c0_19 = arith.constant 0 : index
    %c12 = arith.constant 12 : index
    %35 = vector.load %arg3[%c0_18, %c0_19, %c12] : memref<1x16x128xf32, #tpu.memory_space<vmem>>, vector<1x16x4xf32>
    %36 = vector.shape_cast %35 : vector<1x16x4xf32> to vector<16x4xf32>
    %37 = vector.shape_cast %34 : vector<16x4xf32> to vector<1x16x4xf32>
    tpu.vector_store %arg3[%c0_18, %c0_19, %c12], %37 {strides = array<i32>} : memref<1x16x128xf32, #tpu.memory_space<vmem>>, vector<1x16x4xf32>,
    %38 = vector.extract_strided_slice %17 {offsets = [4, 0, 0], sizes = [1, 16, 4], strides = [1, 1, 1]} : vector<32x16x4xf32> to vector<1x16x4xf32>
    %39 = vector.shape_cast %38 : vector<1x16x4xf32> to vector<16x4xf32>
    %c0_20 = arith.constant 0 : index
    %c0_21 = arith.constant 0 : index
    %c16 = arith.constant 16 : index
    %40 = vector.load %arg3[%c0_20, %c0_21, %c16] : memref<1x16x128xf32, #tpu.memory_space<vmem>>, vector<1x16x4xf32>
    %41 = vector.shape_cast %40 : vector<1x16x4xf32> to vector<16x4xf32>
    %42 = vector.shape_cast %39 : vector<16x4xf32> to vector<1x16x4xf32>
    tpu.vector_store %arg3[%c0_20, %c0_21, %c16], %42 {strides = array<i32>} : memref<1x16x128xf32, #tpu.memory_space<vmem>>, vector<1x16x4xf32>,
    %43 = vector.extract_strided_slice %17 {offsets = [5, 0, 0], sizes = [1, 16, 4], strides = [1, 1, 1]} : vector<32x16x4xf32> to vector<1x16x4xf32>
    %44 = vector.shape_cast %43 : vector<1x16x4xf32> to vector<16x4xf32>
    %c0_22 = arith.constant 0 : index
    %c0_23 = arith.constant 0 : index
    %c20 = arith.constant 20 : index
    %45 = vector.load %arg3[%c0_22, %c0_23, %c20] : memref<1x16x128xf32, #tpu.memory_space<vmem>>, vector<1x16x4xf32>
    %46 = vector.shape_cast %45 : vector<1x16x4xf32> to vector<16x4xf32>
    %47 = vector.shape_cast %44 : vector<16x4xf32> to vector<1x16x4xf32>
    tpu.vector_store %arg3[%c0_22, %c0_23, %c20], %47 {strides = array<i32>} : memref<1x16x128xf32, #tpu.memory_space<vmem>>, vector<1x16x4xf32>,
    %48 = vector.extract_strided_slice %17 {offsets = [6, 0, 0], sizes = [1, 16, 4], strides = [1, 1, 1]} : vector<32x16x4xf32> to vector<1x16x4xf32>
    %49 = vector.shape_cast %48 : vector<1x16x4xf32> to vector<16x4xf32>
    %c0_24 = arith.constant 0 : index
    %c0_25 = arith.constant 0 : index
    %c24 = arith.constant 24 : index
    %50 = vector.load %arg3[%c0_24, %c0_25, %c24] : memref<1x16x128xf32, #tpu.memory_space<vmem>>, vector<1x16x4xf32>
    %51 = vector.shape_cast %50 : vector<1x16x4xf32> to vector<16x4xf32>
    %52 = vector.shape_cast %49 : vector<16x4xf32> to vector<1x16x4xf32>
    tpu.vector_store %arg3[%c0_24, %c0_25, %c24], %52 {strides = array<i32>} : memref<1x16x128xf32, #tpu.memory_space<vmem>>, vector<1x16x4xf32>,
    %53 = vector.extract_strided_slice %17 {offsets = [7, 0, 0], sizes = [1, 16, 4], strides = [1, 1, 1]} : vector<32x16x4xf32> to vector<1x16x4xf32>
    %54 = vector.shape_cast %53 : vector<1x16x4xf32> to vector<16x4xf32>
    %c0_26 = arith.constant 0 : index
    %c0_27 = arith.constant 0 : index
    %c28 = arith.constant 28 : index
    %55 = vector.load %arg3[%c0_26, %c0_27, %c28] : memref<1x16x128xf32, #tpu.memory_space<vmem>>, vector<1x16x4xf32>
    %56 = vector.shape_cast %55 : vector<1x16x4xf32> to vector<16x4xf32>
    %57 = vector.shape_cast %54 : vector<16x4xf32> to vector<1x16x4xf32>
    tpu.vector_store %arg3[%c0_26, %c0_27, %c28], %57 {strides = array<i32>} : memref<1x16x128xf32, #tpu.memory_space<vmem>>, vector<1x16x4xf32>,
    %58 = vector.extract_strided_slice %17 {offsets = [8, 0, 0], sizes = [1, 16, 4], strides = [1, 1, 1]} : vector<32x16x4xf32> to vector<1x16x4xf32>
    %59 = vector.shape_cast %58 : vector<1x16x4xf32> to vector<16x4xf32>
    %c0_28 = arith.constant 0 : index
    %c0_29 = arith.constant 0 : index
    %c32 = arith.constant 32 : index
    %60 = vector.load %arg3[%c0_28, %c0_29, %c32] : memref<1x16x128xf32, #tpu.memory_space<vmem>>, vector<1x16x4xf32>
    %61 = vector.shape_cast %60 : vector<1x16x4xf32> to vector<16x4xf32>
    %62 = vector.shape_cast %59 : vector<16x4xf32> to vector<1x16x4xf32>
    tpu.vector_store %arg3[%c0_28, %c0_29, %c32], %62 {strides = array<i32>} : memref<1x16x128xf32, #tpu.memory_space<vmem>>, vector<1x16x4xf32>,
    %63 = vector.extract_strided_slice %17 {offsets = [9, 0, 0], sizes = [1, 16, 4], strides = [1, 1, 1]} : vector<32x16x4xf32> to vector<1x16x4xf32>
    %64 = vector.shape_cast %63 : vector<1x16x4xf32> to vector<16x4xf32>
    %c0_30 = arith.constant 0 : index
    %c0_31 = arith.constant 0 : index
    %c36 = arith.constant 36 : index
    %65 = vector.load %arg3[%c0_30, %c0_31, %c36] : memref<1x16x128xf32, #tpu.memory_space<vmem>>, vector<1x16x4xf32>
    %66 = vector.shape_cast %65 : vector<1x16x4xf32> to vector<16x4xf32>
    %67 = vector.shape_cast %64 : vector<16x4xf32> to vector<1x16x4xf32>
    tpu.vector_store %arg3[%c0_30, %c0_31, %c36], %67 {strides = array<i32>} : memref<1x16x128xf32, #tpu.memory_space<vmem>>, vector<1x16x4xf32>,
    %68 = vector.extract_strided_slice %17 {offsets = [10, 0, 0], sizes = [1, 16, 4], strides = [1, 1, 1]} : vector<32x16x4xf32> to vector<1x16x4xf32>
    %69 = vector.shape_cast %68 : vector<1x16x4xf32> to vector<16x4xf32>
    %c0_32 = arith.constant 0 : index
    %c0_33 = arith.constant 0 : index
    %c40 = arith.constant 40 : index
    %70 = vector.load %arg3[%c0_32, %c0_33, %c40] : memref<1x16x128xf32, #tpu.memory_space<vmem>>, vector<1x16x4xf32>
    %71 = vector.shape_cast %70 : vector<1x16x4xf32> to vector<16x4xf32>
    %72 = vector.shape_cast %69 : vector<16x4xf32> to vector<1x16x4xf32>
    tpu.vector_store %arg3[%c0_32, %c0_33, %c40], %72 {strides = array<i32>} : memref<1x16x128xf32, #tpu.memory_space<vmem>>, vector<1x16x4xf32>,
    %73 = vector.extract_strided_slice %17 {offsets = [11, 0, 0], sizes = [1, 16, 4], strides = [1, 1, 1]} : vector<32x16x4xf32> to vector<1x16x4xf32>
    %74 = vector.shape_cast %73 : vector<1x16x4xf32> to vector<16x4xf32>
    %c0_34 = arith.constant 0 : index
    %c0_35 = arith.constant 0 : index
    %c44 = arith.constant 44 : index
    %75 = vector.load %arg3[%c0_34, %c0_35, %c44] : memref<1x16x128xf32, #tpu.memory_space<vmem>>, vector<1x16x4xf32>
    %76 = vector.shape_cast %75 : vector<1x16x4xf32> to vector<16x4xf32>
    %77 = vector.shape_cast %74 : vector<16x4xf32> to vector<1x16x4xf32>
    tpu.vector_store %arg3[%c0_34, %c0_35, %c44], %77 {strides = array<i32>} : memref<1x16x128xf32, #tpu.memory_space<vmem>>, vector<1x16x4xf32>,
    %78 = vector.extract_strided_slice %17 {offsets = [12, 0, 0], sizes = [1, 16, 4], strides = [1, 1, 1]} : vector<32x16x4xf32> to vector<1x16x4xf32>
    %79 = vector.shape_cast %78 : vector<1x16x4xf32> to vector<16x4xf32>
    %c0_36 = arith.constant 0 : index
    %c0_37 = arith.constant 0 : index
    %c48 = arith.constant 48 : index
    %80 = vector.load %arg3[%c0_36, %c0_37, %c48] : memref<1x16x128xf32, #tpu.memory_space<vmem>>, vector<1x16x4xf32>
    %81 = vector.shape_cast %80 : vector<1x16x4xf32> to vector<16x4xf32>
    %82 = vector.shape_cast %79 : vector<16x4xf32> to vector<1x16x4xf32>
    tpu.vector_store %arg3[%c0_36, %c0_37, %c48], %82 {strides = array<i32>} : memref<1x16x128xf32, #tpu.memory_space<vmem>>, vector<1x16x4xf32>,
    %83 = vector.extract_strided_slice %17 {offsets = [13, 0, 0], sizes = [1, 16, 4], strides = [1, 1, 1]} : vector<32x16x4xf32> to vector<1x16x4xf32>
    %84 = vector.shape_cast %83 : vector<1x16x4xf32> to vector<16x4xf32>
    %c0_38 = arith.constant 0 : index
    %c0_39 = arith.constant 0 : index
    %c52 = arith.constant 52 : index
    %85 = vector.load %arg3[%c0_38, %c0_39, %c52] : memref<1x16x128xf32, #tpu.memory_space<vmem>>, vector<1x16x4xf32>
    %86 = vector.shape_cast %85 : vector<1x16x4xf32> to vector<16x4xf32>
    %87 = vector.shape_cast %84 : vector<16x4xf32> to vector<1x16x4xf32>
    tpu.vector_store %arg3[%c0_38, %c0_39, %c52], %87 {strides = array<i32>} : memref<1x16x128xf32, #tpu.memory_space<vmem>>, vector<1x16x4xf32>,
    %88 = vector.extract_strided_slice %17 {offsets = [14, 0, 0], sizes = [1, 16, 4], strides = [1, 1, 1]} : vector<32x16x4xf32> to vector<1x16x4xf32>
    %89 = vector.shape_cast %88 : vector<1x16x4xf32> to vector<16x4xf32>
    %c0_40 = arith.constant 0 : index
    %c0_41 = arith.constant 0 : index
    %c56 = arith.constant 56 : index
    %90 = vector.load %arg3[%c0_40, %c0_41, %c56] : memref<1x16x128xf32, #tpu.memory_space<vmem>>, vector<1x16x4xf32>
    %91 = vector.shape_cast %90 : vector<1x16x4xf32> to vector<16x4xf32>
    %92 = vector.shape_cast %89 : vector<16x4xf32> to vector<1x16x4xf32>
    tpu.vector_store %arg3[%c0_40, %c0_41, %c56], %92 {strides = array<i32>} : memref<1x16x128xf32, #tpu.memory_space<vmem>>, vector<1x16x4xf32>,
    %93 = vector.extract_strided_slice %17 {offsets = [15, 0, 0], sizes = [1, 16, 4], strides = [1, 1, 1]} : vector<32x16x4xf32> to vector<1x16x4xf32>
    %94 = vector.shape_cast %93 : vector<1x16x4xf32> to vector<16x4xf32>
    %c0_42 = arith.constant 0 : index
    %c0_43 = arith.constant 0 : index
    %c60 = arith.constant 60 : index
    %95 = vector.load %arg3[%c0_42, %c0_43, %c60] : memref<1x16x128xf32, #tpu.memory_space<vmem>>, vector<1x16x4xf32>
    %96 = vector.shape_cast %95 : vector<1x16x4xf32> to vector<16x4xf32>
    %97 = vector.shape_cast %94 : vector<16x4xf32> to vector<1x16x4xf32>
    tpu.vector_store %arg3[%c0_42, %c0_43, %c60], %97 {strides = array<i32>} : memref<1x16x128xf32, #tpu.memory_space<vmem>>, vector<1x16x4xf32>,
    %98 = vector.extract_strided_slice %17 {offsets = [16, 0, 0], sizes = [1, 16, 4], strides = [1, 1, 1]} : vector<32x16x4xf32> to vector<1x16x4xf32>
    %99 = vector.shape_cast %98 : vector<1x16x4xf32> to vector<16x4xf32>
    %c0_44 = arith.constant 0 : index
    %c0_45 = arith.constant 0 : index
    %c64 = arith.constant 64 : index
    %100 = vector.load %arg3[%c0_44, %c0_45, %c64] : memref<1x16x128xf32, #tpu.memory_space<vmem>>, vector<1x16x4xf32>
    %101 = vector.shape_cast %100 : vector<1x16x4xf32> to vector<16x4xf32>
    %102 = vector.shape_cast %99 : vector<16x4xf32> to vector<1x16x4xf32>
    tpu.vector_store %arg3[%c0_44, %c0_45, %c64], %102 {strides = array<i32>} : memref<1x16x128xf32, #tpu.memory_space<vmem>>, vector<1x16x4xf32>,
    %103 = vector.extract_strided_slice %17 {offsets = [17, 0, 0], sizes = [1, 16, 4], strides = [1, 1, 1]} : vector<32x16x4xf32> to vector<1x16x4xf32>
    %104 = vector.shape_cast %103 : vector<1x16x4xf32> to vector<16x4xf32>
    %c0_46 = arith.constant 0 : index
    %c0_47 = arith.constant 0 : index
    %c68 = arith.constant 68 : index
    %105 = vector.load %arg3[%c0_46, %c0_47, %c68] : memref<1x16x128xf32, #tpu.memory_space<vmem>>, vector<1x16x4xf32>
    %106 = vector.shape_cast %105 : vector<1x16x4xf32> to vector<16x4xf32>
    %107 = vector.shape_cast %104 : vector<16x4xf32> to vector<1x16x4xf32>
    tpu.vector_store %arg3[%c0_46, %c0_47, %c68], %107 {strides = array<i32>} : memref<1x16x128xf32, #tpu.memory_space<vmem>>, vector<1x16x4xf32>,
    %108 = vector.extract_strided_slice %17 {offsets = [18, 0, 0], sizes = [1, 16, 4], strides = [1, 1, 1]} : vector<32x16x4xf32> to vector<1x16x4xf32>
    %109 = vector.shape_cast %108 : vector<1x16x4xf32> to vector<16x4xf32>
    %c0_48 = arith.constant 0 : index
    %c0_49 = arith.constant 0 : index
    %c72 = arith.constant 72 : index
    %110 = vector.load %arg3[%c0_48, %c0_49, %c72] : memref<1x16x128xf32, #tpu.memory_space<vmem>>, vector<1x16x4xf32>
    %111 = vector.shape_cast %110 : vector<1x16x4xf32> to vector<16x4xf32>
    %112 = vector.shape_cast %109 : vector<16x4xf32> to vector<1x16x4xf32>
    tpu.vector_store %arg3[%c0_48, %c0_49, %c72], %112 {strides = array<i32>} : memref<1x16x128xf32, #tpu.memory_space<vmem>>, vector<1x16x4xf32>,
    %113 = vector.extract_strided_slice %17 {offsets = [19, 0, 0], sizes = [1, 16, 4], strides = [1, 1, 1]} : vector<32x16x4xf32> to vector<1x16x4xf32>
    %114 = vector.shape_cast %113 : vector<1x16x4xf32> to vector<16x4xf32>
    %c0_50 = arith.constant 0 : index
    %c0_51 = arith.constant 0 : index
    %c76 = arith.constant 76 : index
    %115 = vector.load %arg3[%c0_50, %c0_51, %c76] : memref<1x16x128xf32, #tpu.memory_space<vmem>>, vector<1x16x4xf32>
    %116 = vector.shape_cast %115 : vector<1x16x4xf32> to vector<16x4xf32>
    %117 = vector.shape_cast %114 : vector<16x4xf32> to vector<1x16x4xf32>
    tpu.vector_store %arg3[%c0_50, %c0_51, %c76], %117 {strides = array<i32>} : memref<1x16x128xf32, #tpu.memory_space<vmem>>, vector<1x16x4xf32>,
    %118 = vector.extract_strided_slice %17 {offsets = [20, 0, 0], sizes = [1, 16, 4], strides = [1, 1, 1]} : vector<32x16x4xf32> to vector<1x16x4xf32>
    %119 = vector.shape_cast %118 : vector<1x16x4xf32> to vector<16x4xf32>
    %c0_52 = arith.constant 0 : index
    %c0_53 = arith.constant 0 : index
    %c80 = arith.constant 80 : index
    %120 = vector.load %arg3[%c0_52, %c0_53, %c80] : memref<1x16x128xf32, #tpu.memory_space<vmem>>, vector<1x16x4xf32>
    %121 = vector.shape_cast %120 : vector<1x16x4xf32> to vector<16x4xf32>
    %122 = vector.shape_cast %119 : vector<16x4xf32> to vector<1x16x4xf32>
    tpu.vector_store %arg3[%c0_52, %c0_53, %c80], %122 {strides = array<i32>} : memref<1x16x128xf32, #tpu.memory_space<vmem>>, vector<1x16x4xf32>,
    %123 = vector.extract_strided_slice %17 {offsets = [21, 0, 0], sizes = [1, 16, 4], strides = [1, 1, 1]} : vector<32x16x4xf32> to vector<1x16x4xf32>
    %124 = vector.shape_cast %123 : vector<1x16x4xf32> to vector<16x4xf32>
    %c0_54 = arith.constant 0 : index
    %c0_55 = arith.constant 0 : index
    %c84 = arith.constant 84 : index
    %125 = vector.load %arg3[%c0_54, %c0_55, %c84] : memref<1x16x128xf32, #tpu.memory_space<vmem>>, vector<1x16x4xf32>
    %126 = vector.shape_cast %125 : vector<1x16x4xf32> to vector<16x4xf32>
    %127 = vector.shape_cast %124 : vector<16x4xf32> to vector<1x16x4xf32>
    tpu.vector_store %arg3[%c0_54, %c0_55, %c84], %127 {strides = array<i32>} : memref<1x16x128xf32, #tpu.memory_space<vmem>>, vector<1x16x4xf32>,
    %128 = vector.extract_strided_slice %17 {offsets = [22, 0, 0], sizes = [1, 16, 4], strides = [1, 1, 1]} : vector<32x16x4xf32> to vector<1x16x4xf32>
    %129 = vector.shape_cast %128 : vector<1x16x4xf32> to vector<16x4xf32>
    %c0_56 = arith.constant 0 : index
    %c0_57 = arith.constant 0 : index
    %c88 = arith.constant 88 : index
    %130 = vector.load %arg3[%c0_56, %c0_57, %c88] : memref<1x16x128xf32, #tpu.memory_space<vmem>>, vector<1x16x4xf32>
    %131 = vector.shape_cast %130 : vector<1x16x4xf32> to vector<16x4xf32>
    %132 = vector.shape_cast %129 : vector<16x4xf32> to vector<1x16x4xf32>
    tpu.vector_store %arg3[%c0_56, %c0_57, %c88], %132 {strides = array<i32>} : memref<1x16x128xf32, #tpu.memory_space<vmem>>, vector<1x16x4xf32>,
    %133 = vector.extract_strided_slice %17 {offsets = [23, 0, 0], sizes = [1, 16, 4], strides = [1, 1, 1]} : vector<32x16x4xf32> to vector<1x16x4xf32>
    %134 = vector.shape_cast %133 : vector<1x16x4xf32> to vector<16x4xf32>
    %c0_58 = arith.constant 0 : index
    %c0_59 = arith.constant 0 : index
    %c92 = arith.constant 92 : index
    %135 = vector.load %arg3[%c0_58, %c0_59, %c92] : memref<1x16x128xf32, #tpu.memory_space<vmem>>, vector<1x16x4xf32>
    %136 = vector.shape_cast %135 : vector<1x16x4xf32> to vector<16x4xf32>
    %137 = vector.shape_cast %134 : vector<16x4xf32> to vector<1x16x4xf32>
    tpu.vector_store %arg3[%c0_58, %c0_59, %c92], %137 {strides = array<i32>} : memref<1x16x128xf32, #tpu.memory_space<vmem>>, vector<1x16x4xf32>,
    %138 = vector.extract_strided_slice %17 {offsets = [24, 0, 0], sizes = [1, 16, 4], strides = [1, 1, 1]} : vector<32x16x4xf32> to vector<1x16x4xf32>
    %139 = vector.shape_cast %138 : vector<1x16x4xf32> to vector<16x4xf32>
    %c0_60 = arith.constant 0 : index
    %c0_61 = arith.constant 0 : index
    %c96 = arith.constant 96 : index
    %140 = vector.load %arg3[%c0_60, %c0_61, %c96] : memref<1x16x128xf32, #tpu.memory_space<vmem>>, vector<1x16x4xf32>
    %141 = vector.shape_cast %140 : vector<1x16x4xf32> to vector<16x4xf32>
    %142 = vector.shape_cast %139 : vector<16x4xf32> to vector<1x16x4xf32>
    tpu.vector_store %arg3[%c0_60, %c0_61, %c96], %142 {strides = array<i32>} : memref<1x16x128xf32, #tpu.memory_space<vmem>>, vector<1x16x4xf32>,
    %143 = vector.extract_strided_slice %17 {offsets = [25, 0, 0], sizes = [1, 16, 4], strides = [1, 1, 1]} : vector<32x16x4xf32> to vector<1x16x4xf32>
    %144 = vector.shape_cast %143 : vector<1x16x4xf32> to vector<16x4xf32>
    %c0_62 = arith.constant 0 : index
    %c0_63 = arith.constant 0 : index
    %c100 = arith.constant 100 : index
    %145 = vector.load %arg3[%c0_62, %c0_63, %c100] : memref<1x16x128xf32, #tpu.memory_space<vmem>>, vector<1x16x4xf32>
    %146 = vector.shape_cast %145 : vector<1x16x4xf32> to vector<16x4xf32>
    %147 = vector.shape_cast %144 : vector<16x4xf32> to vector<1x16x4xf32>
    tpu.vector_store %arg3[%c0_62, %c0_63, %c100], %147 {strides = array<i32>} : memref<1x16x128xf32, #tpu.memory_space<vmem>>, vector<1x16x4xf32>,
    %148 = vector.extract_strided_slice %17 {offsets = [26, 0, 0], sizes = [1, 16, 4], strides = [1, 1, 1]} : vector<32x16x4xf32> to vector<1x16x4xf32>
    %149 = vector.shape_cast %148 : vector<1x16x4xf32> to vector<16x4xf32>
    %c0_64 = arith.constant 0 : index
    %c0_65 = arith.constant 0 : index
    %c104 = arith.constant 104 : index
    %150 = vector.load %arg3[%c0_64, %c0_65, %c104] : memref<1x16x128xf32, #tpu.memory_space<vmem>>, vector<1x16x4xf32>
    %151 = vector.shape_cast %150 : vector<1x16x4xf32> to vector<16x4xf32>
    %152 = vector.shape_cast %149 : vector<16x4xf32> to vector<1x16x4xf32>
    tpu.vector_store %arg3[%c0_64, %c0_65, %c104], %152 {strides = array<i32>} : memref<1x16x128xf32, #tpu.memory_space<vmem>>, vector<1x16x4xf32>,
    %153 = vector.extract_strided_slice %17 {offsets = [27, 0, 0], sizes = [1, 16, 4], strides = [1, 1, 1]} : vector<32x16x4xf32> to vector<1x16x4xf32>
    %154 = vector.shape_cast %153 : vector<1x16x4xf32> to vector<16x4xf32>
    %c0_66 = arith.constant 0 : index
    %c0_67 = arith.constant 0 : index
    %c108 = arith.constant 108 : index
    %155 = vector.load %arg3[%c0_66, %c0_67, %c108] : memref<1x16x128xf32, #tpu.memory_space<vmem>>, vector<1x16x4xf32>
    %156 = vector.shape_cast %155 : vector<1x16x4xf32> to vector<16x4xf32>
    %157 = vector.shape_cast %154 : vector<16x4xf32> to vector<1x16x4xf32>
    tpu.vector_store %arg3[%c0_66, %c0_67, %c108], %157 {strides = array<i32>} : memref<1x16x128xf32, #tpu.memory_space<vmem>>, vector<1x16x4xf32>,
    %158 = vector.extract_strided_slice %17 {offsets = [28, 0, 0], sizes = [1, 16, 4], strides = [1, 1, 1]} : vector<32x16x4xf32> to vector<1x16x4xf32>
    %159 = vector.shape_cast %158 : vector<1x16x4xf32> to vector<16x4xf32>
    %c0_68 = arith.constant 0 : index
    %c0_69 = arith.constant 0 : index
    %c112 = arith.constant 112 : index
    %160 = vector.load %arg3[%c0_68, %c0_69, %c112] : memref<1x16x128xf32, #tpu.memory_space<vmem>>, vector<1x16x4xf32>
    %161 = vector.shape_cast %160 : vector<1x16x4xf32> to vector<16x4xf32>
    %162 = vector.shape_cast %159 : vector<16x4xf32> to vector<1x16x4xf32>
    tpu.vector_store %arg3[%c0_68, %c0_69, %c112], %162 {strides = array<i32>} : memref<1x16x128xf32, #tpu.memory_space<vmem>>, vector<1x16x4xf32>,
    %163 = vector.extract_strided_slice %17 {offsets = [29, 0, 0], sizes = [1, 16, 4], strides = [1, 1, 1]} : vector<32x16x4xf32> to vector<1x16x4xf32>
    %164 = vector.shape_cast %163 : vector<1x16x4xf32> to vector<16x4xf32>
    %c0_70 = arith.constant 0 : index
    %c0_71 = arith.constant 0 : index
    %c116 = arith.constant 116 : index
    %165 = vector.load %arg3[%c0_70, %c0_71, %c116] : memref<1x16x128xf32, #tpu.memory_space<vmem>>, vector<1x16x4xf32>
    %166 = vector.shape_cast %165 : vector<1x16x4xf32> to vector<16x4xf32>
    %167 = vector.shape_cast %164 : vector<16x4xf32> to vector<1x16x4xf32>
    tpu.vector_store %arg3[%c0_70, %c0_71, %c116], %167 {strides = array<i32>} : memref<1x16x128xf32, #tpu.memory_space<vmem>>, vector<1x16x4xf32>,
    %168 = vector.extract_strided_slice %17 {offsets = [30, 0, 0], sizes = [1, 16, 4], strides = [1, 1, 1]} : vector<32x16x4xf32> to vector<1x16x4xf32>
    %169 = vector.shape_cast %168 : vector<1x16x4xf32> to vector<16x4xf32>
    %c0_72 = arith.constant 0 : index
    %c0_73 = arith.constant 0 : index
    %c120 = arith.constant 120 : index
    %170 = vector.load %arg3[%c0_72, %c0_73, %c120] : memref<1x16x128xf32, #tpu.memory_space<vmem>>, vector<1x16x4xf32>
    %171 = vector.shape_cast %170 : vector<1x16x4xf32> to vector<16x4xf32>
    %172 = vector.shape_cast %169 : vector<16x4xf32> to vector<1x16x4xf32>
    tpu.vector_store %arg3[%c0_72, %c0_73, %c120], %172 {strides = array<i32>} : memref<1x16x128xf32, #tpu.memory_space<vmem>>, vector<1x16x4xf32>,
    %173 = vector.extract_strided_slice %17 {offsets = [31, 0, 0], sizes = [1, 16, 4], strides = [1, 1, 1]} : vector<32x16x4xf32> to vector<1x16x4xf32>
    %174 = vector.shape_cast %173 : vector<1x16x4xf32> to vector<16x4xf32>
    %c0_74 = arith.constant 0 : index
    %c0_75 = arith.constant 0 : index
    %c124 = arith.constant 124 : index
    %175 = vector.load %arg3[%c0_74, %c0_75, %c124] : memref<1x16x128xf32, #tpu.memory_space<vmem>>, vector<1x16x4xf32>
    %176 = vector.shape_cast %175 : vector<1x16x4xf32> to vector<16x4xf32>
    %177 = vector.shape_cast %174 : vector<16x4xf32> to vector<1x16x4xf32>
    tpu.vector_store %arg3[%c0_74, %c0_75, %c124], %177 {strides = array<i32>} : memref<1x16x128xf32, #tpu.memory_space<vmem>>, vector<1x16x4xf32>,
    return
  }
  func.func @transform_0(%arg0: i32) -> (i32, i32, i32, i32) {
    %c0_i32 = arith.constant 0 : i32
    %c0_i32_0 = arith.constant 0 : i32
    %c0_i32_1 = arith.constant 0 : i32
    %c0_i32_2 = arith.constant 0 : i32
    return %arg0, %c0_i32, %c0_i32_0, %c0_i32_1 : i32, i32, i32, i32
  }
  func.func @transform_1(%arg0: i32) -> (i32, i32, i32) {
    %c0_i32 = arith.constant 0 : i32
    %c0_i32_0 = arith.constant 0 : i32
    %c0_i32_1 = arith.constant 0 : i32
    return %arg0, %c0_i32, %c0_i32_0 : i32, i32, i32
  }
  func.func @transform_2(%arg0: i32) -> (i32, i32, i32) {
    %c0_i32 = arith.constant 0 : i32
    %c0_i32_0 = arith.constant 0 : i32
    %c0_i32_1 = arith.constant 0 : i32
    return %arg0, %c0_i32, %c0_i32_0 : i32, i32, i32
  }
}

</mosaic_0001>

<llo_original>
// kernel: meta_metric_forward.1
$region0: #{meta_metric_forward.1}
  #allocation0 [shape = 'u32[]', space=smem, size = 0x4, offset = 0x4, fixed_abs, tag = 'smem constant byte address 0x4 - core index']
  #allocation1 [shape = 'u32[72,128]{1,0:T(1,128)}', space=vmem, size = 0x9000, scoped, tag = 'internal scratch']
  %s0 = inlined_call_operand.vmem [shape: f32[64,4,8,32], index: 0, kind: input, shape index: {}]
  %s1 = inlined_call_operand.vmem [shape: f32[64,16,32], index: 1, kind: input, shape index: {}]
  %s2 = inlined_call_operand.vmem [shape: f32[2,16,128], index: 2, kind: output, shape index: {}]
  %s3 = sld [smem:[#allocation0]]
  $region41: #{meta_metric_forward.1} parent=0
    _
  %s5 = ssub.s32 1, %s3
  %s6 = scalar_select 0, %s5, %s3
  loop: start=0, step=1, limit=4
  $region2: #{meta_metric_forward.1} parent=0 // loop_pre_header
    _
  $region3: #{meta_metric_forward.1} parent=0 // loop_header
    %s8 = sphi 0, %s12
    %p9 = scmp.ge.s32.totalorder %s8, 4
    %s18 = sphi 0, %s20
    %s21 = sphi 0, %s18
    %s22 = sphi 0, %s21
    %s38 = sphi 0, %s22
    %s44 = sphi 0, %s46
    %s47 = sphi 0, %s44
    %s48 = sphi 0, %s47
    %s64 = sphi 0, %s48
    %s70 = sphi 0, %s72
    %s73 = sphi 0, %s70
    %s74 = sphi 0, %s73
    %s90 = sphi 0, %s74
  $region4: #{meta_metric_forward.1} parent=0 // loop_header_branch
    %11 = sbr.rel (%p9) target = $region8
  $region5: #{meta_metric_forward.1} parent=0 // loop_body
    %s13 = ssub.s32 %s8, 1
    %s14 = ssub.s32 %s8, 2
    %s15 = sadd.s32 %s8, 1
    %s16 = ssub.s32 %s8, %s15
    %p17 = scmp.eq.s32.totalorder %s16, 0
    %s19 = sadd.s32 %s18, 1
    %s20 = scalar_select %p17, %s18, %s19
    %p23 = pneg %p17
    %p24 = scmp.eq.s32.totalorder %s8, 1
    %p25 = por %p23, %p24
    %p26 = scmp.ne.s32.totalorder %s18, %s21
    %p27 = scmp.eq.s32.totalorder %s8, 0
    %p28 = por %p26, %p27
    %p29 = scmp.ne.s32.totalorder %s18, %s21
    %p30 = scmp.eq.s32.totalorder %s13, 1
    %p31 = por %p29, %p30
    %p32 = scmp.ne.s32.totalorder %s21, %s22
    %p33 = scmp.eq.s32.totalorder %s13, 0
    %p34 = por %p32, %p33
    %p35 = scmp.ne.s32.totalorder %s21, %s22
    %p36 = scmp.eq.s32.totalorder %s14, 1
    %p37 = por %p35, %p36
    %p39 = scmp.ne.s32.totalorder %s22, %s38
    %p40 = scmp.eq.s32.totalorder %s14, 0
    %p41 = por %p39, %p40
    %s42 = ssub.s32 %s8, %s15
    %p43 = scmp.eq.s32.totalorder %s42, 0
    %s45 = sadd.s32 %s44, 1
    %s46 = scalar_select %p43, %s44, %s45
    %p49 = pneg %p43
    %p50 = scmp.eq.s32.totalorder %s8, 1
    %p51 = por %p49, %p50
    %p52 = scmp.ne.s32.totalorder %s44, %s47
    %p53 = scmp.eq.s32.totalorder %s8, 0
    %p54 = por %p52, %p53
    %p55 = scmp.ne.s32.totalorder %s44, %s47
    %p56 = scmp.eq.s32.totalorder %s13, 1
    %p57 = por %p55, %p56
    %p58 = scmp.ne.s32.totalorder %s47, %s48
    %p59 = scmp.eq.s32.totalorder %s13, 0
    %p60 = por %p58, %p59
    %p61 = scmp.ne.s32.totalorder %s47, %s48
    %p62 = scmp.eq.s32.totalorder %s14, 1
    %p63 = por %p61, %p62
    %p65 = scmp.ne.s32.totalorder %s48, %s64
    %p66 = scmp.eq.s32.totalorder %s14, 0
    %p67 = por %p65, %p66
    %s68 = ssub.s32 %s8, %s15
    %p69 = scmp.eq.s32.totalorder %s68, 0
    %s71 = sadd.s32 %s70, 1
    %s72 = scalar_select %p69, %s70, %s71
    %p75 = pneg %p69
    %p76 = scmp.eq.s32.totalorder %s8, 1
    %p77 = por %p75, %p76
    %p78 = scmp.ne.s32.totalorder %s70, %s73
    %p79 = scmp.eq.s32.totalorder %s8, 0
    %p80 = por %p78, %p79
    %p81 = scmp.ne.s32.totalorder %s70, %s73
    %p82 = scmp.eq.s32.totalorder %s13, 1
    %p83 = por %p81, %p82
    %p84 = scmp.ne.s32.totalorder %s73, %s74
    %p85 = scmp.eq.s32.totalorder %s13, 0
    %p86 = por %p84, %p85
    %p87 = scmp.ne.s32.totalorder %s73, %s74
    %p88 = scmp.eq.s32.totalorder %s14, 1
    %p89 = por %p87, %p88
    %p91 = scmp.ne.s32.totalorder %s74, %s90
    %p92 = scmp.eq.s32.totalorder %s14, 0
    %p93 = por %p91, %p92
    %p94 = scmp.le.s32.totalorder 1, %s8
    %p95 = scmp.lt.s32.totalorder %s8, 3
    %p96 = pnand %p94, %p95
    %p97 = pneg %p96
    // Predicated region
    $region9: #{meta_metric_forward.1} parent=5 // pred_check
      _
    $region10: #{meta_metric_forward.1} parent=5 // pred_check_branch
      %99 = sbr.rel (%p96) target = $region12
    $region11: #{meta_metric_forward.1} parent=5 // pred_region
      %s100 = ssub.s32 %s8, 1
    $region12: #{meta_metric_forward.1} parent=5 // pred_fallthru
      _
    %p101 = scmp.lt.s32.totalorder %s8, 2
    // Predicated region
    $region13: #{meta_metric_forward.1} parent=5 // pred_check
      %p102 = pneg %p101
    $region14: #{meta_metric_forward.1} parent=5 // pred_check_branch
      %104 = sbr.rel (%p102) target = $region16
    $region15: #{meta_metric_forward.1} parent=5 // pred_region
      // Predicated region
      $region17: #{meta_metric_forward.1} parent=15 // pred_check
        %p105 = pneg %p28
      $region18: #{meta_metric_forward.1} parent=15 // pred_check_branch
        %107 = sbr.rel (%p105) target = $region20
      $region19: #{meta_metric_forward.1} parent=15 // pred_region
        %s108 = smul.u32 32, %s8
        %p109 = scmp.lt.s32.totalorder %s108, 63
        %s110 = scalar_select %p109, %s108, 63
        %s111 = smul.addr %s110, 4
        %s112 = smul.addr %s111, 8
        %s113 = scalar_lea.vmem %s0, %s112
        %s114 = smul.u32 32, %s8
      $region20: #{meta_metric_forward.1} parent=15 // pred_fallthru
        _
      // Predicated region
      $region21: #{meta_metric_forward.1} parent=15 // pred_check
        %p115 = pneg %p54
      $region22: #{meta_metric_forward.1} parent=15 // pred_check_branch
        %117 = sbr.rel (%p115) target = $region24
      $region23: #{meta_metric_forward.1} parent=15 // pred_region
        %s118 = smul.u32 32, %s8
        %p119 = scmp.lt.s32.totalorder %s118, 63
        %s120 = scalar_select %p119, %s118, 63
        %s121 = smul.addr %s120, 2
        %s122 = smul.addr %s121, 8
        %s123 = scalar_lea.vmem %s1, %s122
        %s124 = smul.u32 32, %s8
      $region24: #{meta_metric_forward.1} parent=15 // pred_fallthru
        _
    $region16: #{meta_metric_forward.1} parent=5 // pred_fallthru
      _
    %p125 = scmp.le.s32.totalorder 1, %s8
    %p126 = scmp.lt.s32.totalorder %s8, 3
    %p127 = pnand %p125, %p126
    %p128 = pneg %p127
    // Predicated region
    $region25: #{meta_metric_forward.1} parent=5 // pred_check
      _
    $region26: #{meta_metric_forward.1} parent=5 // pred_check_branch
      %130 = sbr.rel (%p127) target = $region28
    $region27: #{meta_metric_forward.1} parent=5 // pred_region
      %s131 = ssub.s32 %s8, 1
      %s132 = smul.u32 32, %s13
      %p133 = scmp.lt.s32.totalorder %s132, 63
      %s134 = scalar_select %p133, %s132, 63
      %s135 = smul.addr %s134, 4
      %s136 = smul.addr %s135, 8
      %s137 = scalar_lea.vmem %s0, %s136
      %p138 = pneg %p34
      %p139 = pneg %p31
      %s140 = smul.u32 32, %s13
      %p141 = scmp.lt.s32.totalorder %s140, 63
      %s142 = scalar_select %p141, %s140, 63
      %s143 = smul.addr %s142, 2
      %s144 = smul.addr %s143, 8
      %s145 = scalar_lea.vmem %s1, %s144
      %p146 = pneg %p60
      %p147 = pneg %p57
      %p148 = pneg %p86
      %p149 = pneg %p83
      %p150 = scmp.lt.s32.totalorder %s13, 1
      %s151 = scalar_select %p150, %s13, 1
      %s152 = smul.addr %s151, 2
      %s153 = smul.addr %s152, 8
      %s154 = scalar_lea.vmem %s2, %s153
      %s155 = smul.u32 32, %s13
      %p156 = scmp.lt.s32.totalorder %s155, 63
      %s157 = scalar_select %p156, %s155, 63
      %s158 = smul.addr %s157, 4
      %s159 = smul.addr %s158, 8
      %s160 = scalar_lea.vmem %s0, %s159
      %s161 = smul.u32 32, %s13
      %s162 = smul.u32 32, %s13
      %p163 = scmp.lt.s32.totalorder %s162, 63
      %s164 = scalar_select %p163, %s162, 63
      %s165 = smul.addr %s164, 2
      %s166 = smul.addr %s165, 8
      %s167 = scalar_lea.vmem %s1, %s166
      %s168 = smul.u32 32, %s13
      %p169 = scmp.lt.s32.totalorder %s13, 1
      %s170 = scalar_select %p169, %s13, 1
      %s171 = smul.addr %s170, 2
      %s172 = smul.addr %s171, 8
      %s173 = scalar_lea.vmem %s2, %s172
      %v174 = vld [vmem:[%s160] sm:$0xff]
      %v175 = vld [vmem:[%s160 + $0x8] sm:$0xff]
      %v176 = vld [vmem:[%s160 + $0x10] sm:$0xff]
      %v177 = vld [vmem:[%s160 + $0x18] sm:$0xff]
      %v178 = vld [vmem:[%s160 + $0x20] sm:$0xff]
      %v179 = vld [vmem:[%s160 + $0x28] sm:$0xff]
      %v180 = vld [vmem:[%s160 + $0x30] sm:$0xff]
      %v181 = vld [vmem:[%s160 + $0x38] sm:$0xff]
      %v182 = vld [vmem:[%s160 + $0x40] sm:$0xff]
      %v183 = vld [vmem:[%s160 + $0x48] sm:$0xff]
      %v184 = vld [vmem:[%s160 + $0x50] sm:$0xff]
      %v185 = vld [vmem:[%s160 + $0x58] sm:$0xff]
      %v186 = vld [vmem:[%s160 + $0x60] sm:$0xff]
      %v187 = vld [vmem:[%s160 + $0x68] sm:$0xff]
      %v188 = vld [vmem:[%s160 + $0x70] sm:$0xff]
      %v189 = vld [vmem:[%s160 + $0x78] sm:$0xff]
      %v190 = vld [vmem:[%s160 + $0x80] sm:$0xff]
      %v191 = vld [vmem:[%s160 + $0x88] sm:$0xff]
      %v192 = vld [vmem:[%s160 + $0x90] sm:$0xff]
      %v193 = vld [vmem:[%s160 + $0x98] sm:$0xff]
      %v194 = vld [vmem:[%s160 + $0xa0] sm:$0xff]
      %v195 = vld [vmem:[%s160 + $0xa8] sm:$0xff]
      %v196 = vld [vmem:[%s160 + $0xb0] sm:$0xff]
      %v197 = vld [vmem:[%s160 + $0xb8] sm:$0xff]
      %v198 = vld [vmem:[%s160 + $0xc0] sm:$0xff]
      %v199 = vld [vmem:[%s160 + $0xc8] sm:$0xff]
      %v200 = vld [vmem:[%s160 + $0xd0] sm:$0xff]
      %v201 = vld [vmem:[%s160 + $0xd8] sm:$0xff]
      %v202 = vld [vmem:[%s160 + $0xe0] sm:$0xff]
      %v203 = vld [vmem:[%s160 + $0xe8] sm:$0xff]
      %v204 = vld [vmem:[%s160 + $0xf0] sm:$0xff]
      %v205 = vld [vmem:[%s160 + $0xf8] sm:$0xff]
      %v206 = vld [vmem:[%s160 + $0x100] sm:$0xff]
      %v207 = vld [vmem:[%s160 + $0x108] sm:$0xff]
      %v208 = vld [vmem:[%s160 + $0x110] sm:$0xff]
      %v209 = vld [vmem:[%s160 + $0x118] sm:$0xff]
      %v210 = vld [vmem:[%s160 + $0x120] sm:$0xff]
      %v211 = vld [vmem:[%s160 + $0x128] sm:$0xff]
      %v212 = vld [vmem:[%s160 + $0x130] sm:$0xff]
      %v213 = vld [vmem:[%s160 + $0x138] sm:$0xff]
      %v214 = vld [vmem:[%s160 + $0x140] sm:$0xff]
      %v215 = vld [vmem:[%s160 + $0x148] sm:$0xff]
      %v216 = vld [vmem:[%s160 + $0x150] sm:$0xff]
      %v217 = vld [vmem:[%s160 + $0x158] sm:$0xff]
      %v218 = vld [vmem:[%s160 + $0x160] sm:$0xff]
      %v219 = vld [vmem:[%s160 + $0x168] sm:$0xff]
      %v220 = vld [vmem:[%s160 + $0x170] sm:$0xff]
      %v221 = vld [vmem:[%s160 + $0x178] sm:$0xff]
      %v222 = vld [vmem:[%s160 + $0x180] sm:$0xff]
      %v223 = vld [vmem:[%s160 + $0x188] sm:$0xff]
      %v224 = vld [vmem:[%s160 + $0x190] sm:$0xff]
      %v225 = vld [vmem:[%s160 + $0x198] sm:$0xff]
      %v226 = vld [vmem:[%s160 + $0x1a0] sm:$0xff]
      %v227 = vld [vmem:[%s160 + $0x1a8] sm:$0xff]
      %v228 = vld [vmem:[%s160 + $0x1b0] sm:$0xff]
      %v229 = vld [vmem:[%s160 + $0x1b8] sm:$0xff]
      %v230 = vld [vmem:[%s160 + $0x1c0] sm:$0xff]
      %v231 = vld [vmem:[%s160 + $0x1c8] sm:$0xff]
      %v232 = vld [vmem:[%s160 + $0x1d0] sm:$0xff]
      %v233 = vld [vmem:[%s160 + $0x1d8] sm:$0xff]
      %v234 = vld [vmem:[%s160 + $0x1e0] sm:$0xff]
      %v235 = vld [vmem:[%s160 + $0x1e8] sm:$0xff]
      %v236 = vld [vmem:[%s160 + $0x1f0] sm:$0xff]
      %v237 = vld [vmem:[%s160 + $0x1f8] sm:$0xff]
      %v238 = vld [vmem:[%s160 + $0x200] sm:$0xff]
      %v239 = vld [vmem:[%s160 + $0x208] sm:$0xff]
      %v240 = vld [vmem:[%s160 + $0x210] sm:$0xff]
      %v241 = vld [vmem:[%s160 + $0x218] sm:$0xff]
      %v242 = vld [vmem:[%s160 + $0x220] sm:$0xff]
      %v243 = vld [vmem:[%s160 + $0x228] sm:$0xff]
      %v244 = vld [vmem:[%s160 + $0x230] sm:$0xff]
      %v245 = vld [vmem:[%s160 + $0x238] sm:$0xff]
      %v246 = vld [vmem:[%s160 + $0x240] sm:$0xff]
      %v247 = vld [vmem:[%s160 + $0x248] sm:$0xff]
      %v248 = vld [vmem:[%s160 + $0x250] sm:$0xff]
      %v249 = vld [vmem:[%s160 + $0x258] sm:$0xff]
      %v250 = vld [vmem:[%s160 + $0x260] sm:$0xff]
      %v251 = vld [vmem:[%s160 + $0x268] sm:$0xff]
      %v252 = vld [vmem:[%s160 + $0x270] sm:$0xff]
      %v253 = vld [vmem:[%s160 + $0x278] sm:$0xff]
      %v254 = vld [vmem:[%s160 + $0x280] sm:$0xff]
      %v255 = vld [vmem:[%s160 + $0x288] sm:$0xff]
      %v256 = vld [vmem:[%s160 + $0x290] sm:$0xff]
      %v257 = vld [vmem:[%s160 + $0x298] sm:$0xff]
      %v258 = vld [vmem:[%s160 + $0x2a0] sm:$0xff]
      %v259 = vld [vmem:[%s160 + $0x2a8] sm:$0xff]
      %v260 = vld [vmem:[%s160 + $0x2b0] sm:$0xff]
      %v261 = vld [vmem:[%s160 + $0x2b8] sm:$0xff]
      %v262 = vld [vmem:[%s160 + $0x2c0] sm:$0xff]
      %v263 = vld [vmem:[%s160 + $0x2c8] sm:$0xff]
      %v264 = vld [vmem:[%s160 + $0x2d0] sm:$0xff]
      %v265 = vld [vmem:[%s160 + $0x2d8] sm:$0xff]
      %v266 = vld [vmem:[%s160 + $0x2e0] sm:$0xff]
      %v267 = vld [vmem:[%s160 + $0x2e8] sm:$0xff]
      %v268 = vld [vmem:[%s160 + $0x2f0] sm:$0xff]
      %v269 = vld [vmem:[%s160 + $0x2f8] sm:$0xff]
      %v270 = vld [vmem:[%s160 + $0x300] sm:$0xff]
      %v271 = vld [vmem:[%s160 + $0x308] sm:$0xff]
      %v272 = vld [vmem:[%s160 + $0x310] sm:$0xff]
      %v273 = vld [vmem:[%s160 + $0x318] sm:$0xff]
      %v274 = vld [vmem:[%s160 + $0x320] sm:$0xff]
      %v275 = vld [vmem:[%s160 + $0x328] sm:$0xff]
      %v276 = vld [vmem:[%s160 + $0x330] sm:$0xff]
      %v277 = vld [vmem:[%s160 + $0x338] sm:$0xff]
      %v278 = vld [vmem:[%s160 + $0x340] sm:$0xff]
      %v279 = vld [vmem:[%s160 + $0x348] sm:$0xff]
      %v280 = vld [vmem:[%s160 + $0x350] sm:$0xff]
      %v281 = vld [vmem:[%s160 + $0x358] sm:$0xff]
      %v282 = vld [vmem:[%s160 + $0x360] sm:$0xff]
      %v283 = vld [vmem:[%s160 + $0x368] sm:$0xff]
      %v284 = vld [vmem:[%s160 + $0x370] sm:$0xff]
      %v285 = vld [vmem:[%s160 + $0x378] sm:$0xff]
      %v286 = vld [vmem:[%s160 + $0x380] sm:$0xff]
      %v287 = vld [vmem:[%s160 + $0x388] sm:$0xff]
      %v288 = vld [vmem:[%s160 + $0x390] sm:$0xff]
      %v289 = vld [vmem:[%s160 + $0x398] sm:$0xff]
      %v290 = vld [vmem:[%s160 + $0x3a0] sm:$0xff]
      %v291 = vld [vmem:[%s160 + $0x3a8] sm:$0xff]
      %v292 = vld [vmem:[%s160 + $0x3b0] sm:$0xff]
      %v293 = vld [vmem:[%s160 + $0x3b8] sm:$0xff]
      %v294 = vld [vmem:[%s160 + $0x3c0] sm:$0xff]
      %v295 = vld [vmem:[%s160 + $0x3c8] sm:$0xff]
      %v296 = vld [vmem:[%s160 + $0x3d0] sm:$0xff]
      %v297 = vld [vmem:[%s160 + $0x3d8] sm:$0xff]
      %v298 = vld [vmem:[%s160 + $0x3e0] sm:$0xff]
      %v299 = vld [vmem:[%s160 + $0x3e8] sm:$0xff]
      %v300 = vld [vmem:[%s160 + $0x3f0] sm:$0xff]
      %v301 = vld [vmem:[%s160 + $0x3f8] sm:$0xff]
      %v302 = vld [vmem:[%s167] sm:$0xff]
      %v303 = vld [vmem:[%s167 + $0x8] sm:$0xff]
      %v304 = vld [vmem:[%s167 + $0x10] sm:$0xff]
      %v305 = vld [vmem:[%s167 + $0x18] sm:$0xff]
      %v306 = vld [vmem:[%s167 + $0x20] sm:$0xff]
      %v307 = vld [vmem:[%s167 + $0x28] sm:$0xff]
      %v308 = vld [vmem:[%s167 + $0x30] sm:$0xff]
      %v309 = vld [vmem:[%s167 + $0x38] sm:$0xff]
      %v310 = vld [vmem:[%s167 + $0x40] sm:$0xff]
      %v311 = vld [vmem:[%s167 + $0x48] sm:$0xff]
      %v312 = vld [vmem:[%s167 + $0x50] sm:$0xff]
      %v313 = vld [vmem:[%s167 + $0x58] sm:$0xff]
      %v314 = vld [vmem:[%s167 + $0x60] sm:$0xff]
      %v315 = vld [vmem:[%s167 + $0x68] sm:$0xff]
      %v316 = vld [vmem:[%s167 + $0x70] sm:$0xff]
      %v317 = vld [vmem:[%s167 + $0x78] sm:$0xff]
      %v318 = vld [vmem:[%s167 + $0x80] sm:$0xff]
      %v319 = vld [vmem:[%s167 + $0x88] sm:$0xff]
      %v320 = vld [vmem:[%s167 + $0x90] sm:$0xff]
      %v321 = vld [vmem:[%s167 + $0x98] sm:$0xff]
      %v322 = vld [vmem:[%s167 + $0xa0] sm:$0xff]
      %v323 = vld [vmem:[%s167 + $0xa8] sm:$0xff]
      %v324 = vld [vmem:[%s167 + $0xb0] sm:$0xff]
      %v325 = vld [vmem:[%s167 + $0xb8] sm:$0xff]
      %v326 = vld [vmem:[%s167 + $0xc0] sm:$0xff]
      %v327 = vld [vmem:[%s167 + $0xc8] sm:$0xff]
      %v328 = vld [vmem:[%s167 + $0xd0] sm:$0xff]
      %v329 = vld [vmem:[%s167 + $0xd8] sm:$0xff]
      %v330 = vld [vmem:[%s167 + $0xe0] sm:$0xff]
      %v331 = vld [vmem:[%s167 + $0xe8] sm:$0xff]
      %v332 = vld [vmem:[%s167 + $0xf0] sm:$0xff]
      %v333 = vld [vmem:[%s167 + $0xf8] sm:$0xff]
      %v334 = vld [vmem:[%s167 + $0x100] sm:$0xff]
      %v335 = vld [vmem:[%s167 + $0x108] sm:$0xff]
      %v336 = vld [vmem:[%s167 + $0x110] sm:$0xff]
      %v337 = vld [vmem:[%s167 + $0x118] sm:$0xff]
      %v338 = vld [vmem:[%s167 + $0x120] sm:$0xff]
      %v339 = vld [vmem:[%s167 + $0x128] sm:$0xff]
      %v340 = vld [vmem:[%s167 + $0x130] sm:$0xff]
      %v341 = vld [vmem:[%s167 + $0x138] sm:$0xff]
      %v342 = vld [vmem:[%s167 + $0x140] sm:$0xff]
      %v343 = vld [vmem:[%s167 + $0x148] sm:$0xff]
      %v344 = vld [vmem:[%s167 + $0x150] sm:$0xff]
      %v345 = vld [vmem:[%s167 + $0x158] sm:$0xff]
      %v346 = vld [vmem:[%s167 + $0x160] sm:$0xff]
      %v347 = vld [vmem:[%s167 + $0x168] sm:$0xff]
      %v348 = vld [vmem:[%s167 + $0x170] sm:$0xff]
      %v349 = vld [vmem:[%s167 + $0x178] sm:$0xff]
      %v350 = vld [vmem:[%s167 + $0x180] sm:$0xff]
      %v351 = vld [vmem:[%s167 + $0x188] sm:$0xff]
      %v352 = vld [vmem:[%s167 + $0x190] sm:$0xff]
      %v353 = vld [vmem:[%s167 + $0x198] sm:$0xff]
      %v354 = vld [vmem:[%s167 + $0x1a0] sm:$0xff]
      %v355 = vld [vmem:[%s167 + $0x1a8] sm:$0xff]
      %v356 = vld [vmem:[%s167 + $0x1b0] sm:$0xff]
      %v357 = vld [vmem:[%s167 + $0x1b8] sm:$0xff]
      %v358 = vld [vmem:[%s167 + $0x1c0] sm:$0xff]
      %v359 = vld [vmem:[%s167 + $0x1c8] sm:$0xff]
      %v360 = vld [vmem:[%s167 + $0x1d0] sm:$0xff]
      %v361 = vld [vmem:[%s167 + $0x1d8] sm:$0xff]
      %v362 = vld [vmem:[%s167 + $0x1e0] sm:$0xff]
      %v363 = vld [vmem:[%s167 + $0x1e8] sm:$0xff]
      %v364 = vld [vmem:[%s167 + $0x1f0] sm:$0xff]
      %v365 = vld [vmem:[%s167 + $0x1f8] sm:$0xff]
      %vm366 = vcmask 261120
      %v367 = vsel %vm366, %v174, 0.0
      %v368 = vrot.slane %v367, 4
      %v369 = vadd.f32 %v367, %v368
      %v370 = vrot.slane %v369, 2
      %v371 = vadd.f32 %v369, %v370
      %v372 = vrot.slane %v371, 1
      %v373 = vadd.f32 %v371, %v372
      %v374 = vsel %vm366, %v175, 0.0
      %v375 = vrot.slane %v374, 4
      %v376 = vadd.f32 %v374, %v375
      %v377 = vrot.slane %v376, 2
      %v378 = vadd.f32 %v376, %v377
      %v379 = vrot.slane %v378, 1
      %v380 = vadd.f32 %v378, %v379
      %v381 = vsel %vm366, %v176, 0.0
      %v382 = vrot.slane %v381, 4
      %v383 = vadd.f32 %v381, %v382
      %v384 = vrot.slane %v383, 2
      %v385 = vadd.f32 %v383, %v384
      %v386 = vrot.slane %v385, 1
      %v387 = vadd.f32 %v385, %v386
      %v388 = vsel %vm366, %v177, 0.0
      %v389 = vrot.slane %v388, 4
      %v390 = vadd.f32 %v388, %v389
      %v391 = vrot.slane %v390, 2
      %v392 = vadd.f32 %v390, %v391
      %v393 = vrot.slane %v392, 1
      %v394 = vadd.f32 %v392, %v393
      %v395 = vsel %vm366, %v178, 0.0
      %v396 = vrot.slane %v395, 4
      %v397 = vadd.f32 %v395, %v396
      %v398 = vrot.slane %v397, 2
      %v399 = vadd.f32 %v397, %v398
      %v400 = vrot.slane %v399, 1
      %v401 = vadd.f32 %v399, %v400
      %v402 = vsel %vm366, %v179, 0.0
      %v403 = vrot.slane %v402, 4
      %v404 = vadd.f32 %v402, %v403
      %v405 = vrot.slane %v404, 2
      %v406 = vadd.f32 %v404, %v405
      %v407 = vrot.slane %v406, 1
      %v408 = vadd.f32 %v406, %v407
      %v409 = vsel %vm366, %v180, 0.0
      %v410 = vrot.slane %v409, 4
      %v411 = vadd.f32 %v409, %v410
      %v412 = vrot.slane %v411, 2
      %v413 = vadd.f32 %v411, %v412
      %v414 = vrot.slane %v413, 1
      %v415 = vadd.f32 %v413, %v414
      %v416 = vsel %vm366, %v181, 0.0
      %v417 = vrot.slane %v416, 4
      %v418 = vadd.f32 %v416, %v417
      %v419 = vrot.slane %v418, 2
      %v420 = vadd.f32 %v418, %v419
      %v421 = vrot.slane %v420, 1
      %v422 = vadd.f32 %v420, %v421
      %v423 = vsel %vm366, %v182, 0.0
      %v424 = vrot.slane %v423, 4
      %v425 = vadd.f32 %v423, %v424
      %v426 = vrot.slane %v425, 2
      %v427 = vadd.f32 %v425, %v426
      %v428 = vrot.slane %v427, 1
      %v429 = vadd.f32 %v427, %v428
      %v430 = vsel %vm366, %v183, 0.0
      %v431 = vrot.slane %v430, 4
      %v432 = vadd.f32 %v430, %v431
      %v433 = vrot.slane %v432, 2
      %v434 = vadd.f32 %v432, %v433
      %v435 = vrot.slane %v434, 1
      %v436 = vadd.f32 %v434, %v435
      %v437 = vsel %vm366, %v184, 0.0
      %v438 = vrot.slane %v437, 4
      %v439 = vadd.f32 %v437, %v438
      %v440 = vrot.slane %v439, 2
      %v441 = vadd.f32 %v439, %v440
      %v442 = vrot.slane %v441, 1
      %v443 = vadd.f32 %v441, %v442
      %v444 = vsel %vm366, %v185, 0.0
      %v445 = vrot.slane %v444, 4
      %v446 = vadd.f32 %v444, %v445
      %v447 = vrot.slane %v446, 2
      %v448 = vadd.f32 %v446, %v447
      %v449 = vrot.slane %v448, 1
      %v450 = vadd.f32 %v448, %v449
      %v451 = vsel %vm366, %v186, 0.0
      %v452 = vrot.slane %v451, 4
      %v453 = vadd.f32 %v451, %v452
      %v454 = vrot.slane %v453, 2
      %v455 = vadd.f32 %v453, %v454
      %v456 = vrot.slane %v455, 1
      %v457 = vadd.f32 %v455, %v456
      %v458 = vsel %vm366, %v187, 0.0
      %v459 = vrot.slane %v458, 4
      %v460 = vadd.f32 %v458, %v459
      %v461 = vrot.slane %v460, 2
      %v462 = vadd.f32 %v460, %v461
      %v463 = vrot.slane %v462, 1
      %v464 = vadd.f32 %v462, %v463
      %v465 = vsel %vm366, %v188, 0.0
      %v466 = vrot.slane %v465, 4
      %v467 = vadd.f32 %v465, %v466
      %v468 = vrot.slane %v467, 2
      %v469 = vadd.f32 %v467, %v468
      %v470 = vrot.slane %v469, 1
      %v471 = vadd.f32 %v469, %v470
      %v472 = vsel %vm366, %v189, 0.0
      %v473 = vrot.slane %v472, 4
      %v474 = vadd.f32 %v472, %v473
      %v475 = vrot.slane %v474, 2
      %v476 = vadd.f32 %v474, %v475
      %v477 = vrot.slane %v476, 1
      %v478 = vadd.f32 %v476, %v477
      %v479 = vsel %vm366, %v190, 0.0
      %v480 = vrot.slane %v479, 4
      %v481 = vadd.f32 %v479, %v480
      %v482 = vrot.slane %v481, 2
      %v483 = vadd.f32 %v481, %v482
      %v484 = vrot.slane %v483, 1
      %v485 = vadd.f32 %v483, %v484
      %v486 = vsel %vm366, %v191, 0.0
      %v487 = vrot.slane %v486, 4
      %v488 = vadd.f32 %v486, %v487
      %v489 = vrot.slane %v488, 2
      %v490 = vadd.f32 %v488, %v489
      %v491 = vrot.slane %v490, 1
      %v492 = vadd.f32 %v490, %v491
      %v493 = vsel %vm366, %v192, 0.0
      %v494 = vrot.slane %v493, 4
      %v495 = vadd.f32 %v493, %v494
      %v496 = vrot.slane %v495, 2
      %v497 = vadd.f32 %v495, %v496
      %v498 = vrot.slane %v497, 1
      %v499 = vadd.f32 %v497, %v498
      %v500 = vsel %vm366, %v193, 0.0
      %v501 = vrot.slane %v500, 4
      %v502 = vadd.f32 %v500, %v501
      %v503 = vrot.slane %v502, 2
      %v504 = vadd.f32 %v502, %v503
      %v505 = vrot.slane %v504, 1
      %v506 = vadd.f32 %v504, %v505
      %v507 = vsel %vm366, %v194, 0.0
      %v508 = vrot.slane %v507, 4
      %v509 = vadd.f32 %v507, %v508
      %v510 = vrot.slane %v509, 2
      %v511 = vadd.f32 %v509, %v510
      %v512 = vrot.slane %v511, 1
      %v513 = vadd.f32 %v511, %v512
      %v514 = vsel %vm366, %v195, 0.0
      %v515 = vrot.slane %v514, 4
      %v516 = vadd.f32 %v514, %v515
      %v517 = vrot.slane %v516, 2
      %v518 = vadd.f32 %v516, %v517
      %v519 = vrot.slane %v518, 1
      %v520 = vadd.f32 %v518, %v519
      %v521 = vsel %vm366, %v196, 0.0
      %v522 = vrot.slane %v521, 4
      %v523 = vadd.f32 %v521, %v522
      %v524 = vrot.slane %v523, 2
      %v525 = vadd.f32 %v523, %v524
      %v526 = vrot.slane %v525, 1
      %v527 = vadd.f32 %v525, %v526
      %v528 = vsel %vm366, %v197, 0.0
      %v529 = vrot.slane %v528, 4
      %v530 = vadd.f32 %v528, %v529
      %v531 = vrot.slane %v530, 2
      %v532 = vadd.f32 %v530, %v531
      %v533 = vrot.slane %v532, 1
      %v534 = vadd.f32 %v532, %v533
      %v535 = vsel %vm366, %v198, 0.0
      %v536 = vrot.slane %v535, 4
      %v537 = vadd.f32 %v535, %v536
      %v538 = vrot.slane %v537, 2
      %v539 = vadd.f32 %v537, %v538
      %v540 = vrot.slane %v539, 1
      %v541 = vadd.f32 %v539, %v540
      %v542 = vsel %vm366, %v199, 0.0
      %v543 = vrot.slane %v542, 4
      %v544 = vadd.f32 %v542, %v543
      %v545 = vrot.slane %v544, 2
      %v546 = vadd.f32 %v544, %v545
      %v547 = vrot.slane %v546, 1
      %v548 = vadd.f32 %v546, %v547
      %v549 = vsel %vm366, %v200, 0.0
      %v550 = vrot.slane %v549, 4
      %v551 = vadd.f32 %v549, %v550
      %v552 = vrot.slane %v551, 2
      %v553 = vadd.f32 %v551, %v552
      %v554 = vrot.slane %v553, 1
      %v555 = vadd.f32 %v553, %v554
      %v556 = vsel %vm366, %v201, 0.0
      %v557 = vrot.slane %v556, 4
      %v558 = vadd.f32 %v556, %v557
      %v559 = vrot.slane %v558, 2
      %v560 = vadd.f32 %v558, %v559
      %v561 = vrot.slane %v560, 1
      %v562 = vadd.f32 %v560, %v561
      %v563 = vsel %vm366, %v202, 0.0
      %v564 = vrot.slane %v563, 4
      %v565 = vadd.f32 %v563, %v564
      %v566 = vrot.slane %v565, 2
      %v567 = vadd.f32 %v565, %v566
      %v568 = vrot.slane %v567, 1
      %v569 = vadd.f32 %v567, %v568
      %v570 = vsel %vm366, %v203, 0.0
      %v571 = vrot.slane %v570, 4
      %v572 = vadd.f32 %v570, %v571
      %v573 = vrot.slane %v572, 2
      %v574 = vadd.f32 %v572, %v573
      %v575 = vrot.slane %v574, 1
      %v576 = vadd.f32 %v574, %v575
      %v577 = vsel %vm366, %v204, 0.0
      %v578 = vrot.slane %v577, 4
      %v579 = vadd.f32 %v577, %v578
      %v580 = vrot.slane %v579, 2
      %v581 = vadd.f32 %v579, %v580
      %v582 = vrot.slane %v581, 1
      %v583 = vadd.f32 %v581, %v582
      %v584 = vsel %vm366, %v205, 0.0
      %v585 = vrot.slane %v584, 4
      %v586 = vadd.f32 %v584, %v585
      %v587 = vrot.slane %v586, 2
      %v588 = vadd.f32 %v586, %v587
      %v589 = vrot.slane %v588, 1
      %v590 = vadd.f32 %v588, %v589
      %v591 = vsel %vm366, %v206, 0.0
      %v592 = vrot.slane %v591, 4
      %v593 = vadd.f32 %v591, %v592
      %v594 = vrot.slane %v593, 2
      %v595 = vadd.f32 %v593, %v594
      %v596 = vrot.slane %v595, 1
      %v597 = vadd.f32 %v595, %v596
      %v598 = vsel %vm366, %v207, 0.0
      %v599 = vrot.slane %v598, 4
      %v600 = vadd.f32 %v598, %v599
      %v601 = vrot.slane %v600, 2
      %v602 = vadd.f32 %v600, %v601
      %v603 = vrot.slane %v602, 1
      %v604 = vadd.f32 %v602, %v603
      %v605 = vsel %vm366, %v208, 0.0
      %v606 = vrot.slane %v605, 4
      %v607 = vadd.f32 %v605, %v606
      %v608 = vrot.slane %v607, 2
      %v609 = vadd.f32 %v607, %v608
      %v610 = vrot.slane %v609, 1
      %v611 = vadd.f32 %v609, %v610
      %v612 = vsel %vm366, %v209, 0.0
      %v613 = vrot.slane %v612, 4
      %v614 = vadd.f32 %v612, %v613
      %v615 = vrot.slane %v614, 2
      %v616 = vadd.f32 %v614, %v615
      %v617 = vrot.slane %v616, 1
      %v618 = vadd.f32 %v616, %v617
      %v619 = vsel %vm366, %v210, 0.0
      %v620 = vrot.slane %v619, 4
      %v621 = vadd.f32 %v619, %v620
      %v622 = vrot.slane %v621, 2
      %v623 = vadd.f32 %v621, %v622
      %v624 = vrot.slane %v623, 1
      %v625 = vadd.f32 %v623, %v624
      %v626 = vsel %vm366, %v211, 0.0
      %v627 = vrot.slane %v626, 4
      %v628 = vadd.f32 %v626, %v627
      %v629 = vrot.slane %v628, 2
      %v630 = vadd.f32 %v628, %v629
      %v631 = vrot.slane %v630, 1
      %v632 = vadd.f32 %v630, %v631
      %v633 = vsel %vm366, %v212, 0.0
      %v634 = vrot.slane %v633, 4
      %v635 = vadd.f32 %v633, %v634
      %v636 = vrot.slane %v635, 2
      %v637 = vadd.f32 %v635, %v636
      %v638 = vrot.slane %v637, 1
      %v639 = vadd.f32 %v637, %v638
      %v640 = vsel %vm366, %v213, 0.0
      %v641 = vrot.slane %v640, 4
      %v642 = vadd.f32 %v640, %v641
      %v643 = vrot.slane %v642, 2
      %v644 = vadd.f32 %v642, %v643
      %v645 = vrot.slane %v644, 1
      %v646 = vadd.f32 %v644, %v645
      %v647 = vsel %vm366, %v214, 0.0
      %v648 = vrot.slane %v647, 4
      %v649 = vadd.f32 %v647, %v648
      %v650 = vrot.slane %v649, 2
      %v651 = vadd.f32 %v649, %v650
      %v652 = vrot.slane %v651, 1
      %v653 = vadd.f32 %v651, %v652
      %v654 = vsel %vm366, %v215, 0.0
      %v655 = vrot.slane %v654, 4
      %v656 = vadd.f32 %v654, %v655
      %v657 = vrot.slane %v656, 2
      %v658 = vadd.f32 %v656, %v657
      %v659 = vrot.slane %v658, 1
      %v660 = vadd.f32 %v658, %v659
      %v661 = vsel %vm366, %v216, 0.0
      %v662 = vrot.slane %v661, 4
      %v663 = vadd.f32 %v661, %v662
      %v664 = vrot.slane %v663, 2
      %v665 = vadd.f32 %v663, %v664
      %v666 = vrot.slane %v665, 1
      %v667 = vadd.f32 %v665, %v666
      %v668 = vsel %vm366, %v217, 0.0
      %v669 = vrot.slane %v668, 4
      %v670 = vadd.f32 %v668, %v669
      %v671 = vrot.slane %v670, 2
      %v672 = vadd.f32 %v670, %v671
      %v673 = vrot.slane %v672, 1
      %v674 = vadd.f32 %v672, %v673
      %v675 = vsel %vm366, %v218, 0.0
      %v676 = vrot.slane %v675, 4
      %v677 = vadd.f32 %v675, %v676
      %v678 = vrot.slane %v677, 2
      %v679 = vadd.f32 %v677, %v678
      %v680 = vrot.slane %v679, 1
      %v681 = vadd.f32 %v679, %v680
      %v682 = vsel %vm366, %v219, 0.0
      %v683 = vrot.slane %v682, 4
      %v684 = vadd.f32 %v682, %v683
      %v685 = vrot.slane %v684, 2
      %v686 = vadd.f32 %v684, %v685
      %v687 = vrot.slane %v686, 1
      %v688 = vadd.f32 %v686, %v687
      %v689 = vsel %vm366, %v220, 0.0
      %v690 = vrot.slane %v689, 4
      %v691 = vadd.f32 %v689, %v690
      %v692 = vrot.slane %v691, 2
      %v693 = vadd.f32 %v691, %v692
      %v694 = vrot.slane %v693, 1
      %v695 = vadd.f32 %v693, %v694
      %v696 = vsel %vm366, %v221, 0.0
      %v697 = vrot.slane %v696, 4
      %v698 = vadd.f32 %v696, %v697
      %v699 = vrot.slane %v698, 2
      %v700 = vadd.f32 %v698, %v699
      %v701 = vrot.slane %v700, 1
      %v702 = vadd.f32 %v700, %v701
      %v703 = vsel %vm366, %v222, 0.0
      %v704 = vrot.slane %v703, 4
      %v705 = vadd.f32 %v703, %v704
      %v706 = vrot.slane %v705, 2
      %v707 = vadd.f32 %v705, %v706
      %v708 = vrot.slane %v707, 1
      %v709 = vadd.f32 %v707, %v708
      %v710 = vsel %vm366, %v223, 0.0
      %v711 = vrot.slane %v710, 4
      %v712 = vadd.f32 %v710, %v711
      %v713 = vrot.slane %v712, 2
      %v714 = vadd.f32 %v712, %v713
      %v715 = vrot.slane %v714, 1
      %v716 = vadd.f32 %v714, %v715
      %v717 = vsel %vm366, %v224, 0.0
      %v718 = vrot.slane %v717, 4
      %v719 = vadd.f32 %v717, %v718
      %v720 = vrot.slane %v719, 2
      %v721 = vadd.f32 %v719, %v720
      %v722 = vrot.slane %v721, 1
      %v723 = vadd.f32 %v721, %v722
      %v724 = vsel %vm366, %v225, 0.0
      %v725 = vrot.slane %v724, 4
      %v726 = vadd.f32 %v724, %v725
      %v727 = vrot.slane %v726, 2
      %v728 = vadd.f32 %v726, %v727
      %v729 = vrot.slane %v728, 1
      %v730 = vadd.f32 %v728, %v729
      %v731 = vsel %vm366, %v226, 0.0
      %v732 = vrot.slane %v731, 4
      %v733 = vadd.f32 %v731, %v732
      %v734 = vrot.slane %v733, 2
      %v735 = vadd.f32 %v733, %v734
      %v736 = vrot.slane %v735, 1
      %v737 = vadd.f32 %v735, %v736
      %v738 = vsel %vm366, %v227, 0.0
      %v739 = vrot.slane %v738, 4
      %v740 = vadd.f32 %v738, %v739
      %v741 = vrot.slane %v740, 2
      %v742 = vadd.f32 %v740, %v741
      %v743 = vrot.slane %v742, 1
      %v744 = vadd.f32 %v742, %v743
      %v745 = vsel %vm366, %v228, 0.0
      %v746 = vrot.slane %v745, 4
      %v747 = vadd.f32 %v745, %v746
      %v748 = vrot.slane %v747, 2
      %v749 = vadd.f32 %v747, %v748
      %v750 = vrot.slane %v749, 1
      %v751 = vadd.f32 %v749, %v750
      %v752 = vsel %vm366, %v229, 0.0
      %v753 = vrot.slane %v752, 4
      %v754 = vadd.f32 %v752, %v753
      %v755 = vrot.slane %v754, 2
      %v756 = vadd.f32 %v754, %v755
      %v757 = vrot.slane %v756, 1
      %v758 = vadd.f32 %v756, %v757
      %v759 = vsel %vm366, %v230, 0.0
      %v760 = vrot.slane %v759, 4
      %v761 = vadd.f32 %v759, %v760
      %v762 = vrot.slane %v761, 2
      %v763 = vadd.f32 %v761, %v762
      %v764 = vrot.slane %v763, 1
      %v765 = vadd.f32 %v763, %v764
      %v766 = vsel %vm366, %v231, 0.0
      %v767 = vrot.slane %v766, 4
      %v768 = vadd.f32 %v766, %v767
      %v769 = vrot.slane %v768, 2
      %v770 = vadd.f32 %v768, %v769
      %v771 = vrot.slane %v770, 1
      %v772 = vadd.f32 %v770, %v771
      %v773 = vsel %vm366, %v232, 0.0
      %v774 = vrot.slane %v773, 4
      %v775 = vadd.f32 %v773, %v774
      %v776 = vrot.slane %v775, 2
      %v777 = vadd.f32 %v775, %v776
      %v778 = vrot.slane %v777, 1
      %v779 = vadd.f32 %v777, %v778
      %v780 = vsel %vm366, %v233, 0.0
      %v781 = vrot.slane %v780, 4
      %v782 = vadd.f32 %v780, %v781
      %v783 = vrot.slane %v782, 2
      %v784 = vadd.f32 %v782, %v783
      %v785 = vrot.slane %v784, 1
      %v786 = vadd.f32 %v784, %v785
      %v787 = vsel %vm366, %v234, 0.0
      %v788 = vrot.slane %v787, 4
      %v789 = vadd.f32 %v787, %v788
      %v790 = vrot.slane %v789, 2
      %v791 = vadd.f32 %v789, %v790
      %v792 = vrot.slane %v791, 1
      %v793 = vadd.f32 %v791, %v792
      %v794 = vsel %vm366, %v235, 0.0
      %v795 = vrot.slane %v794, 4
      %v796 = vadd.f32 %v794, %v795
      %v797 = vrot.slane %v796, 2
      %v798 = vadd.f32 %v796, %v797
      %v799 = vrot.slane %v798, 1
      %v800 = vadd.f32 %v798, %v799
      %v801 = vsel %vm366, %v236, 0.0
      %v802 = vrot.slane %v801, 4
      %v803 = vadd.f32 %v801, %v802
      %v804 = vrot.slane %v803, 2
      %v805 = vadd.f32 %v803, %v804
      %v806 = vrot.slane %v805, 1
      %v807 = vadd.f32 %v805, %v806
      %v808 = vsel %vm366, %v237, 0.0
      %v809 = vrot.slane %v808, 4
      %v810 = vadd.f32 %v808, %v809
      %v811 = vrot.slane %v810, 2
      %v812 = vadd.f32 %v810, %v811
      %v813 = vrot.slane %v812, 1
      %v814 = vadd.f32 %v812, %v813
      %v815 = vsel %vm366, %v238, 0.0
      %v816 = vrot.slane %v815, 4
      %v817 = vadd.f32 %v815, %v816
      %v818 = vrot.slane %v817, 2
      %v819 = vadd.f32 %v817, %v818
      %v820 = vrot.slane %v819, 1
      %v821 = vadd.f32 %v819, %v820
      %v822 = vsel %vm366, %v239, 0.0
      %v823 = vrot.slane %v822, 4
      %v824 = vadd.f32 %v822, %v823
      %v825 = vrot.slane %v824, 2
      %v826 = vadd.f32 %v824, %v825
      %v827 = vrot.slane %v826, 1
      %v828 = vadd.f32 %v826, %v827
      %v829 = vsel %vm366, %v240, 0.0
      %v830 = vrot.slane %v829, 4
      %v831 = vadd.f32 %v829, %v830
      %v832 = vrot.slane %v831, 2
      %v833 = vadd.f32 %v831, %v832
      %v834 = vrot.slane %v833, 1
      %v835 = vadd.f32 %v833, %v834
      %v836 = vsel %vm366, %v241, 0.0
      %v837 = vrot.slane %v836, 4
      %v838 = vadd.f32 %v836, %v837
      %v839 = vrot.slane %v838, 2
      %v840 = vadd.f32 %v838, %v839
      %v841 = vrot.slane %v840, 1
      %v842 = vadd.f32 %v840, %v841
      %v843 = vsel %vm366, %v242, 0.0
      %v844 = vrot.slane %v843, 4
      %v845 = vadd.f32 %v843, %v844
      %v846 = vrot.slane %v845, 2
      %v847 = vadd.f32 %v845, %v846
      %v848 = vrot.slane %v847, 1
      %v849 = vadd.f32 %v847, %v848
      %v850 = vsel %vm366, %v243, 0.0
      %v851 = vrot.slane %v850, 4
      %v852 = vadd.f32 %v850, %v851
      %v853 = vrot.slane %v852, 2
      %v854 = vadd.f32 %v852, %v853
      %v855 = vrot.slane %v854, 1
      %v856 = vadd.f32 %v854, %v855
      %v857 = vsel %vm366, %v244, 0.0
      %v858 = vrot.slane %v857, 4
      %v859 = vadd.f32 %v857, %v858
      %v860 = vrot.slane %v859, 2
      %v861 = vadd.f32 %v859, %v860
      %v862 = vrot.slane %v861, 1
      %v863 = vadd.f32 %v861, %v862
      %v864 = vsel %vm366, %v245, 0.0
      %v865 = vrot.slane %v864, 4
      %v866 = vadd.f32 %v864, %v865
      %v867 = vrot.slane %v866, 2
      %v868 = vadd.f32 %v866, %v867
      %v869 = vrot.slane %v868, 1
      %v870 = vadd.f32 %v868, %v869
      %v871 = vsel %vm366, %v246, 0.0
      %v872 = vrot.slane %v871, 4
      %v873 = vadd.f32 %v871, %v872
      %v874 = vrot.slane %v873, 2
      %v875 = vadd.f32 %v873, %v874
      %v876 = vrot.slane %v875, 1
      %v877 = vadd.f32 %v875, %v876
      %v878 = vsel %vm366, %v247, 0.0
      %v879 = vrot.slane %v878, 4
      %v880 = vadd.f32 %v878, %v879
      %v881 = vrot.slane %v880, 2
      %v882 = vadd.f32 %v880, %v881
      %v883 = vrot.slane %v882, 1
      %v884 = vadd.f32 %v882, %v883
      %v885 = vsel %vm366, %v248, 0.0
      %v886 = vrot.slane %v885, 4
      %v887 = vadd.f32 %v885, %v886
      %v888 = vrot.slane %v887, 2
      %v889 = vadd.f32 %v887, %v888
      %v890 = vrot.slane %v889, 1
      %v891 = vadd.f32 %v889, %v890
      %v892 = vsel %vm366, %v249, 0.0
      %v893 = vrot.slane %v892, 4
      %v894 = vadd.f32 %v892, %v893
      %v895 = vrot.slane %v894, 2
      %v896 = vadd.f32 %v894, %v895
      %v897 = vrot.slane %v896, 1
      %v898 = vadd.f32 %v896, %v897
      %v899 = vsel %vm366, %v250, 0.0
      %v900 = vrot.slane %v899, 4
      %v901 = vadd.f32 %v899, %v900
      %v902 = vrot.slane %v901, 2
      %v903 = vadd.f32 %v901, %v902
      %v904 = vrot.slane %v903, 1
      %v905 = vadd.f32 %v903, %v904
      %v906 = vsel %vm366, %v251, 0.0
      %v907 = vrot.slane %v906, 4
      %v908 = vadd.f32 %v906, %v907
      %v909 = vrot.slane %v908, 2
      %v910 = vadd.f32 %v908, %v909
      %v911 = vrot.slane %v910, 1
      %v912 = vadd.f32 %v910, %v911
      %v913 = vsel %vm366, %v252, 0.0
      %v914 = vrot.slane %v913, 4
      %v915 = vadd.f32 %v913, %v914
      %v916 = vrot.slane %v915, 2
      %v917 = vadd.f32 %v915, %v916
      %v918 = vrot.slane %v917, 1
      %v919 = vadd.f32 %v917, %v918
      %v920 = vsel %vm366, %v253, 0.0
      %v921 = vrot.slane %v920, 4
      %v922 = vadd.f32 %v920, %v921
      %v923 = vrot.slane %v922, 2
      %v924 = vadd.f32 %v922, %v923
      %v925 = vrot.slane %v924, 1
      %v926 = vadd.f32 %v924, %v925
      %v927 = vsel %vm366, %v254, 0.0
      %v928 = vrot.slane %v927, 4
      %v929 = vadd.f32 %v927, %v928
      %v930 = vrot.slane %v929, 2
      %v931 = vadd.f32 %v929, %v930
      %v932 = vrot.slane %v931, 1
      %v933 = vadd.f32 %v931, %v932
      %v934 = vsel %vm366, %v255, 0.0
      %v935 = vrot.slane %v934, 4
      %v936 = vadd.f32 %v934, %v935
      %v937 = vrot.slane %v936, 2
      %v938 = vadd.f32 %v936, %v937
      %v939 = vrot.slane %v938, 1
      %v940 = vadd.f32 %v938, %v939
      %v941 = vsel %vm366, %v256, 0.0
      %v942 = vrot.slane %v941, 4
      %v943 = vadd.f32 %v941, %v942
      %v944 = vrot.slane %v943, 2
      %v945 = vadd.f32 %v943, %v944
      %v946 = vrot.slane %v945, 1
      %v947 = vadd.f32 %v945, %v946
      %v948 = vsel %vm366, %v257, 0.0
      %v949 = vrot.slane %v948, 4
      %v950 = vadd.f32 %v948, %v949
      %v951 = vrot.slane %v950, 2
      %v952 = vadd.f32 %v950, %v951
      %v953 = vrot.slane %v952, 1
      %v954 = vadd.f32 %v952, %v953
      %v955 = vsel %vm366, %v258, 0.0
      %v956 = vrot.slane %v955, 4
      %v957 = vadd.f32 %v955, %v956
      %v958 = vrot.slane %v957, 2
      %v959 = vadd.f32 %v957, %v958
      %v960 = vrot.slane %v959, 1
      %v961 = vadd.f32 %v959, %v960
      %v962 = vsel %vm366, %v259, 0.0
      %v963 = vrot.slane %v962, 4
      %v964 = vadd.f32 %v962, %v963
      %v965 = vrot.slane %v964, 2
      %v966 = vadd.f32 %v964, %v965
      %v967 = vrot.slane %v966, 1
      %v968 = vadd.f32 %v966, %v967
      %v969 = vsel %vm366, %v260, 0.0
      %v970 = vrot.slane %v969, 4
      %v971 = vadd.f32 %v969, %v970
      %v972 = vrot.slane %v971, 2
      %v973 = vadd.f32 %v971, %v972
      %v974 = vrot.slane %v973, 1
      %v975 = vadd.f32 %v973, %v974
      %v976 = vsel %vm366, %v261, 0.0
      %v977 = vrot.slane %v976, 4
      %v978 = vadd.f32 %v976, %v977
      %v979 = vrot.slane %v978, 2
      %v980 = vadd.f32 %v978, %v979
      %v981 = vrot.slane %v980, 1
      %v982 = vadd.f32 %v980, %v981
      %v983 = vsel %vm366, %v262, 0.0
      %v984 = vrot.slane %v983, 4
      %v985 = vadd.f32 %v983, %v984
      %v986 = vrot.slane %v985, 2
      %v987 = vadd.f32 %v985, %v986
      %v988 = vrot.slane %v987, 1
      %v989 = vadd.f32 %v987, %v988
      %v990 = vsel %vm366, %v263, 0.0
      %v991 = vrot.slane %v990, 4
      %v992 = vadd.f32 %v990, %v991
      %v993 = vrot.slane %v992, 2
      %v994 = vadd.f32 %v992, %v993
      %v995 = vrot.slane %v994, 1
      %v996 = vadd.f32 %v994, %v995
      %v997 = vsel %vm366, %v264, 0.0
      %v998 = vrot.slane %v997, 4
      %v999 = vadd.f32 %v997, %v998
      %v1000 = vrot.slane %v999, 2
      %v1001 = vadd.f32 %v999, %v1000
      %v1002 = vrot.slane %v1001, 1
      %v1003 = vadd.f32 %v1001, %v1002
      %v1004 = vsel %vm366, %v265, 0.0
      %v1005 = vrot.slane %v1004, 4
      %v1006 = vadd.f32 %v1004, %v1005
      %v1007 = vrot.slane %v1006, 2
      %v1008 = vadd.f32 %v1006, %v1007
      %v1009 = vrot.slane %v1008, 1
      %v1010 = vadd.f32 %v1008, %v1009
      %v1011 = vsel %vm366, %v266, 0.0
      %v1012 = vrot.slane %v1011, 4
      %v1013 = vadd.f32 %v1011, %v1012
      %v1014 = vrot.slane %v1013, 2
      %v1015 = vadd.f32 %v1013, %v1014
      %v1016 = vrot.slane %v1015, 1
      %v1017 = vadd.f32 %v1015, %v1016
      %v1018 = vsel %vm366, %v267, 0.0
      %v1019 = vrot.slane %v1018, 4
      %v1020 = vadd.f32 %v1018, %v1019
      %v1021 = vrot.slane %v1020, 2
      %v1022 = vadd.f32 %v1020, %v1021
      %v1023 = vrot.slane %v1022, 1
      %v1024 = vadd.f32 %v1022, %v1023
      %v1025 = vsel %vm366, %v268, 0.0
      %v1026 = vrot.slane %v1025, 4
      %v1027 = vadd.f32 %v1025, %v1026
      %v1028 = vrot.slane %v1027, 2
      %v1029 = vadd.f32 %v1027, %v1028
      %v1030 = vrot.slane %v1029, 1
      %v1031 = vadd.f32 %v1029, %v1030
      %v1032 = vsel %vm366, %v269, 0.0
      %v1033 = vrot.slane %v1032, 4
      %v1034 = vadd.f32 %v1032, %v1033
      %v1035 = vrot.slane %v1034, 2
      %v1036 = vadd.f32 %v1034, %v1035
      %v1037 = vrot.slane %v1036, 1
      %v1038 = vadd.f32 %v1036, %v1037
      %v1039 = vsel %vm366, %v270, 0.0
      %v1040 = vrot.slane %v1039, 4
      %v1041 = vadd.f32 %v1039, %v1040
      %v1042 = vrot.slane %v1041, 2
      %v1043 = vadd.f32 %v1041, %v1042
      %v1044 = vrot.slane %v1043, 1
      %v1045 = vadd.f32 %v1043, %v1044
      %v1046 = vsel %vm366, %v271, 0.0
      %v1047 = vrot.slane %v1046, 4
      %v1048 = vadd.f32 %v1046, %v1047
      %v1049 = vrot.slane %v1048, 2
      %v1050 = vadd.f32 %v1048, %v1049
      %v1051 = vrot.slane %v1050, 1
      %v1052 = vadd.f32 %v1050, %v1051
      %v1053 = vsel %vm366, %v272, 0.0
      %v1054 = vrot.slane %v1053, 4
      %v1055 = vadd.f32 %v1053, %v1054
      %v1056 = vrot.slane %v1055, 2
      %v1057 = vadd.f32 %v1055, %v1056
      %v1058 = vrot.slane %v1057, 1
      %v1059 = vadd.f32 %v1057, %v1058
      %v1060 = vsel %vm366, %v273, 0.0
      %v1061 = vrot.slane %v1060, 4
      %v1062 = vadd.f32 %v1060, %v1061
      %v1063 = vrot.slane %v1062, 2
      %v1064 = vadd.f32 %v1062, %v1063
      %v1065 = vrot.slane %v1064, 1
      %v1066 = vadd.f32 %v1064, %v1065
      %v1067 = vsel %vm366, %v274, 0.0
      %v1068 = vrot.slane %v1067, 4
      %v1069 = vadd.f32 %v1067, %v1068
      %v1070 = vrot.slane %v1069, 2
      %v1071 = vadd.f32 %v1069, %v1070
      %v1072 = vrot.slane %v1071, 1
      %v1073 = vadd.f32 %v1071, %v1072
      %v1074 = vsel %vm366, %v275, 0.0
      %v1075 = vrot.slane %v1074, 4
      %v1076 = vadd.f32 %v1074, %v1075
      %v1077 = vrot.slane %v1076, 2
      %v1078 = vadd.f32 %v1076, %v1077
      %v1079 = vrot.slane %v1078, 1
      %v1080 = vadd.f32 %v1078, %v1079
      %v1081 = vsel %vm366, %v276, 0.0
      %v1082 = vrot.slane %v1081, 4
      %v1083 = vadd.f32 %v1081, %v1082
      %v1084 = vrot.slane %v1083, 2
      %v1085 = vadd.f32 %v1083, %v1084
      %v1086 = vrot.slane %v1085, 1
      %v1087 = vadd.f32 %v1085, %v1086
      %v1088 = vsel %vm366, %v277, 0.0
      %v1089 = vrot.slane %v1088, 4
      %v1090 = vadd.f32 %v1088, %v1089
      %v1091 = vrot.slane %v1090, 2
      %v1092 = vadd.f32 %v1090, %v1091
      %v1093 = vrot.slane %v1092, 1
      %v1094 = vadd.f32 %v1092, %v1093
      %v1095 = vsel %vm366, %v278, 0.0
      %v1096 = vrot.slane %v1095, 4
      %v1097 = vadd.f32 %v1095, %v1096
      %v1098 = vrot.slane %v1097, 2
      %v1099 = vadd.f32 %v1097, %v1098
      %v1100 = vrot.slane %v1099, 1
      %v1101 = vadd.f32 %v1099, %v1100
      %v1102 = vsel %vm366, %v279, 0.0
      %v1103 = vrot.slane %v1102, 4
      %v1104 = vadd.f32 %v1102, %v1103
      %v1105 = vrot.slane %v1104, 2
      %v1106 = vadd.f32 %v1104, %v1105
      %v1107 = vrot.slane %v1106, 1
      %v1108 = vadd.f32 %v1106, %v1107
      %v1109 = vsel %vm366, %v280, 0.0
      %v1110 = vrot.slane %v1109, 4
      %v1111 = vadd.f32 %v1109, %v1110
      %v1112 = vrot.slane %v1111, 2
      %v1113 = vadd.f32 %v1111, %v1112
      %v1114 = vrot.slane %v1113, 1
      %v1115 = vadd.f32 %v1113, %v1114
      %v1116 = vsel %vm366, %v281, 0.0
      %v1117 = vrot.slane %v1116, 4
      %v1118 = vadd.f32 %v1116, %v1117
      %v1119 = vrot.slane %v1118, 2
      %v1120 = vadd.f32 %v1118, %v1119
      %v1121 = vrot.slane %v1120, 1
      %v1122 = vadd.f32 %v1120, %v1121
      %v1123 = vsel %vm366, %v282, 0.0
      %v1124 = vrot.slane %v1123, 4
      %v1125 = vadd.f32 %v1123, %v1124
      %v1126 = vrot.slane %v1125, 2
      %v1127 = vadd.f32 %v1125, %v1126
      %v1128 = vrot.slane %v1127, 1
      %v1129 = vadd.f32 %v1127, %v1128
      %v1130 = vsel %vm366, %v283, 0.0
      %v1131 = vrot.slane %v1130, 4
      %v1132 = vadd.f32 %v1130, %v1131
      %v1133 = vrot.slane %v1132, 2
      %v1134 = vadd.f32 %v1132, %v1133
      %v1135 = vrot.slane %v1134, 1
      %v1136 = vadd.f32 %v1134, %v1135
      %v1137 = vsel %vm366, %v284, 0.0
      %v1138 = vrot.slane %v1137, 4
      %v1139 = vadd.f32 %v1137, %v1138
      %v1140 = vrot.slane %v1139, 2
      %v1141 = vadd.f32 %v1139, %v1140
      %v1142 = vrot.slane %v1141, 1
      %v1143 = vadd.f32 %v1141, %v1142
      %v1144 = vsel %vm366, %v285, 0.0
      %v1145 = vrot.slane %v1144, 4
      %v1146 = vadd.f32 %v1144, %v1145
      %v1147 = vrot.slane %v1146, 2
      %v1148 = vadd.f32 %v1146, %v1147
      %v1149 = vrot.slane %v1148, 1
      %v1150 = vadd.f32 %v1148, %v1149
      %v1151 = vsel %vm366, %v286, 0.0
      %v1152 = vrot.slane %v1151, 4
      %v1153 = vadd.f32 %v1151, %v1152
      %v1154 = vrot.slane %v1153, 2
      %v1155 = vadd.f32 %v1153, %v1154
      %v1156 = vrot.slane %v1155, 1
      %v1157 = vadd.f32 %v1155, %v1156
      %v1158 = vsel %vm366, %v287, 0.0
      %v1159 = vrot.slane %v1158, 4
      %v1160 = vadd.f32 %v1158, %v1159
      %v1161 = vrot.slane %v1160, 2
      %v1162 = vadd.f32 %v1160, %v1161
      %v1163 = vrot.slane %v1162, 1
      %v1164 = vadd.f32 %v1162, %v1163
      %v1165 = vsel %vm366, %v288, 0.0
      %v1166 = vrot.slane %v1165, 4
      %v1167 = vadd.f32 %v1165, %v1166
      %v1168 = vrot.slane %v1167, 2
      %v1169 = vadd.f32 %v1167, %v1168
      %v1170 = vrot.slane %v1169, 1
      %v1171 = vadd.f32 %v1169, %v1170
      %v1172 = vsel %vm366, %v289, 0.0
      %v1173 = vrot.slane %v1172, 4
      %v1174 = vadd.f32 %v1172, %v1173
      %v1175 = vrot.slane %v1174, 2
      %v1176 = vadd.f32 %v1174, %v1175
      %v1177 = vrot.slane %v1176, 1
      %v1178 = vadd.f32 %v1176, %v1177
      %v1179 = vsel %vm366, %v290, 0.0
      %v1180 = vrot.slane %v1179, 4
      %v1181 = vadd.f32 %v1179, %v1180
      %v1182 = vrot.slane %v1181, 2
      %v1183 = vadd.f32 %v1181, %v1182
      %v1184 = vrot.slane %v1183, 1
      %v1185 = vadd.f32 %v1183, %v1184
      %v1186 = vsel %vm366, %v291, 0.0
      %v1187 = vrot.slane %v1186, 4
      %v1188 = vadd.f32 %v1186, %v1187
      %v1189 = vrot.slane %v1188, 2
      %v1190 = vadd.f32 %v1188, %v1189
      %v1191 = vrot.slane %v1190, 1
      %v1192 = vadd.f32 %v1190, %v1191
      %v1193 = vsel %vm366, %v292, 0.0
      %v1194 = vrot.slane %v1193, 4
      %v1195 = vadd.f32 %v1193, %v1194
      %v1196 = vrot.slane %v1195, 2
      %v1197 = vadd.f32 %v1195, %v1196
      %v1198 = vrot.slane %v1197, 1
      %v1199 = vadd.f32 %v1197, %v1198
      %v1200 = vsel %vm366, %v293, 0.0
      %v1201 = vrot.slane %v1200, 4
      %v1202 = vadd.f32 %v1200, %v1201
      %v1203 = vrot.slane %v1202, 2
      %v1204 = vadd.f32 %v1202, %v1203
      %v1205 = vrot.slane %v1204, 1
      %v1206 = vadd.f32 %v1204, %v1205
      %v1207 = vsel %vm366, %v294, 0.0
      %v1208 = vrot.slane %v1207, 4
      %v1209 = vadd.f32 %v1207, %v1208
      %v1210 = vrot.slane %v1209, 2
      %v1211 = vadd.f32 %v1209, %v1210
      %v1212 = vrot.slane %v1211, 1
      %v1213 = vadd.f32 %v1211, %v1212
      %v1214 = vsel %vm366, %v295, 0.0
      %v1215 = vrot.slane %v1214, 4
      %v1216 = vadd.f32 %v1214, %v1215
      %v1217 = vrot.slane %v1216, 2
      %v1218 = vadd.f32 %v1216, %v1217
      %v1219 = vrot.slane %v1218, 1
      %v1220 = vadd.f32 %v1218, %v1219
      %v1221 = vsel %vm366, %v296, 0.0
      %v1222 = vrot.slane %v1221, 4
      %v1223 = vadd.f32 %v1221, %v1222
      %v1224 = vrot.slane %v1223, 2
      %v1225 = vadd.f32 %v1223, %v1224
      %v1226 = vrot.slane %v1225, 1
      %v1227 = vadd.f32 %v1225, %v1226
      %v1228 = vsel %vm366, %v297, 0.0
      %v1229 = vrot.slane %v1228, 4
      %v1230 = vadd.f32 %v1228, %v1229
      %v1231 = vrot.slane %v1230, 2
      %v1232 = vadd.f32 %v1230, %v1231
      %v1233 = vrot.slane %v1232, 1
      %v1234 = vadd.f32 %v1232, %v1233
      %v1235 = vsel %vm366, %v298, 0.0
      %v1236 = vrot.slane %v1235, 4
      %v1237 = vadd.f32 %v1235, %v1236
      %v1238 = vrot.slane %v1237, 2
      %v1239 = vadd.f32 %v1237, %v1238
      %v1240 = vrot.slane %v1239, 1
      %v1241 = vadd.f32 %v1239, %v1240
      %v1242 = vsel %vm366, %v299, 0.0
      %v1243 = vrot.slane %v1242, 4
      %v1244 = vadd.f32 %v1242, %v1243
      %v1245 = vrot.slane %v1244, 2
      %v1246 = vadd.f32 %v1244, %v1245
      %v1247 = vrot.slane %v1246, 1
      %v1248 = vadd.f32 %v1246, %v1247
      %v1249 = vsel %vm366, %v300, 0.0
      %v1250 = vrot.slane %v1249, 4
      %v1251 = vadd.f32 %v1249, %v1250
      %v1252 = vrot.slane %v1251, 2
      %v1253 = vadd.f32 %v1251, %v1252
      %v1254 = vrot.slane %v1253, 1
      %v1255 = vadd.f32 %v1253, %v1254
      %v1256 = vsel %vm366, %v301, 0.0
      %v1257 = vrot.slane %v1256, 4
      %v1258 = vadd.f32 %v1256, %v1257
      %v1259 = vrot.slane %v1258, 2
      %v1260 = vadd.f32 %v1258, %v1259
      %v1261 = vrot.slane %v1260, 1
      %v1262 = vadd.f32 %v1260, %v1261
      %v1263 = vrcp.pop 8.0
      %v1264 = vmul.f32 8.0, %v1263
      %v1265 = vsub.f32 1.0, %v1264
      %v1266 = vmul.f32 %v1263, %v1265
      %v1267 = vadd.f32 %v1263, %v1266
      %vm1268 = vweird.f32 %v1263
      %v1269 = vsel %vm1268, %v1263, %v1267
      %v1270 = vmul.f32 %v373, %v1269
      %v1271 = vmul.f32 %v380, %v1269
      %v1272 = vmul.f32 %v387, %v1269
      %v1273 = vmul.f32 %v394, %v1269
      %v1274 = vmul.f32 %v401, %v1269
      %v1275 = vmul.f32 %v408, %v1269
      %v1276 = vmul.f32 %v415, %v1269
      %v1277 = vmul.f32 %v422, %v1269
      %v1278 = vmul.f32 %v429, %v1269
      %v1279 = vmul.f32 %v436, %v1269
      %v1280 = vmul.f32 %v443, %v1269
      %v1281 = vmul.f32 %v450, %v1269
      %v1282 = vmul.f32 %v457, %v1269
      %v1283 = vmul.f32 %v464, %v1269
      %v1284 = vmul.f32 %v471, %v1269
      %v1285 = vmul.f32 %v478, %v1269
      %v1286 = vmul.f32 %v485, %v1269
      %v1287 = vmul.f32 %v492, %v1269
      %v1288 = vmul.f32 %v499, %v1269
      %v1289 = vmul.f32 %v506, %v1269
      %v1290 = vmul.f32 %v513, %v1269
      %v1291 = vmul.f32 %v520, %v1269
      %v1292 = vmul.f32 %v527, %v1269
      %v1293 = vmul.f32 %v534, %v1269
      %v1294 = vmul.f32 %v541, %v1269
      %v1295 = vmul.f32 %v548, %v1269
      %v1296 = vmul.f32 %v555, %v1269
      %v1297 = vmul.f32 %v562, %v1269
      %v1298 = vmul.f32 %v569, %v1269
      %v1299 = vmul.f32 %v576, %v1269
      %v1300 = vmul.f32 %v583, %v1269
      %v1301 = vmul.f32 %v590, %v1269
      %v1302 = vmul.f32 %v597, %v1269
      %v1303 = vmul.f32 %v604, %v1269
      %v1304 = vmul.f32 %v611, %v1269
      %v1305 = vmul.f32 %v618, %v1269
      %v1306 = vmul.f32 %v625, %v1269
      %v1307 = vmul.f32 %v632, %v1269
      %v1308 = vmul.f32 %v639, %v1269
      %v1309 = vmul.f32 %v646, %v1269
      %v1310 = vmul.f32 %v653, %v1269
      %v1311 = vmul.f32 %v660, %v1269
      %v1312 = vmul.f32 %v667, %v1269
      %v1313 = vmul.f32 %v674, %v1269
      %v1314 = vmul.f32 %v681, %v1269
      %v1315 = vmul.f32 %v688, %v1269
      %v1316 = vmul.f32 %v695, %v1269
      %v1317 = vmul.f32 %v702, %v1269
      %v1318 = vmul.f32 %v709, %v1269
      %v1319 = vmul.f32 %v716, %v1269
      %v1320 = vmul.f32 %v723, %v1269
      %v1321 = vmul.f32 %v730, %v1269
      %v1322 = vmul.f32 %v737, %v1269
      %v1323 = vmul.f32 %v744, %v1269
      %v1324 = vmul.f32 %v751, %v1269
      %v1325 = vmul.f32 %v758, %v1269
      %v1326 = vmul.f32 %v765, %v1269
      %v1327 = vmul.f32 %v772, %v1269
      %v1328 = vmul.f32 %v779, %v1269
      %v1329 = vmul.f32 %v786, %v1269
      %v1330 = vmul.f32 %v793, %v1269
      %v1331 = vmul.f32 %v800, %v1269
      %v1332 = vmul.f32 %v807, %v1269
      %v1333 = vmul.f32 %v814, %v1269
      %v1334 = vmul.f32 %v821, %v1269
      %v1335 = vmul.f32 %v828, %v1269
      %v1336 = vmul.f32 %v835, %v1269
      %v1337 = vmul.f32 %v842, %v1269
      %v1338 = vmul.f32 %v849, %v1269
      %v1339 = vmul.f32 %v856, %v1269
      %v1340 = vmul.f32 %v863, %v1269
      %v1341 = vmul.f32 %v870, %v1269
      %v1342 = vmul.f32 %v877, %v1269
      %v1343 = vmul.f32 %v884, %v1269
      %v1344 = vmul.f32 %v891, %v1269
      %v1345 = vmul.f32 %v898, %v1269
      %v1346 = vmul.f32 %v905, %v1269
      %v1347 = vmul.f32 %v912, %v1269
      %v1348 = vmul.f32 %v919, %v1269
      %v1349 = vmul.f32 %v926, %v1269
      %v1350 = vmul.f32 %v933, %v1269
      %v1351 = vmul.f32 %v940, %v1269
      %v1352 = vmul.f32 %v947, %v1269
      %v1353 = vmul.f32 %v954, %v1269
      %v1354 = vmul.f32 %v961, %v1269
      %v1355 = vmul.f32 %v968, %v1269
      %v1356 = vmul.f32 %v975, %v1269
      %v1357 = vmul.f32 %v982, %v1269
      %v1358 = vmul.f32 %v989, %v1269
      %v1359 = vmul.f32 %v996, %v1269
      %v1360 = vmul.f32 %v1003, %v1269
      %v1361 = vmul.f32 %v1010, %v1269
      %v1362 = vmul.f32 %v1017, %v1269
      %v1363 = vmul.f32 %v1024, %v1269
      %v1364 = vmul.f32 %v1031, %v1269
      %v1365 = vmul.f32 %v1038, %v1269
      %v1366 = vmul.f32 %v1045, %v1269
      %v1367 = vmul.f32 %v1052, %v1269
      %v1368 = vmul.f32 %v1059, %v1269
      %v1369 = vmul.f32 %v1066, %v1269
      %v1370 = vmul.f32 %v1073, %v1269
      %v1371 = vmul.f32 %v1080, %v1269
      %v1372 = vmul.f32 %v1087, %v1269
      %v1373 = vmul.f32 %v1094, %v1269
      %v1374 = vmul.f32 %v1101, %v1269
      %v1375 = vmul.f32 %v1108, %v1269
      %v1376 = vmul.f32 %v1115, %v1269
      %v1377 = vmul.f32 %v1122, %v1269
      %v1378 = vmul.f32 %v1129, %v1269
      %v1379 = vmul.f32 %v1136, %v1269
      %v1380 = vmul.f32 %v1143, %v1269
      %v1381 = vmul.f32 %v1150, %v1269
      %v1382 = vmul.f32 %v1157, %v1269
      %v1383 = vmul.f32 %v1164, %v1269
      %v1384 = vmul.f32 %v1171, %v1269
      %v1385 = vmul.f32 %v1178, %v1269
      %v1386 = vmul.f32 %v1185, %v1269
      %v1387 = vmul.f32 %v1192, %v1269
      %v1388 = vmul.f32 %v1199, %v1269
      %v1389 = vmul.f32 %v1206, %v1269
      %v1390 = vmul.f32 %v1213, %v1269
      %v1391 = vmul.f32 %v1220, %v1269
      %v1392 = vmul.f32 %v1227, %v1269
      %v1393 = vmul.f32 %v1234, %v1269
      %v1394 = vmul.f32 %v1241, %v1269
      %v1395 = vmul.f32 %v1248, %v1269
      %v1396 = vmul.f32 %v1255, %v1269
      %v1397 = vmul.f32 %v1262, %v1269
      %vm1402 = vcmask 1041409
      %v1403 = vsel %vm1402, %v1271, %v1270
      %vm1404 = vcmask 1042434
      %v1405 = vsel %vm1404, %v1272, %v1403
      %vm1406 = vcmask 1043459
      %v1407 = vsel %vm1406, %v1273, %v1405
      %v1409 = vsel %vm366, %v302, 0
      %v1412 = vsel %vm366, %v303, 0
      %v1414 = vsel %vm366, %v1407, 0
      %1416 = vmatpush.xpose.msra.mxu0 0.0
      %1417 = vmatpush.xpose.msra.mxu0 0.0
      %1418 = vmatpush.xpose.msra.mxu0 0.0
      %1419 = vmatpush.xpose.msra.mxu0 0.0
      %1420 = vmatpush.xpose.msra.mxu0 0.0
      %1421 = vmatpush.xpose.msra.mxu0 0.0
      %1422 = vmatpush.xpose.msra.mxu0 0.0
      %1423 = vmatpush.xpose.msra.mxu0 0.0
      %1424 = vmatpush.xpose.msra.mxu0 0.0
      %1425 = vmatpush.xpose.msra.mxu0 0.0
      %1426 = vmatpush.xpose.msra.mxu0 0.0
      %1427 = vmatpush.xpose.msra.mxu0 0.0
      %1428 = vmatpush.xpose.msra.mxu0 0.0
      %1429 = vmatpush.xpose.msra.mxu0 0.0
      %1430 = vmatpush.xpose.msra.mxu0 0.0
      %1431 = vmatpush.xpose.msra.mxu0 %v1414
      %1432 = vmatmul.f32.gmra.mxu0 %v1409
      %v1433 = vpop.f32.mrf.mxu0
      %v1434 = vadd.f32 0.0, %v1433
      %1435 = vmatmul.f32.gmra.mxu0 %v1412
      %v1436 = vpop.f32.mrf.mxu0
      %v1437 = vadd.f32 0.0, %v1436
      %1438 = vdwg.mxu0
      %v1443 = vsel %vm1402, %v1275, %v1274
      %v1444 = vsel %vm1404, %v1276, %v1443
      %v1445 = vsel %vm1406, %v1277, %v1444
      %v1447 = vsel %vm366, %v304, 0
      %v1450 = vsel %vm366, %v305, 0
      %v1452 = vsel %vm366, %v1445, 0
      %1454 = vmatpush.xpose.msra.mxu0 0.0
      %1455 = vmatpush.xpose.msra.mxu0 0.0
      %1456 = vmatpush.xpose.msra.mxu0 0.0
      %1457 = vmatpush.xpose.msra.mxu0 0.0
      %1458 = vmatpush.xpose.msra.mxu0 0.0
      %1459 = vmatpush.xpose.msra.mxu0 0.0
      %1460 = vmatpush.xpose.msra.mxu0 0.0
      %1461 = vmatpush.xpose.msra.mxu0 0.0
      %1462 = vmatpush.xpose.msra.mxu0 0.0
      %1463 = vmatpush.xpose.msra.mxu0 0.0
      %1464 = vmatpush.xpose.msra.mxu0 0.0
      %1465 = vmatpush.xpose.msra.mxu0 0.0
      %1466 = vmatpush.xpose.msra.mxu0 0.0
      %1467 = vmatpush.xpose.msra.mxu0 0.0
      %1468 = vmatpush.xpose.msra.mxu0 0.0
      %1469 = vmatpush.xpose.msra.mxu0 %v1452
      %1470 = vmatmul.f32.gmra.mxu0 %v1447
      %v1471 = vpop.f32.mrf.mxu0
      %v1472 = vadd.f32 0.0, %v1471
      %1473 = vmatmul.f32.gmra.mxu0 %v1450
      %v1474 = vpop.f32.mrf.mxu0
      %v1475 = vadd.f32 0.0, %v1474
      %1476 = vdwg.mxu0
      %v1481 = vsel %vm1402, %v1279, %v1278
      %v1482 = vsel %vm1404, %v1280, %v1481
      %v1483 = vsel %vm1406, %v1281, %v1482
      %v1485 = vsel %vm366, %v306, 0
      %v1488 = vsel %vm366, %v307, 0
      %v1490 = vsel %vm366, %v1483, 0
      %1492 = vmatpush.xpose.msra.mxu0 0.0
      %1493 = vmatpush.xpose.msra.mxu0 0.0
      %1494 = vmatpush.xpose.msra.mxu0 0.0
      %1495 = vmatpush.xpose.msra.mxu0 0.0
      %1496 = vmatpush.xpose.msra.mxu0 0.0
      %1497 = vmatpush.xpose.msra.mxu0 0.0
      %1498 = vmatpush.xpose.msra.mxu0 0.0
      %1499 = vmatpush.xpose.msra.mxu0 0.0
      %1500 = vmatpush.xpose.msra.mxu0 0.0
      %1501 = vmatpush.xpose.msra.mxu0 0.0
      %1502 = vmatpush.xpose.msra.mxu0 0.0
      %1503 = vmatpush.xpose.msra.mxu0 0.0
      %1504 = vmatpush.xpose.msra.mxu0 0.0
      %1505 = vmatpush.xpose.msra.mxu0 0.0
      %1506 = vmatpush.xpose.msra.mxu0 0.0
      %1507 = vmatpush.xpose.msra.mxu0 %v1490
      %1508 = vmatmul.f32.gmra.mxu0 %v1485
      %v1509 = vpop.f32.mrf.mxu0
      %v1510 = vadd.f32 0.0, %v1509
      %1511 = vmatmul.f32.gmra.mxu0 %v1488
      %v1512 = vpop.f32.mrf.mxu0
      %v1513 = vadd.f32 0.0, %v1512
      %1514 = vdwg.mxu0
      %v1519 = vsel %vm1402, %v1283, %v1282
      %v1520 = vsel %vm1404, %v1284, %v1519
      %v1521 = vsel %vm1406, %v1285, %v1520
      %v1523 = vsel %vm366, %v308, 0
      %v1526 = vsel %vm366, %v309, 0
      %v1528 = vsel %vm366, %v1521, 0
      %1530 = vmatpush.xpose.msra.mxu0 0.0
      %1531 = vmatpush.xpose.msra.mxu0 0.0
      %1532 = vmatpush.xpose.msra.mxu0 0.0
      %1533 = vmatpush.xpose.msra.mxu0 0.0
      %1534 = vmatpush.xpose.msra.mxu0 0.0
      %1535 = vmatpush.xpose.msra.mxu0 0.0
      %1536 = vmatpush.xpose.msra.mxu0 0.0
      %1537 = vmatpush.xpose.msra.mxu0 0.0
      %1538 = vmatpush.xpose.msra.mxu0 0.0
      %1539 = vmatpush.xpose.msra.mxu0 0.0
      %1540 = vmatpush.xpose.msra.mxu0 0.0
      %1541 = vmatpush.xpose.msra.mxu0 0.0
      %1542 = vmatpush.xpose.msra.mxu0 0.0
      %1543 = vmatpush.xpose.msra.mxu0 0.0
      %1544 = vmatpush.xpose.msra.mxu0 0.0
      %1545 = vmatpush.xpose.msra.mxu0 %v1528
      %1546 = vmatmul.f32.gmra.mxu0 %v1523
      %v1547 = vpop.f32.mrf.mxu0
      %v1548 = vadd.f32 0.0, %v1547
      %1549 = vmatmul.f32.gmra.mxu0 %v1526
      %v1550 = vpop.f32.mrf.mxu0
      %v1551 = vadd.f32 0.0, %v1550
      %1552 = vdwg.mxu0
      %v1557 = vsel %vm1402, %v1287, %v1286
      %v1558 = vsel %vm1404, %v1288, %v1557
      %v1559 = vsel %vm1406, %v1289, %v1558
      %v1561 = vsel %vm366, %v310, 0
      %v1564 = vsel %vm366, %v311, 0
      %v1566 = vsel %vm366, %v1559, 0
      %1568 = vmatpush.xpose.msra.mxu0 0.0
      %1569 = vmatpush.xpose.msra.mxu0 0.0
      %1570 = vmatpush.xpose.msra.mxu0 0.0
      %1571 = vmatpush.xpose.msra.mxu0 0.0
      %1572 = vmatpush.xpose.msra.mxu0 0.0
      %1573 = vmatpush.xpose.msra.mxu0 0.0
      %1574 = vmatpush.xpose.msra.mxu0 0.0
      %1575 = vmatpush.xpose.msra.mxu0 0.0
      %1576 = vmatpush.xpose.msra.mxu0 0.0
      %1577 = vmatpush.xpose.msra.mxu0 0.0
      %1578 = vmatpush.xpose.msra.mxu0 0.0
      %1579 = vmatpush.xpose.msra.mxu0 0.0
      %1580 = vmatpush.xpose.msra.mxu0 0.0
      %1581 = vmatpush.xpose.msra.mxu0 0.0
      %1582 = vmatpush.xpose.msra.mxu0 0.0
      %1583 = vmatpush.xpose.msra.mxu0 %v1566
      %1584 = vmatmul.f32.gmra.mxu0 %v1561
      %v1585 = vpop.f32.mrf.mxu0
      %v1586 = vadd.f32 0.0, %v1585
      %1587 = vmatmul.f32.gmra.mxu0 %v1564
      %v1588 = vpop.f32.mrf.mxu0
      %v1589 = vadd.f32 0.0, %v1588
      %1590 = vdwg.mxu0
      %v1595 = vsel %vm1402, %v1291, %v1290
      %v1596 = vsel %vm1404, %v1292, %v1595
      %v1597 = vsel %vm1406, %v1293, %v1596
      %v1599 = vsel %vm366, %v312, 0
      %v1602 = vsel %vm366, %v313, 0
      %v1604 = vsel %vm366, %v1597, 0
      %1606 = vmatpush.xpose.msra.mxu0 0.0
      %1607 = vmatpush.xpose.msra.mxu0 0.0
      %1608 = vmatpush.xpose.msra.mxu0 0.0
      %1609 = vmatpush.xpose.msra.mxu0 0.0
      %1610 = vmatpush.xpose.msra.mxu0 0.0
      %1611 = vmatpush.xpose.msra.mxu0 0.0
      %1612 = vmatpush.xpose.msra.mxu0 0.0
      %1613 = vmatpush.xpose.msra.mxu0 0.0
      %1614 = vmatpush.xpose.msra.mxu0 0.0
      %1615 = vmatpush.xpose.msra.mxu0 0.0
      %1616 = vmatpush.xpose.msra.mxu0 0.0
      %1617 = vmatpush.xpose.msra.mxu0 0.0
      %1618 = vmatpush.xpose.msra.mxu0 0.0
      %1619 = vmatpush.xpose.msra.mxu0 0.0
      %1620 = vmatpush.xpose.msra.mxu0 0.0
      %1621 = vmatpush.xpose.msra.mxu0 %v1604
      %1622 = vmatmul.f32.gmra.mxu0 %v1599
      %v1623 = vpop.f32.mrf.mxu0
      %v1624 = vadd.f32 0.0, %v1623
      %1625 = vmatmul.f32.gmra.mxu0 %v1602
      %v1626 = vpop.f32.mrf.mxu0
      %v1627 = vadd.f32 0.0, %v1626
      %1628 = vdwg.mxu0
      %v1633 = vsel %vm1402, %v1295, %v1294
      %v1634 = vsel %vm1404, %v1296, %v1633
      %v1635 = vsel %vm1406, %v1297, %v1634
      %v1637 = vsel %vm366, %v314, 0
      %v1640 = vsel %vm366, %v315, 0
      %v1642 = vsel %vm366, %v1635, 0
      %1644 = vmatpush.xpose.msra.mxu0 0.0
      %1645 = vmatpush.xpose.msra.mxu0 0.0
      %1646 = vmatpush.xpose.msra.mxu0 0.0
      %1647 = vmatpush.xpose.msra.mxu0 0.0
      %1648 = vmatpush.xpose.msra.mxu0 0.0
      %1649 = vmatpush.xpose.msra.mxu0 0.0
      %1650 = vmatpush.xpose.msra.mxu0 0.0
      %1651 = vmatpush.xpose.msra.mxu0 0.0
      %1652 = vmatpush.xpose.msra.mxu0 0.0
      %1653 = vmatpush.xpose.msra.mxu0 0.0
      %1654 = vmatpush.xpose.msra.mxu0 0.0
      %1655 = vmatpush.xpose.msra.mxu0 0.0
      %1656 = vmatpush.xpose.msra.mxu0 0.0
      %1657 = vmatpush.xpose.msra.mxu0 0.0
      %1658 = vmatpush.xpose.msra.mxu0 0.0
      %1659 = vmatpush.xpose.msra.mxu0 %v1642
      %1660 = vmatmul.f32.gmra.mxu0 %v1637
      %v1661 = vpop.f32.mrf.mxu0
      %v1662 = vadd.f32 0.0, %v1661
      %1663 = vmatmul.f32.gmra.mxu0 %v1640
      %v1664 = vpop.f32.mrf.mxu0
      %v1665 = vadd.f32 0.0, %v1664
      %1666 = vdwg.mxu0
      %v1671 = vsel %vm1402, %v1299, %v1298
      %v1672 = vsel %vm1404, %v1300, %v1671
      %v1673 = vsel %vm1406, %v1301, %v1672
      %v1675 = vsel %vm366, %v316, 0
      %v1678 = vsel %vm366, %v317, 0
      %v1680 = vsel %vm366, %v1673, 0
      %1682 = vmatpush.xpose.msra.mxu0 0.0
      %1683 = vmatpush.xpose.msra.mxu0 0.0
      %1684 = vmatpush.xpose.msra.mxu0 0.0
      %1685 = vmatpush.xpose.msra.mxu0 0.0
      %1686 = vmatpush.xpose.msra.mxu0 0.0
      %1687 = vmatpush.xpose.msra.mxu0 0.0
      %1688 = vmatpush.xpose.msra.mxu0 0.0
      %1689 = vmatpush.xpose.msra.mxu0 0.0
      %1690 = vmatpush.xpose.msra.mxu0 0.0
      %1691 = vmatpush.xpose.msra.mxu0 0.0
      %1692 = vmatpush.xpose.msra.mxu0 0.0
      %1693 = vmatpush.xpose.msra.mxu0 0.0
      %1694 = vmatpush.xpose.msra.mxu0 0.0
      %1695 = vmatpush.xpose.msra.mxu0 0.0
      %1696 = vmatpush.xpose.msra.mxu0 0.0
      %1697 = vmatpush.xpose.msra.mxu0 %v1680
      %1698 = vmatmul.f32.gmra.mxu0 %v1675
      %v1699 = vpop.f32.mrf.mxu0
      %v1700 = vadd.f32 0.0, %v1699
      %1701 = vmatmul.f32.gmra.mxu0 %v1678
      %v1702 = vpop.f32.mrf.mxu0
      %v1703 = vadd.f32 0.0, %v1702
      %1704 = vdwg.mxu0
      %v1709 = vsel %vm1402, %v1303, %v1302
      %v1710 = vsel %vm1404, %v1304, %v1709
      %v1711 = vsel %vm1406, %v1305, %v1710
      %v1713 = vsel %vm366, %v318, 0
      %v1716 = vsel %vm366, %v319, 0
      %v1718 = vsel %vm366, %v1711, 0
      %1720 = vmatpush.xpose.msra.mxu0 0.0
      %1721 = vmatpush.xpose.msra.mxu0 0.0
      %1722 = vmatpush.xpose.msra.mxu0 0.0
      %1723 = vmatpush.xpose.msra.mxu0 0.0
      %1724 = vmatpush.xpose.msra.mxu0 0.0
      %1725 = vmatpush.xpose.msra.mxu0 0.0
      %1726 = vmatpush.xpose.msra.mxu0 0.0
      %1727 = vmatpush.xpose.msra.mxu0 0.0
      %1728 = vmatpush.xpose.msra.mxu0 0.0
      %1729 = vmatpush.xpose.msra.mxu0 0.0
      %1730 = vmatpush.xpose.msra.mxu0 0.0
      %1731 = vmatpush.xpose.msra.mxu0 0.0
      %1732 = vmatpush.xpose.msra.mxu0 0.0
      %1733 = vmatpush.xpose.msra.mxu0 0.0
      %1734 = vmatpush.xpose.msra.mxu0 0.0
      %1735 = vmatpush.xpose.msra.mxu0 %v1718
      %1736 = vmatmul.f32.gmra.mxu0 %v1713
      %v1737 = vpop.f32.mrf.mxu0
      %v1738 = vadd.f32 0.0, %v1737
      %1739 = vmatmul.f32.gmra.mxu0 %v1716
      %v1740 = vpop.f32.mrf.mxu0
      %v1741 = vadd.f32 0.0, %v1740
      %1742 = vdwg.mxu0
      %v1747 = vsel %vm1402, %v1307, %v1306
      %v1748 = vsel %vm1404, %v1308, %v1747
      %v1749 = vsel %vm1406, %v1309, %v1748
      %v1751 = vsel %vm366, %v320, 0
      %v1754 = vsel %vm366, %v321, 0
      %v1756 = vsel %vm366, %v1749, 0
      %1758 = vmatpush.xpose.msra.mxu0 0.0
      %1759 = vmatpush.xpose.msra.mxu0 0.0
      %1760 = vmatpush.xpose.msra.mxu0 0.0
      %1761 = vmatpush.xpose.msra.mxu0 0.0
      %1762 = vmatpush.xpose.msra.mxu0 0.0
      %1763 = vmatpush.xpose.msra.mxu0 0.0
      %1764 = vmatpush.xpose.msra.mxu0 0.0
      %1765 = vmatpush.xpose.msra.mxu0 0.0
      %1766 = vmatpush.xpose.msra.mxu0 0.0
      %1767 = vmatpush.xpose.msra.mxu0 0.0
      %1768 = vmatpush.xpose.msra.mxu0 0.0
      %1769 = vmatpush.xpose.msra.mxu0 0.0
      %1770 = vmatpush.xpose.msra.mxu0 0.0
      %1771 = vmatpush.xpose.msra.mxu0 0.0
      %1772 = vmatpush.xpose.msra.mxu0 0.0
      %1773 = vmatpush.xpose.msra.mxu0 %v1756
      %1774 = vmatmul.f32.gmra.mxu0 %v1751
      %v1775 = vpop.f32.mrf.mxu0
      %v1776 = vadd.f32 0.0, %v1775
      %1777 = vmatmul.f32.gmra.mxu0 %v1754
      %v1778 = vpop.f32.mrf.mxu0
      %v1779 = vadd.f32 0.0, %v1778
      %1780 = vdwg.mxu0
      %v1785 = vsel %vm1402, %v1311, %v1310
      %v1786 = vsel %vm1404, %v1312, %v1785
      %v1787 = vsel %vm1406, %v1313, %v1786
      %v1789 = vsel %vm366, %v322, 0
      %v1792 = vsel %vm366, %v323, 0
      %v1794 = vsel %vm366, %v1787, 0
      %1796 = vmatpush.xpose.msra.mxu0 0.0
      %1797 = vmatpush.xpose.msra.mxu0 0.0
      %1798 = vmatpush.xpose.msra.mxu0 0.0
      %1799 = vmatpush.xpose.msra.mxu0 0.0
      %1800 = vmatpush.xpose.msra.mxu0 0.0
      %1801 = vmatpush.xpose.msra.mxu0 0.0
      %1802 = vmatpush.xpose.msra.mxu0 0.0
      %1803 = vmatpush.xpose.msra.mxu0 0.0
      %1804 = vmatpush.xpose.msra.mxu0 0.0
      %1805 = vmatpush.xpose.msra.mxu0 0.0
      %1806 = vmatpush.xpose.msra.mxu0 0.0
      %1807 = vmatpush.xpose.msra.mxu0 0.0
      %1808 = vmatpush.xpose.msra.mxu0 0.0
      %1809 = vmatpush.xpose.msra.mxu0 0.0
      %1810 = vmatpush.xpose.msra.mxu0 0.0
      %1811 = vmatpush.xpose.msra.mxu0 %v1794
      %1812 = vmatmul.f32.gmra.mxu0 %v1789
      %v1813 = vpop.f32.mrf.mxu0
      %v1814 = vadd.f32 0.0, %v1813
      %1815 = vmatmul.f32.gmra.mxu0 %v1792
      %v1816 = vpop.f32.mrf.mxu0
      %v1817 = vadd.f32 0.0, %v1816
      %1818 = vdwg.mxu0
      %v1823 = vsel %vm1402, %v1315, %v1314
      %v1824 = vsel %vm1404, %v1316, %v1823
      %v1825 = vsel %vm1406, %v1317, %v1824
      %v1827 = vsel %vm366, %v324, 0
      %v1830 = vsel %vm366, %v325, 0
      %v1832 = vsel %vm366, %v1825, 0
      %1834 = vmatpush.xpose.msra.mxu0 0.0
      %1835 = vmatpush.xpose.msra.mxu0 0.0
      %1836 = vmatpush.xpose.msra.mxu0 0.0
      %1837 = vmatpush.xpose.msra.mxu0 0.0
      %1838 = vmatpush.xpose.msra.mxu0 0.0
      %1839 = vmatpush.xpose.msra.mxu0 0.0
      %1840 = vmatpush.xpose.msra.mxu0 0.0
      %1841 = vmatpush.xpose.msra.mxu0 0.0
      %1842 = vmatpush.xpose.msra.mxu0 0.0
      %1843 = vmatpush.xpose.msra.mxu0 0.0
      %1844 = vmatpush.xpose.msra.mxu0 0.0
      %1845 = vmatpush.xpose.msra.mxu0 0.0
      %1846 = vmatpush.xpose.msra.mxu0 0.0
      %1847 = vmatpush.xpose.msra.mxu0 0.0
      %1848 = vmatpush.xpose.msra.mxu0 0.0
      %1849 = vmatpush.xpose.msra.mxu0 %v1832
      %1850 = vmatmul.f32.gmra.mxu0 %v1827
      %v1851 = vpop.f32.mrf.mxu0
      %v1852 = vadd.f32 0.0, %v1851
      %1853 = vmatmul.f32.gmra.mxu0 %v1830
      %v1854 = vpop.f32.mrf.mxu0
      %v1855 = vadd.f32 0.0, %v1854
      %1856 = vdwg.mxu0
      %v1861 = vsel %vm1402, %v1319, %v1318
      %v1862 = vsel %vm1404, %v1320, %v1861
      %v1863 = vsel %vm1406, %v1321, %v1862
      %v1865 = vsel %vm366, %v326, 0
      %v1868 = vsel %vm366, %v327, 0
      %v1870 = vsel %vm366, %v1863, 0
      %1872 = vmatpush.xpose.msra.mxu0 0.0
      %1873 = vmatpush.xpose.msra.mxu0 0.0
      %1874 = vmatpush.xpose.msra.mxu0 0.0
      %1875 = vmatpush.xpose.msra.mxu0 0.0
      %1876 = vmatpush.xpose.msra.mxu0 0.0
      %1877 = vmatpush.xpose.msra.mxu0 0.0
      %1878 = vmatpush.xpose.msra.mxu0 0.0
      %1879 = vmatpush.xpose.msra.mxu0 0.0
      %1880 = vmatpush.xpose.msra.mxu0 0.0
      %1881 = vmatpush.xpose.msra.mxu0 0.0
      %1882 = vmatpush.xpose.msra.mxu0 0.0
      %1883 = vmatpush.xpose.msra.mxu0 0.0
      %1884 = vmatpush.xpose.msra.mxu0 0.0
      %1885 = vmatpush.xpose.msra.mxu0 0.0
      %1886 = vmatpush.xpose.msra.mxu0 0.0
      %1887 = vmatpush.xpose.msra.mxu0 %v1870
      %1888 = vmatmul.f32.gmra.mxu0 %v1865
      %v1889 = vpop.f32.mrf.mxu0
      %v1890 = vadd.f32 0.0, %v1889
      %1891 = vmatmul.f32.gmra.mxu0 %v1868
      %v1892 = vpop.f32.mrf.mxu0
      %v1893 = vadd.f32 0.0, %v1892
      %1894 = vdwg.mxu0
      %v1899 = vsel %vm1402, %v1323, %v1322
      %v1900 = vsel %vm1404, %v1324, %v1899
      %v1901 = vsel %vm1406, %v1325, %v1900
      %v1903 = vsel %vm366, %v328, 0
      %v1906 = vsel %vm366, %v329, 0
      %v1908 = vsel %vm366, %v1901, 0
      %1910 = vmatpush.xpose.msra.mxu0 0.0
      %1911 = vmatpush.xpose.msra.mxu0 0.0
      %1912 = vmatpush.xpose.msra.mxu0 0.0
      %1913 = vmatpush.xpose.msra.mxu0 0.0
      %1914 = vmatpush.xpose.msra.mxu0 0.0
      %1915 = vmatpush.xpose.msra.mxu0 0.0
      %1916 = vmatpush.xpose.msra.mxu0 0.0
      %1917 = vmatpush.xpose.msra.mxu0 0.0
      %1918 = vmatpush.xpose.msra.mxu0 0.0
      %1919 = vmatpush.xpose.msra.mxu0 0.0
      %1920 = vmatpush.xpose.msra.mxu0 0.0
      %1921 = vmatpush.xpose.msra.mxu0 0.0
      %1922 = vmatpush.xpose.msra.mxu0 0.0
      %1923 = vmatpush.xpose.msra.mxu0 0.0
      %1924 = vmatpush.xpose.msra.mxu0 0.0
      %1925 = vmatpush.xpose.msra.mxu0 %v1908
      %1926 = vmatmul.f32.gmra.mxu0 %v1903
      %v1927 = vpop.f32.mrf.mxu0
      %v1928 = vadd.f32 0.0, %v1927
      %1929 = vmatmul.f32.gmra.mxu0 %v1906
      %v1930 = vpop.f32.mrf.mxu0
      %v1931 = vadd.f32 0.0, %v1930
      %1932 = vdwg.mxu0
      %v1937 = vsel %vm1402, %v1327, %v1326
      %v1938 = vsel %vm1404, %v1328, %v1937
      %v1939 = vsel %vm1406, %v1329, %v1938
      %v1941 = vsel %vm366, %v330, 0
      %v1944 = vsel %vm366, %v331, 0
      %v1946 = vsel %vm366, %v1939, 0
      %1948 = vmatpush.xpose.msra.mxu0 0.0
      %1949 = vmatpush.xpose.msra.mxu0 0.0
      %1950 = vmatpush.xpose.msra.mxu0 0.0
      %1951 = vmatpush.xpose.msra.mxu0 0.0
      %1952 = vmatpush.xpose.msra.mxu0 0.0
      %1953 = vmatpush.xpose.msra.mxu0 0.0
      %1954 = vmatpush.xpose.msra.mxu0 0.0
      %1955 = vmatpush.xpose.msra.mxu0 0.0
      %1956 = vmatpush.xpose.msra.mxu0 0.0
      %1957 = vmatpush.xpose.msra.mxu0 0.0
      %1958 = vmatpush.xpose.msra.mxu0 0.0
      %1959 = vmatpush.xpose.msra.mxu0 0.0
      %1960 = vmatpush.xpose.msra.mxu0 0.0
      %1961 = vmatpush.xpose.msra.mxu0 0.0
      %1962 = vmatpush.xpose.msra.mxu0 0.0
      %1963 = vmatpush.xpose.msra.mxu0 %v1946
      %1964 = vmatmul.f32.gmra.mxu0 %v1941
      %v1965 = vpop.f32.mrf.mxu0
      %v1966 = vadd.f32 0.0, %v1965
      %1967 = vmatmul.f32.gmra.mxu0 %v1944
      %v1968 = vpop.f32.mrf.mxu0
      %v1969 = vadd.f32 0.0, %v1968
      %1970 = vdwg.mxu0
      %v1975 = vsel %vm1402, %v1331, %v1330
      %v1976 = vsel %vm1404, %v1332, %v1975
      %v1977 = vsel %vm1406, %v1333, %v1976
      %v1979 = vsel %vm366, %v332, 0
      %v1982 = vsel %vm366, %v333, 0
      %v1984 = vsel %vm366, %v1977, 0
      %1986 = vmatpush.xpose.msra.mxu0 0.0
      %1987 = vmatpush.xpose.msra.mxu0 0.0
      %1988 = vmatpush.xpose.msra.mxu0 0.0
      %1989 = vmatpush.xpose.msra.mxu0 0.0
      %1990 = vmatpush.xpose.msra.mxu0 0.0
      %1991 = vmatpush.xpose.msra.mxu0 0.0
      %1992 = vmatpush.xpose.msra.mxu0 0.0
      %1993 = vmatpush.xpose.msra.mxu0 0.0
      %1994 = vmatpush.xpose.msra.mxu0 0.0
      %1995 = vmatpush.xpose.msra.mxu0 0.0
      %1996 = vmatpush.xpose.msra.mxu0 0.0
      %1997 = vmatpush.xpose.msra.mxu0 0.0
      %1998 = vmatpush.xpose.msra.mxu0 0.0
      %1999 = vmatpush.xpose.msra.mxu0 0.0
      %2000 = vmatpush.xpose.msra.mxu0 0.0
      %2001 = vmatpush.xpose.msra.mxu0 %v1984
      %2002 = vmatmul.f32.gmra.mxu0 %v1979
      %v2003 = vpop.f32.mrf.mxu0
      %v2004 = vadd.f32 0.0, %v2003
      %2005 = vmatmul.f32.gmra.mxu0 %v1982
      %v2006 = vpop.f32.mrf.mxu0
      %v2007 = vadd.f32 0.0, %v2006
      %2008 = vdwg.mxu0
      %v2013 = vsel %vm1402, %v1335, %v1334
      %v2014 = vsel %vm1404, %v1336, %v2013
      %v2015 = vsel %vm1406, %v1337, %v2014
      %v2017 = vsel %vm366, %v334, 0
      %v2020 = vsel %vm366, %v335, 0
      %v2022 = vsel %vm366, %v2015, 0
      %2024 = vmatpush.xpose.msra.mxu0 0.0
      %2025 = vmatpush.xpose.msra.mxu0 0.0
      %2026 = vmatpush.xpose.msra.mxu0 0.0
      %2027 = vmatpush.xpose.msra.mxu0 0.0
      %2028 = vmatpush.xpose.msra.mxu0 0.0
      %2029 = vmatpush.xpose.msra.mxu0 0.0
      %2030 = vmatpush.xpose.msra.mxu0 0.0
      %2031 = vmatpush.xpose.msra.mxu0 0.0
      %2032 = vmatpush.xpose.msra.mxu0 0.0
      %2033 = vmatpush.xpose.msra.mxu0 0.0
      %2034 = vmatpush.xpose.msra.mxu0 0.0
      %2035 = vmatpush.xpose.msra.mxu0 0.0
      %2036 = vmatpush.xpose.msra.mxu0 0.0
      %2037 = vmatpush.xpose.msra.mxu0 0.0
      %2038 = vmatpush.xpose.msra.mxu0 0.0
      %2039 = vmatpush.xpose.msra.mxu0 %v2022
      %2040 = vmatmul.f32.gmra.mxu0 %v2017
      %v2041 = vpop.f32.mrf.mxu0
      %v2042 = vadd.f32 0.0, %v2041
      %2043 = vmatmul.f32.gmra.mxu0 %v2020
      %v2044 = vpop.f32.mrf.mxu0
      %v2045 = vadd.f32 0.0, %v2044
      %2046 = vdwg.mxu0
      %v2051 = vsel %vm1402, %v1339, %v1338
      %v2052 = vsel %vm1404, %v1340, %v2051
      %v2053 = vsel %vm1406, %v1341, %v2052
      %v2055 = vsel %vm366, %v336, 0
      %v2058 = vsel %vm366, %v337, 0
      %v2060 = vsel %vm366, %v2053, 0
      %2062 = vmatpush.xpose.msra.mxu0 0.0
      %2063 = vmatpush.xpose.msra.mxu0 0.0
      %2064 = vmatpush.xpose.msra.mxu0 0.0
      %2065 = vmatpush.xpose.msra.mxu0 0.0
      %2066 = vmatpush.xpose.msra.mxu0 0.0
      %2067 = vmatpush.xpose.msra.mxu0 0.0
      %2068 = vmatpush.xpose.msra.mxu0 0.0
      %2069 = vmatpush.xpose.msra.mxu0 0.0
      %2070 = vmatpush.xpose.msra.mxu0 0.0
      %2071 = vmatpush.xpose.msra.mxu0 0.0
      %2072 = vmatpush.xpose.msra.mxu0 0.0
      %2073 = vmatpush.xpose.msra.mxu0 0.0
      %2074 = vmatpush.xpose.msra.mxu0 0.0
      %2075 = vmatpush.xpose.msra.mxu0 0.0
      %2076 = vmatpush.xpose.msra.mxu0 0.0
      %2077 = vmatpush.xpose.msra.mxu0 %v2060
      %2078 = vmatmul.f32.gmra.mxu0 %v2055
      %v2079 = vpop.f32.mrf.mxu0
      %v2080 = vadd.f32 0.0, %v2079
      %2081 = vmatmul.f32.gmra.mxu0 %v2058
      %v2082 = vpop.f32.mrf.mxu0
      %v2083 = vadd.f32 0.0, %v2082
      %2084 = vdwg.mxu0
      %v2089 = vsel %vm1402, %v1343, %v1342
      %v2090 = vsel %vm1404, %v1344, %v2089
      %v2091 = vsel %vm1406, %v1345, %v2090
      %v2093 = vsel %vm366, %v338, 0
      %v2096 = vsel %vm366, %v339, 0
      %v2098 = vsel %vm366, %v2091, 0
      %2100 = vmatpush.xpose.msra.mxu0 0.0
      %2101 = vmatpush.xpose.msra.mxu0 0.0
      %2102 = vmatpush.xpose.msra.mxu0 0.0
      %2103 = vmatpush.xpose.msra.mxu0 0.0
      %2104 = vmatpush.xpose.msra.mxu0 0.0
      %2105 = vmatpush.xpose.msra.mxu0 0.0
      %2106 = vmatpush.xpose.msra.mxu0 0.0
      %2107 = vmatpush.xpose.msra.mxu0 0.0
      %2108 = vmatpush.xpose.msra.mxu0 0.0
      %2109 = vmatpush.xpose.msra.mxu0 0.0
      %2110 = vmatpush.xpose.msra.mxu0 0.0
      %2111 = vmatpush.xpose.msra.mxu0 0.0
      %2112 = vmatpush.xpose.msra.mxu0 0.0
      %2113 = vmatpush.xpose.msra.mxu0 0.0
      %2114 = vmatpush.xpose.msra.mxu0 0.0
      %2115 = vmatpush.xpose.msra.mxu0 %v2098
      %2116 = vmatmul.f32.gmra.mxu0 %v2093
      %v2117 = vpop.f32.mrf.mxu0
      %v2118 = vadd.f32 0.0, %v2117
      %2119 = vmatmul.f32.gmra.mxu0 %v2096
      %v2120 = vpop.f32.mrf.mxu0
      %v2121 = vadd.f32 0.0, %v2120
      %2122 = vdwg.mxu0
      %v2127 = vsel %vm1402, %v1347, %v1346
      %v2128 = vsel %vm1404, %v1348, %v2127
      %v2129 = vsel %vm1406, %v1349, %v2128
      %v2131 = vsel %vm366, %v340, 0
      %v2134 = vsel %vm366, %v341, 0
      %v2136 = vsel %vm366, %v2129, 0
      %2138 = vmatpush.xpose.msra.mxu0 0.0
      %2139 = vmatpush.xpose.msra.mxu0 0.0
      %2140 = vmatpush.xpose.msra.mxu0 0.0
      %2141 = vmatpush.xpose.msra.mxu0 0.0
      %2142 = vmatpush.xpose.msra.mxu0 0.0
      %2143 = vmatpush.xpose.msra.mxu0 0.0
      %2144 = vmatpush.xpose.msra.mxu0 0.0
      %2145 = vmatpush.xpose.msra.mxu0 0.0
      %2146 = vmatpush.xpose.msra.mxu0 0.0
      %2147 = vmatpush.xpose.msra.mxu0 0.0
      %2148 = vmatpush.xpose.msra.mxu0 0.0
      %2149 = vmatpush.xpose.msra.mxu0 0.0
      %2150 = vmatpush.xpose.msra.mxu0 0.0
      %2151 = vmatpush.xpose.msra.mxu0 0.0
      %2152 = vmatpush.xpose.msra.mxu0 0.0
      %2153 = vmatpush.xpose.msra.mxu0 %v2136
      %2154 = vmatmul.f32.gmra.mxu0 %v2131
      %v2155 = vpop.f32.mrf.mxu0
      %v2156 = vadd.f32 0.0, %v2155
      %2157 = vmatmul.f32.gmra.mxu0 %v2134
      %v2158 = vpop.f32.mrf.mxu0
      %v2159 = vadd.f32 0.0, %v2158
      %2160 = vdwg.mxu0
      %v2165 = vsel %vm1402, %v1351, %v1350
      %v2166 = vsel %vm1404, %v1352, %v2165
      %v2167 = vsel %vm1406, %v1353, %v2166
      %v2169 = vsel %vm366, %v342, 0
      %v2172 = vsel %vm366, %v343, 0
      %v2174 = vsel %vm366, %v2167, 0
      %2176 = vmatpush.xpose.msra.mxu0 0.0
      %2177 = vmatpush.xpose.msra.mxu0 0.0
      %2178 = vmatpush.xpose.msra.mxu0 0.0
      %2179 = vmatpush.xpose.msra.mxu0 0.0
      %2180 = vmatpush.xpose.msra.mxu0 0.0
      %2181 = vmatpush.xpose.msra.mxu0 0.0
      %2182 = vmatpush.xpose.msra.mxu0 0.0
      %2183 = vmatpush.xpose.msra.mxu0 0.0
      %2184 = vmatpush.xpose.msra.mxu0 0.0
      %2185 = vmatpush.xpose.msra.mxu0 0.0
      %2186 = vmatpush.xpose.msra.mxu0 0.0
      %2187 = vmatpush.xpose.msra.mxu0 0.0
      %2188 = vmatpush.xpose.msra.mxu0 0.0
      %2189 = vmatpush.xpose.msra.mxu0 0.0
      %2190 = vmatpush.xpose.msra.mxu0 0.0
      %2191 = vmatpush.xpose.msra.mxu0 %v2174
      %2192 = vmatmul.f32.gmra.mxu0 %v2169
      %v2193 = vpop.f32.mrf.mxu0
      %v2194 = vadd.f32 0.0, %v2193
      %2195 = vmatmul.f32.gmra.mxu0 %v2172
      %v2196 = vpop.f32.mrf.mxu0
      %v2197 = vadd.f32 0.0, %v2196
      %2198 = vdwg.mxu0
      %v2203 = vsel %vm1402, %v1355, %v1354
      %v2204 = vsel %vm1404, %v1356, %v2203
      %v2205 = vsel %vm1406, %v1357, %v2204
      %v2207 = vsel %vm366, %v344, 0
      %v2210 = vsel %vm366, %v345, 0
      %v2212 = vsel %vm366, %v2205, 0
      %2214 = vmatpush.xpose.msra.mxu0 0.0
      %2215 = vmatpush.xpose.msra.mxu0 0.0
      %2216 = vmatpush.xpose.msra.mxu0 0.0
      %2217 = vmatpush.xpose.msra.mxu0 0.0
      %2218 = vmatpush.xpose.msra.mxu0 0.0
      %2219 = vmatpush.xpose.msra.mxu0 0.0
      %2220 = vmatpush.xpose.msra.mxu0 0.0
      %2221 = vmatpush.xpose.msra.mxu0 0.0
      %2222 = vmatpush.xpose.msra.mxu0 0.0
      %2223 = vmatpush.xpose.msra.mxu0 0.0
      %2224 = vmatpush.xpose.msra.mxu0 0.0
      %2225 = vmatpush.xpose.msra.mxu0 0.0
      %2226 = vmatpush.xpose.msra.mxu0 0.0
      %2227 = vmatpush.xpose.msra.mxu0 0.0
      %2228 = vmatpush.xpose.msra.mxu0 0.0
      %2229 = vmatpush.xpose.msra.mxu0 %v2212
      %2230 = vmatmul.f32.gmra.mxu0 %v2207
      %v2231 = vpop.f32.mrf.mxu0
      %v2232 = vadd.f32 0.0, %v2231
      %2233 = vmatmul.f32.gmra.mxu0 %v2210
      %v2234 = vpop.f32.mrf.mxu0
      %v2235 = vadd.f32 0.0, %v2234
      %2236 = vdwg.mxu0
      %v2241 = vsel %vm1402, %v1359, %v1358
      %v2242 = vsel %vm1404, %v1360, %v2241
      %v2243 = vsel %vm1406, %v1361, %v2242
      %v2245 = vsel %vm366, %v346, 0
      %v2248 = vsel %vm366, %v347, 0
      %v2250 = vsel %vm366, %v2243, 0
      %2252 = vmatpush.xpose.msra.mxu0 0.0
      %2253 = vmatpush.xpose.msra.mxu0 0.0
      %2254 = vmatpush.xpose.msra.mxu0 0.0
      %2255 = vmatpush.xpose.msra.mxu0 0.0
      %2256 = vmatpush.xpose.msra.mxu0 0.0
      %2257 = vmatpush.xpose.msra.mxu0 0.0
      %2258 = vmatpush.xpose.msra.mxu0 0.0
      %2259 = vmatpush.xpose.msra.mxu0 0.0
      %2260 = vmatpush.xpose.msra.mxu0 0.0
      %2261 = vmatpush.xpose.msra.mxu0 0.0
      %2262 = vmatpush.xpose.msra.mxu0 0.0
      %2263 = vmatpush.xpose.msra.mxu0 0.0
      %2264 = vmatpush.xpose.msra.mxu0 0.0
      %2265 = vmatpush.xpose.msra.mxu0 0.0
      %2266 = vmatpush.xpose.msra.mxu0 0.0
      %2267 = vmatpush.xpose.msra.mxu0 %v2250
      %2268 = vmatmul.f32.gmra.mxu0 %v2245
      %v2269 = vpop.f32.mrf.mxu0
      %v2270 = vadd.f32 0.0, %v2269
      %2271 = vmatmul.f32.gmra.mxu0 %v2248
      %v2272 = vpop.f32.mrf.mxu0
      %v2273 = vadd.f32 0.0, %v2272
      %2274 = vdwg.mxu0
      %v2279 = vsel %vm1402, %v1363, %v1362
      %v2280 = vsel %vm1404, %v1364, %v2279
      %v2281 = vsel %vm1406, %v1365, %v2280
      %v2283 = vsel %vm366, %v348, 0
      %v2286 = vsel %vm366, %v349, 0
      %v2288 = vsel %vm366, %v2281, 0
      %2290 = vmatpush.xpose.msra.mxu0 0.0
      %2291 = vmatpush.xpose.msra.mxu0 0.0
      %2292 = vmatpush.xpose.msra.mxu0 0.0
      %2293 = vmatpush.xpose.msra.mxu0 0.0
      %2294 = vmatpush.xpose.msra.mxu0 0.0
      %2295 = vmatpush.xpose.msra.mxu0 0.0
      %2296 = vmatpush.xpose.msra.mxu0 0.0
      %2297 = vmatpush.xpose.msra.mxu0 0.0
      %2298 = vmatpush.xpose.msra.mxu0 0.0
      %2299 = vmatpush.xpose.msra.mxu0 0.0
      %2300 = vmatpush.xpose.msra.mxu0 0.0
      %2301 = vmatpush.xpose.msra.mxu0 0.0
      %2302 = vmatpush.xpose.msra.mxu0 0.0
      %2303 = vmatpush.xpose.msra.mxu0 0.0
      %2304 = vmatpush.xpose.msra.mxu0 0.0
      %2305 = vmatpush.xpose.msra.mxu0 %v2288
      %2306 = vmatmul.f32.gmra.mxu0 %v2283
      %v2307 = vpop.f32.mrf.mxu0
      %v2308 = vadd.f32 0.0, %v2307
      %2309 = vmatmul.f32.gmra.mxu0 %v2286
      %v2310 = vpop.f32.mrf.mxu0
      %v2311 = vadd.f32 0.0, %v2310
      %2312 = vdwg.mxu0
      %v2317 = vsel %vm1402, %v1367, %v1366
      %v2318 = vsel %vm1404, %v1368, %v2317
      %v2319 = vsel %vm1406, %v1369, %v2318
      %v2321 = vsel %vm366, %v350, 0
      %v2324 = vsel %vm366, %v351, 0
      %v2326 = vsel %vm366, %v2319, 0
      %2328 = vmatpush.xpose.msra.mxu0 0.0
      %2329 = vmatpush.xpose.msra.mxu0 0.0
      %2330 = vmatpush.xpose.msra.mxu0 0.0
      %2331 = vmatpush.xpose.msra.mxu0 0.0
      %2332 = vmatpush.xpose.msra.mxu0 0.0
      %2333 = vmatpush.xpose.msra.mxu0 0.0
      %2334 = vmatpush.xpose.msra.mxu0 0.0
      %2335 = vmatpush.xpose.msra.mxu0 0.0
      %2336 = vmatpush.xpose.msra.mxu0 0.0
      %2337 = vmatpush.xpose.msra.mxu0 0.0
      %2338 = vmatpush.xpose.msra.mxu0 0.0
      %2339 = vmatpush.xpose.msra.mxu0 0.0
      %2340 = vmatpush.xpose.msra.mxu0 0.0
      %2341 = vmatpush.xpose.msra.mxu0 0.0
      %2342 = vmatpush.xpose.msra.mxu0 0.0
      %2343 = vmatpush.xpose.msra.mxu0 %v2326
      %2344 = vmatmul.f32.gmra.mxu0 %v2321
      %v2345 = vpop.f32.mrf.mxu0
      %v2346 = vadd.f32 0.0, %v2345
      %2347 = vmatmul.f32.gmra.mxu0 %v2324
      %v2348 = vpop.f32.mrf.mxu0
      %v2349 = vadd.f32 0.0, %v2348
      %2350 = vdwg.mxu0
      %v2355 = vsel %vm1402, %v1371, %v1370
      %v2356 = vsel %vm1404, %v1372, %v2355
      %v2357 = vsel %vm1406, %v1373, %v2356
      %v2359 = vsel %vm366, %v352, 0
      %v2362 = vsel %vm366, %v353, 0
      %v2364 = vsel %vm366, %v2357, 0
      %2366 = vmatpush.xpose.msra.mxu0 0.0
      %2367 = vmatpush.xpose.msra.mxu0 0.0
      %2368 = vmatpush.xpose.msra.mxu0 0.0
      %2369 = vmatpush.xpose.msra.mxu0 0.0
      %2370 = vmatpush.xpose.msra.mxu0 0.0
      %2371 = vmatpush.xpose.msra.mxu0 0.0
      %2372 = vmatpush.xpose.msra.mxu0 0.0
      %2373 = vmatpush.xpose.msra.mxu0 0.0
      %2374 = vmatpush.xpose.msra.mxu0 0.0
      %2375 = vmatpush.xpose.msra.mxu0 0.0
      %2376 = vmatpush.xpose.msra.mxu0 0.0
      %2377 = vmatpush.xpose.msra.mxu0 0.0
      %2378 = vmatpush.xpose.msra.mxu0 0.0
      %2379 = vmatpush.xpose.msra.mxu0 0.0
      %2380 = vmatpush.xpose.msra.mxu0 0.0
      %2381 = vmatpush.xpose.msra.mxu0 %v2364
      %2382 = vmatmul.f32.gmra.mxu0 %v2359
      %v2383 = vpop.f32.mrf.mxu0
      %v2384 = vadd.f32 0.0, %v2383
      %2385 = vmatmul.f32.gmra.mxu0 %v2362
      %v2386 = vpop.f32.mrf.mxu0
      %v2387 = vadd.f32 0.0, %v2386
      %2388 = vdwg.mxu0
      %v2393 = vsel %vm1402, %v1375, %v1374
      %v2394 = vsel %vm1404, %v1376, %v2393
      %v2395 = vsel %vm1406, %v1377, %v2394
      %v2397 = vsel %vm366, %v354, 0
      %v2400 = vsel %vm366, %v355, 0
      %v2402 = vsel %vm366, %v2395, 0
      %2404 = vmatpush.xpose.msra.mxu0 0.0
      %2405 = vmatpush.xpose.msra.mxu0 0.0
      %2406 = vmatpush.xpose.msra.mxu0 0.0
      %2407 = vmatpush.xpose.msra.mxu0 0.0
      %2408 = vmatpush.xpose.msra.mxu0 0.0
      %2409 = vmatpush.xpose.msra.mxu0 0.0
      %2410 = vmatpush.xpose.msra.mxu0 0.0
      %2411 = vmatpush.xpose.msra.mxu0 0.0
      %2412 = vmatpush.xpose.msra.mxu0 0.0
      %2413 = vmatpush.xpose.msra.mxu0 0.0
      %2414 = vmatpush.xpose.msra.mxu0 0.0
      %2415 = vmatpush.xpose.msra.mxu0 0.0
      %2416 = vmatpush.xpose.msra.mxu0 0.0
      %2417 = vmatpush.xpose.msra.mxu0 0.0
      %2418 = vmatpush.xpose.msra.mxu0 0.0
      %2419 = vmatpush.xpose.msra.mxu0 %v2402
      %2420 = vmatmul.f32.gmra.mxu0 %v2397
      %v2421 = vpop.f32.mrf.mxu0
      %v2422 = vadd.f32 0.0, %v2421
      %2423 = vmatmul.f32.gmra.mxu0 %v2400
      %v2424 = vpop.f32.mrf.mxu0
      %v2425 = vadd.f32 0.0, %v2424
      %2426 = vdwg.mxu0
      %v2431 = vsel %vm1402, %v1379, %v1378
      %v2432 = vsel %vm1404, %v1380, %v2431
      %v2433 = vsel %vm1406, %v1381, %v2432
      %v2435 = vsel %vm366, %v356, 0
      %v2438 = vsel %vm366, %v357, 0
      %v2440 = vsel %vm366, %v2433, 0
      %2442 = vmatpush.xpose.msra.mxu0 0.0
      %2443 = vmatpush.xpose.msra.mxu0 0.0
      %2444 = vmatpush.xpose.msra.mxu0 0.0
      %2445 = vmatpush.xpose.msra.mxu0 0.0
      %2446 = vmatpush.xpose.msra.mxu0 0.0
      %2447 = vmatpush.xpose.msra.mxu0 0.0
      %2448 = vmatpush.xpose.msra.mxu0 0.0
      %2449 = vmatpush.xpose.msra.mxu0 0.0
      %2450 = vmatpush.xpose.msra.mxu0 0.0
      %2451 = vmatpush.xpose.msra.mxu0 0.0
      %2452 = vmatpush.xpose.msra.mxu0 0.0
      %2453 = vmatpush.xpose.msra.mxu0 0.0
      %2454 = vmatpush.xpose.msra.mxu0 0.0
      %2455 = vmatpush.xpose.msra.mxu0 0.0
      %2456 = vmatpush.xpose.msra.mxu0 0.0
      %2457 = vmatpush.xpose.msra.mxu0 %v2440
      %2458 = vmatmul.f32.gmra.mxu0 %v2435
      %v2459 = vpop.f32.mrf.mxu0
      %v2460 = vadd.f32 0.0, %v2459
      %2461 = vmatmul.f32.gmra.mxu0 %v2438
      %v2462 = vpop.f32.mrf.mxu0
      %v2463 = vadd.f32 0.0, %v2462
      %2464 = vdwg.mxu0
      %v2469 = vsel %vm1402, %v1383, %v1382
      %v2470 = vsel %vm1404, %v1384, %v2469
      %v2471 = vsel %vm1406, %v1385, %v2470
      %v2473 = vsel %vm366, %v358, 0
      %v2476 = vsel %vm366, %v359, 0
      %v2478 = vsel %vm366, %v2471, 0
      %2480 = vmatpush.xpose.msra.mxu0 0.0
      %2481 = vmatpush.xpose.msra.mxu0 0.0
      %2482 = vmatpush.xpose.msra.mxu0 0.0
      %2483 = vmatpush.xpose.msra.mxu0 0.0
      %2484 = vmatpush.xpose.msra.mxu0 0.0
      %2485 = vmatpush.xpose.msra.mxu0 0.0
      %2486 = vmatpush.xpose.msra.mxu0 0.0
      %2487 = vmatpush.xpose.msra.mxu0 0.0
      %2488 = vmatpush.xpose.msra.mxu0 0.0
      %2489 = vmatpush.xpose.msra.mxu0 0.0
      %2490 = vmatpush.xpose.msra.mxu0 0.0
      %2491 = vmatpush.xpose.msra.mxu0 0.0
      %2492 = vmatpush.xpose.msra.mxu0 0.0
      %2493 = vmatpush.xpose.msra.mxu0 0.0
      %2494 = vmatpush.xpose.msra.mxu0 0.0
      %2495 = vmatpush.xpose.msra.mxu0 %v2478
      %2496 = vmatmul.f32.gmra.mxu0 %v2473
      %v2497 = vpop.f32.mrf.mxu0
      %v2498 = vadd.f32 0.0, %v2497
      %2499 = vmatmul.f32.gmra.mxu0 %v2476
      %v2500 = vpop.f32.mrf.mxu0
      %v2501 = vadd.f32 0.0, %v2500
      %2502 = vdwg.mxu0
      %v2507 = vsel %vm1402, %v1387, %v1386
      %v2508 = vsel %vm1404, %v1388, %v2507
      %v2509 = vsel %vm1406, %v1389, %v2508
      %v2511 = vsel %vm366, %v360, 0
      %v2514 = vsel %vm366, %v361, 0
      %v2516 = vsel %vm366, %v2509, 0
      %2518 = vmatpush.xpose.msra.mxu0 0.0
      %2519 = vmatpush.xpose.msra.mxu0 0.0
      %2520 = vmatpush.xpose.msra.mxu0 0.0
      %2521 = vmatpush.xpose.msra.mxu0 0.0
      %2522 = vmatpush.xpose.msra.mxu0 0.0
      %2523 = vmatpush.xpose.msra.mxu0 0.0
      %2524 = vmatpush.xpose.msra.mxu0 0.0
      %2525 = vmatpush.xpose.msra.mxu0 0.0
      %2526 = vmatpush.xpose.msra.mxu0 0.0
      %2527 = vmatpush.xpose.msra.mxu0 0.0
      %2528 = vmatpush.xpose.msra.mxu0 0.0
      %2529 = vmatpush.xpose.msra.mxu0 0.0
      %2530 = vmatpush.xpose.msra.mxu0 0.0
      %2531 = vmatpush.xpose.msra.mxu0 0.0
      %2532 = vmatpush.xpose.msra.mxu0 0.0
      %2533 = vmatpush.xpose.msra.mxu0 %v2516
      %2534 = vmatmul.f32.gmra.mxu0 %v2511
      %v2535 = vpop.f32.mrf.mxu0
      %v2536 = vadd.f32 0.0, %v2535
      %2537 = vmatmul.f32.gmra.mxu0 %v2514
      %v2538 = vpop.f32.mrf.mxu0
      %v2539 = vadd.f32 0.0, %v2538
      %2540 = vdwg.mxu0
      %v2545 = vsel %vm1402, %v1391, %v1390
      %v2546 = vsel %vm1404, %v1392, %v2545
      %v2547 = vsel %vm1406, %v1393, %v2546
      %v2549 = vsel %vm366, %v362, 0
      %v2552 = vsel %vm366, %v363, 0
      %v2554 = vsel %vm366, %v2547, 0
      %2556 = vmatpush.xpose.msra.mxu0 0.0
      %2557 = vmatpush.xpose.msra.mxu0 0.0
      %2558 = vmatpush.xpose.msra.mxu0 0.0
      %2559 = vmatpush.xpose.msra.mxu0 0.0
      %2560 = vmatpush.xpose.msra.mxu0 0.0
      %2561 = vmatpush.xpose.msra.mxu0 0.0
      %2562 = vmatpush.xpose.msra.mxu0 0.0
      %2563 = vmatpush.xpose.msra.mxu0 0.0
      %2564 = vmatpush.xpose.msra.mxu0 0.0
      %2565 = vmatpush.xpose.msra.mxu0 0.0
      %2566 = vmatpush.xpose.msra.mxu0 0.0
      %2567 = vmatpush.xpose.msra.mxu0 0.0
      %2568 = vmatpush.xpose.msra.mxu0 0.0
      %2569 = vmatpush.xpose.msra.mxu0 0.0
      %2570 = vmatpush.xpose.msra.mxu0 0.0
      %2571 = vmatpush.xpose.msra.mxu0 %v2554
      %2572 = vmatmul.f32.gmra.mxu0 %v2549
      %v2573 = vpop.f32.mrf.mxu0
      %v2574 = vadd.f32 0.0, %v2573
      %2575 = vmatmul.f32.gmra.mxu0 %v2552
      %v2576 = vpop.f32.mrf.mxu0
      %v2577 = vadd.f32 0.0, %v2576
      %2578 = vdwg.mxu0
      %v2583 = vsel %vm1402, %v1395, %v1394
      %v2584 = vsel %vm1404, %v1396, %v2583
      %v2585 = vsel %vm1406, %v1397, %v2584
      %v2587 = vsel %vm366, %v364, 0
      %v2590 = vsel %vm366, %v365, 0
      %v2592 = vsel %vm366, %v2585, 0
      %2594 = vmatpush.xpose.msra.mxu0 0.0
      %2595 = vmatpush.xpose.msra.mxu0 0.0
      %2596 = vmatpush.xpose.msra.mxu0 0.0
      %2597 = vmatpush.xpose.msra.mxu0 0.0
      %2598 = vmatpush.xpose.msra.mxu0 0.0
      %2599 = vmatpush.xpose.msra.mxu0 0.0
      %2600 = vmatpush.xpose.msra.mxu0 0.0
      %2601 = vmatpush.xpose.msra.mxu0 0.0
      %2602 = vmatpush.xpose.msra.mxu0 0.0
      %2603 = vmatpush.xpose.msra.mxu0 0.0
      %2604 = vmatpush.xpose.msra.mxu0 0.0
      %2605 = vmatpush.xpose.msra.mxu0 0.0
      %2606 = vmatpush.xpose.msra.mxu0 0.0
      %2607 = vmatpush.xpose.msra.mxu0 0.0
      %2608 = vmatpush.xpose.msra.mxu0 0.0
      %2609 = vmatpush.xpose.msra.mxu0 %v2592
      %2610 = vmatmul.f32.gmra.mxu0 %v2587
      %v2611 = vpop.f32.mrf.mxu0
      %v2612 = vadd.f32 0.0, %v2611
      %2613 = vmatmul.f32.gmra.mxu0 %v2590
      %v2614 = vpop.f32.mrf.mxu0
      %v2615 = vadd.f32 0.0, %v2614
      %2616 = vdwg.mxu0
      %v2617 = vmul.f32 %v1270, %v1270
      %v2618 = vmul.f32 %v1271, %v1271
      %v2619 = vmul.f32 %v1272, %v1272
      %v2620 = vmul.f32 %v1273, %v1273
      %v2621 = vmul.f32 %v1274, %v1274
      %v2622 = vmul.f32 %v1275, %v1275
      %v2623 = vmul.f32 %v1276, %v1276
      %v2624 = vmul.f32 %v1277, %v1277
      %v2625 = vmul.f32 %v1278, %v1278
      %v2626 = vmul.f32 %v1279, %v1279
      %v2627 = vmul.f32 %v1280, %v1280
      %v2628 = vmul.f32 %v1281, %v1281
      %v2629 = vmul.f32 %v1282, %v1282
      %v2630 = vmul.f32 %v1283, %v1283
      %v2631 = vmul.f32 %v1284, %v1284
      %v2632 = vmul.f32 %v1285, %v1285
      %v2633 = vmul.f32 %v1286, %v1286
      %v2634 = vmul.f32 %v1287, %v1287
      %v2635 = vmul.f32 %v1288, %v1288
      %v2636 = vmul.f32 %v1289, %v1289
      %v2637 = vmul.f32 %v1290, %v1290
      %v2638 = vmul.f32 %v1291, %v1291
      %v2639 = vmul.f32 %v1292, %v1292
      %v2640 = vmul.f32 %v1293, %v1293
      %v2641 = vmul.f32 %v1294, %v1294
      %v2642 = vmul.f32 %v1295, %v1295
      %v2643 = vmul.f32 %v1296, %v1296
      %v2644 = vmul.f32 %v1297, %v1297
      %v2645 = vmul.f32 %v1298, %v1298
      %v2646 = vmul.f32 %v1299, %v1299
      %v2647 = vmul.f32 %v1300, %v1300
      %v2648 = vmul.f32 %v1301, %v1301
      %v2649 = vmul.f32 %v1302, %v1302
      %v2650 = vmul.f32 %v1303, %v1303
      %v2651 = vmul.f32 %v1304, %v1304
      %v2652 = vmul.f32 %v1305, %v1305
      %v2653 = vmul.f32 %v1306, %v1306
      %v2654 = vmul.f32 %v1307, %v1307
      %v2655 = vmul.f32 %v1308, %v1308
      %v2656 = vmul.f32 %v1309, %v1309
      %v2657 = vmul.f32 %v1310, %v1310
      %v2658 = vmul.f32 %v1311, %v1311
      %v2659 = vmul.f32 %v1312, %v1312
      %v2660 = vmul.f32 %v1313, %v1313
      %v2661 = vmul.f32 %v1314, %v1314
      %v2662 = vmul.f32 %v1315, %v1315
      %v2663 = vmul.f32 %v1316, %v1316
      %v2664 = vmul.f32 %v1317, %v1317
      %v2665 = vmul.f32 %v1318, %v1318
      %v2666 = vmul.f32 %v1319, %v1319
      %v2667 = vmul.f32 %v1320, %v1320
      %v2668 = vmul.f32 %v1321, %v1321
      %v2669 = vmul.f32 %v1322, %v1322
      %v2670 = vmul.f32 %v1323, %v1323
      %v2671 = vmul.f32 %v1324, %v1324
      %v2672 = vmul.f32 %v1325, %v1325
      %v2673 = vmul.f32 %v1326, %v1326
      %v2674 = vmul.f32 %v1327, %v1327
      %v2675 = vmul.f32 %v1328, %v1328
      %v2676 = vmul.f32 %v1329, %v1329
      %v2677 = vmul.f32 %v1330, %v1330
      %v2678 = vmul.f32 %v1331, %v1331
      %v2679 = vmul.f32 %v1332, %v1332
      %v2680 = vmul.f32 %v1333, %v1333
      %v2681 = vmul.f32 %v1334, %v1334
      %v2682 = vmul.f32 %v1335, %v1335
      %v2683 = vmul.f32 %v1336, %v1336
      %v2684 = vmul.f32 %v1337, %v1337
      %v2685 = vmul.f32 %v1338, %v1338
      %v2686 = vmul.f32 %v1339, %v1339
      %v2687 = vmul.f32 %v1340, %v1340
      %v2688 = vmul.f32 %v1341, %v1341
      %v2689 = vmul.f32 %v1342, %v1342
      %v2690 = vmul.f32 %v1343, %v1343
      %v2691 = vmul.f32 %v1344, %v1344
      %v2692 = vmul.f32 %v1345, %v1345
      %v2693 = vmul.f32 %v1346, %v1346
      %v2694 = vmul.f32 %v1347, %v1347
      %v2695 = vmul.f32 %v1348, %v1348
      %v2696 = vmul.f32 %v1349, %v1349
      %v2697 = vmul.f32 %v1350, %v1350
      %v2698 = vmul.f32 %v1351, %v1351
      %v2699 = vmul.f32 %v1352, %v1352
      %v2700 = vmul.f32 %v1353, %v1353
      %v2701 = vmul.f32 %v1354, %v1354
      %v2702 = vmul.f32 %v1355, %v1355
      %v2703 = vmul.f32 %v1356, %v1356
      %v2704 = vmul.f32 %v1357, %v1357
      %v2705 = vmul.f32 %v1358, %v1358
      %v2706 = vmul.f32 %v1359, %v1359
      %v2707 = vmul.f32 %v1360, %v1360
      %v2708 = vmul.f32 %v1361, %v1361
      %v2709 = vmul.f32 %v1362, %v1362
      %v2710 = vmul.f32 %v1363, %v1363
      %v2711 = vmul.f32 %v1364, %v1364
      %v2712 = vmul.f32 %v1365, %v1365
      %v2713 = vmul.f32 %v1366, %v1366
      %v2714 = vmul.f32 %v1367, %v1367
      %v2715 = vmul.f32 %v1368, %v1368
      %v2716 = vmul.f32 %v1369, %v1369
      %v2717 = vmul.f32 %v1370, %v1370
      %v2718 = vmul.f32 %v1371, %v1371
      %v2719 = vmul.f32 %v1372, %v1372
      %v2720 = vmul.f32 %v1373, %v1373
      %v2721 = vmul.f32 %v1374, %v1374
      %v2722 = vmul.f32 %v1375, %v1375
      %v2723 = vmul.f32 %v1376, %v1376
      %v2724 = vmul.f32 %v1377, %v1377
      %v2725 = vmul.f32 %v1378, %v1378
      %v2726 = vmul.f32 %v1379, %v1379
      %v2727 = vmul.f32 %v1380, %v1380
      %v2728 = vmul.f32 %v1381, %v1381
      %v2729 = vmul.f32 %v1382, %v1382
      %v2730 = vmul.f32 %v1383, %v1383
      %v2731 = vmul.f32 %v1384, %v1384
      %v2732 = vmul.f32 %v1385, %v1385
      %v2733 = vmul.f32 %v1386, %v1386
      %v2734 = vmul.f32 %v1387, %v1387
      %v2735 = vmul.f32 %v1388, %v1388
      %v2736 = vmul.f32 %v1389, %v1389
      %v2737 = vmul.f32 %v1390, %v1390
      %v2738 = vmul.f32 %v1391, %v1391
      %v2739 = vmul.f32 %v1392, %v1392
      %v2740 = vmul.f32 %v1393, %v1393
      %v2741 = vmul.f32 %v1394, %v1394
      %v2742 = vmul.f32 %v1395, %v1395
      %v2743 = vmul.f32 %v1396, %v1396
      %v2744 = vmul.f32 %v1397, %v1397
      %v2873 = vsel %vm1402, %v2618, %v2617
      %v2874 = vsel %vm1404, %v2619, %v2873
      %v2875 = vsel %vm1406, %v2620, %v2874
      %v2876 = vsel %vm1402, %v2622, %v2621
      %v2877 = vsel %vm1404, %v2623, %v2876
      %v2878 = vsel %vm1406, %v2624, %v2877
      %v2879 = vsel %vm1402, %v2626, %v2625
      %v2880 = vsel %vm1404, %v2627, %v2879
      %v2881 = vsel %vm1406, %v2628, %v2880
      %v2882 = vsel %vm1402, %v2630, %v2629
      %v2883 = vsel %vm1404, %v2631, %v2882
      %v2884 = vsel %vm1406, %v2632, %v2883
      %v2885 = vsel %vm1402, %v2634, %v2633
      %v2886 = vsel %vm1404, %v2635, %v2885
      %v2887 = vsel %vm1406, %v2636, %v2886
      %v2888 = vsel %vm1402, %v2638, %v2637
      %v2889 = vsel %vm1404, %v2639, %v2888
      %v2890 = vsel %vm1406, %v2640, %v2889
      %v2891 = vsel %vm1402, %v2642, %v2641
      %v2892 = vsel %vm1404, %v2643, %v2891
      %v2893 = vsel %vm1406, %v2644, %v2892
      %v2894 = vsel %vm1402, %v2646, %v2645
      %v2895 = vsel %vm1404, %v2647, %v2894
      %v2896 = vsel %vm1406, %v2648, %v2895
      %v2897 = vsel %vm1402, %v2650, %v2649
      %v2898 = vsel %vm1404, %v2651, %v2897
      %v2899 = vsel %vm1406, %v2652, %v2898
      %v2900 = vsel %vm1402, %v2654, %v2653
      %v2901 = vsel %vm1404, %v2655, %v2900
      %v2902 = vsel %vm1406, %v2656, %v2901
      %v2903 = vsel %vm1402, %v2658, %v2657
      %v2904 = vsel %vm1404, %v2659, %v2903
      %v2905 = vsel %vm1406, %v2660, %v2904
      %v2906 = vsel %vm1402, %v2662, %v2661
      %v2907 = vsel %vm1404, %v2663, %v2906
      %v2908 = vsel %vm1406, %v2664, %v2907
      %v2909 = vsel %vm1402, %v2666, %v2665
      %v2910 = vsel %vm1404, %v2667, %v2909
      %v2911 = vsel %vm1406, %v2668, %v2910
      %v2912 = vsel %vm1402, %v2670, %v2669
      %v2913 = vsel %vm1404, %v2671, %v2912
      %v2914 = vsel %vm1406, %v2672, %v2913
      %v2915 = vsel %vm1402, %v2674, %v2673
      %v2916 = vsel %vm1404, %v2675, %v2915
      %v2917 = vsel %vm1406, %v2676, %v2916
      %v2918 = vsel %vm1402, %v2678, %v2677
      %v2919 = vsel %vm1404, %v2679, %v2918
      %v2920 = vsel %vm1406, %v2680, %v2919
      %v2921 = vsel %vm1402, %v2682, %v2681
      %v2922 = vsel %vm1404, %v2683, %v2921
      %v2923 = vsel %vm1406, %v2684, %v2922
      %v2924 = vsel %vm1402, %v2686, %v2685
      %v2925 = vsel %vm1404, %v2687, %v2924
      %v2926 = vsel %vm1406, %v2688, %v2925
      %v2927 = vsel %vm1402, %v2690, %v2689
      %v2928 = vsel %vm1404, %v2691, %v2927
      %v2929 = vsel %vm1406, %v2692, %v2928
      %v2930 = vsel %vm1402, %v2694, %v2693
      %v2931 = vsel %vm1404, %v2695, %v2930
      %v2932 = vsel %vm1406, %v2696, %v2931
      %v2933 = vsel %vm1402, %v2698, %v2697
      %v2934 = vsel %vm1404, %v2699, %v2933
      %v2935 = vsel %vm1406, %v2700, %v2934
      %v2936 = vsel %vm1402, %v2702, %v2701
      %v2937 = vsel %vm1404, %v2703, %v2936
      %v2938 = vsel %vm1406, %v2704, %v2937
      %v2939 = vsel %vm1402, %v2706, %v2705
      %v2940 = vsel %vm1404, %v2707, %v2939
      %v2941 = vsel %vm1406, %v2708, %v2940
      %v2942 = vsel %vm1402, %v2710, %v2709
      %v2943 = vsel %vm1404, %v2711, %v2942
      %v2944 = vsel %vm1406, %v2712, %v2943
      %v2945 = vsel %vm1402, %v2714, %v2713
      %v2946 = vsel %vm1404, %v2715, %v2945
      %v2947 = vsel %vm1406, %v2716, %v2946
      %v2948 = vsel %vm1402, %v2718, %v2717
      %v2949 = vsel %vm1404, %v2719, %v2948
      %v2950 = vsel %vm1406, %v2720, %v2949
      %v2951 = vsel %vm1402, %v2722, %v2721
      %v2952 = vsel %vm1404, %v2723, %v2951
      %v2953 = vsel %vm1406, %v2724, %v2952
      %v2954 = vsel %vm1402, %v2726, %v2725
      %v2955 = vsel %vm1404, %v2727, %v2954
      %v2956 = vsel %vm1406, %v2728, %v2955
      %v2957 = vsel %vm1402, %v2730, %v2729
      %v2958 = vsel %vm1404, %v2731, %v2957
      %v2959 = vsel %vm1406, %v2732, %v2958
      %v2960 = vsel %vm1402, %v2734, %v2733
      %v2961 = vsel %vm1404, %v2735, %v2960
      %v2962 = vsel %vm1406, %v2736, %v2961
      %v2963 = vsel %vm1402, %v2738, %v2737
      %v2964 = vsel %vm1404, %v2739, %v2963
      %v2965 = vsel %vm1406, %v2740, %v2964
      %v2966 = vsel %vm1402, %v2742, %v2741
      %v2967 = vsel %vm1404, %v2743, %v2966
      %v2968 = vsel %vm1406, %v2744, %v2967
      %vm3001 = vcmask 257024
      %v3002 = vsel %vm3001, %v2875, 0.0
      %3003 = vadd.xlane.f32.xlu0 %v3002
      %v3004 = vpop.xlane.xlu0 %3003
      %v3005 = vsel %vm3001, %v2878, 0.0
      %3006 = vadd.xlane.f32.xlu0 %v3005
      %v3007 = vpop.xlane.xlu0 %3006
      %v3008 = vsel %vm3001, %v2881, 0.0
      %3009 = vadd.xlane.f32.xlu0 %v3008
      %v3010 = vpop.xlane.xlu0 %3009
      %v3011 = vsel %vm3001, %v2884, 0.0
      %3012 = vadd.xlane.f32.xlu0 %v3011
      %v3013 = vpop.xlane.xlu0 %3012
      %v3014 = vsel %vm3001, %v2887, 0.0
      %3015 = vadd.xlane.f32.xlu0 %v3014
      %v3016 = vpop.xlane.xlu0 %3015
      %v3017 = vsel %vm3001, %v2890, 0.0
      %3018 = vadd.xlane.f32.xlu0 %v3017
      %v3019 = vpop.xlane.xlu0 %3018
      %v3020 = vsel %vm3001, %v2893, 0.0
      %3021 = vadd.xlane.f32.xlu0 %v3020
      %v3022 = vpop.xlane.xlu0 %3021
      %v3023 = vsel %vm3001, %v2896, 0.0
      %3024 = vadd.xlane.f32.xlu0 %v3023
      %v3025 = vpop.xlane.xlu0 %3024
      %v3026 = vsel %vm3001, %v2899, 0.0
      %3027 = vadd.xlane.f32.xlu0 %v3026
      %v3028 = vpop.xlane.xlu0 %3027
      %v3029 = vsel %vm3001, %v2902, 0.0
      %3030 = vadd.xlane.f32.xlu0 %v3029
      %v3031 = vpop.xlane.xlu0 %3030
      %v3032 = vsel %vm3001, %v2905, 0.0
      %3033 = vadd.xlane.f32.xlu0 %v3032
      %v3034 = vpop.xlane.xlu0 %3033
      %v3035 = vsel %vm3001, %v2908, 0.0
      %3036 = vadd.xlane.f32.xlu0 %v3035
      %v3037 = vpop.xlane.xlu0 %3036
      %v3038 = vsel %vm3001, %v2911, 0.0
      %3039 = vadd.xlane.f32.xlu0 %v3038
      %v3040 = vpop.xlane.xlu0 %3039
      %v3041 = vsel %vm3001, %v2914, 0.0
      %3042 = vadd.xlane.f32.xlu0 %v3041
      %v3043 = vpop.xlane.xlu0 %3042
      %v3044 = vsel %vm3001, %v2917, 0.0
      %3045 = vadd.xlane.f32.xlu0 %v3044
      %v3046 = vpop.xlane.xlu0 %3045
      %v3047 = vsel %vm3001, %v2920, 0.0
      %3048 = vadd.xlane.f32.xlu0 %v3047
      %v3049 = vpop.xlane.xlu0 %3048
      %v3050 = vsel %vm3001, %v2923, 0.0
      %3051 = vadd.xlane.f32.xlu0 %v3050
      %v3052 = vpop.xlane.xlu0 %3051
      %v3053 = vsel %vm3001, %v2926, 0.0
      %3054 = vadd.xlane.f32.xlu0 %v3053
      %v3055 = vpop.xlane.xlu0 %3054
      %v3056 = vsel %vm3001, %v2929, 0.0
      %3057 = vadd.xlane.f32.xlu0 %v3056
      %v3058 = vpop.xlane.xlu0 %3057
      %v3059 = vsel %vm3001, %v2932, 0.0
      %3060 = vadd.xlane.f32.xlu0 %v3059
      %v3061 = vpop.xlane.xlu0 %3060
      %v3062 = vsel %vm3001, %v2935, 0.0
      %3063 = vadd.xlane.f32.xlu0 %v3062
      %v3064 = vpop.xlane.xlu0 %3063
      %v3065 = vsel %vm3001, %v2938, 0.0
      %3066 = vadd.xlane.f32.xlu0 %v3065
      %v3067 = vpop.xlane.xlu0 %3066
      %v3068 = vsel %vm3001, %v2941, 0.0
      %3069 = vadd.xlane.f32.xlu0 %v3068
      %v3070 = vpop.xlane.xlu0 %3069
      %v3071 = vsel %vm3001, %v2944, 0.0
      %3072 = vadd.xlane.f32.xlu0 %v3071
      %v3073 = vpop.xlane.xlu0 %3072
      %v3074 = vsel %vm3001, %v2947, 0.0
      %3075 = vadd.xlane.f32.xlu0 %v3074
      %v3076 = vpop.xlane.xlu0 %3075
      %v3077 = vsel %vm3001, %v2950, 0.0
      %3078 = vadd.xlane.f32.xlu0 %v3077
      %v3079 = vpop.xlane.xlu0 %3078
      %v3080 = vsel %vm3001, %v2953, 0.0
      %3081 = vadd.xlane.f32.xlu0 %v3080
      %v3082 = vpop.xlane.xlu0 %3081
      %v3083 = vsel %vm3001, %v2956, 0.0
      %3084 = vadd.xlane.f32.xlu0 %v3083
      %v3085 = vpop.xlane.xlu0 %3084
      %v3086 = vsel %vm3001, %v2959, 0.0
      %3087 = vadd.xlane.f32.xlu0 %v3086
      %v3088 = vpop.xlane.xlu0 %3087
      %v3089 = vsel %vm3001, %v2962, 0.0
      %3090 = vadd.xlane.f32.xlu0 %v3089
      %v3091 = vpop.xlane.xlu0 %3090
      %v3092 = vsel %vm3001, %v2965, 0.0
      %3093 = vadd.xlane.f32.xlu0 %v3092
      %v3094 = vpop.xlane.xlu0 %3093
      %v3095 = vsel %vm3001, %v2968, 0.0
      %3096 = vadd.xlane.f32.xlu0 %v3095
      %v3097 = vpop.xlane.xlu0 %3096
      %v3098 = vmul.f32 %v302, %v302
      %v3099 = vmul.f32 %v303, %v303
      %v3100 = vmul.f32 %v304, %v304
      %v3101 = vmul.f32 %v305, %v305
      %v3102 = vmul.f32 %v306, %v306
      %v3103 = vmul.f32 %v307, %v307
      %v3104 = vmul.f32 %v308, %v308
      %v3105 = vmul.f32 %v309, %v309
      %v3106 = vmul.f32 %v310, %v310
      %v3107 = vmul.f32 %v311, %v311
      %v3108 = vmul.f32 %v312, %v312
      %v3109 = vmul.f32 %v313, %v313
      %v3110 = vmul.f32 %v314, %v314
      %v3111 = vmul.f32 %v315, %v315
      %v3112 = vmul.f32 %v316, %v316
      %v3113 = vmul.f32 %v317, %v317
      %v3114 = vmul.f32 %v318, %v318
      %v3115 = vmul.f32 %v319, %v319
      %v3116 = vmul.f32 %v320, %v320
      %v3117 = vmul.f32 %v321, %v321
      %v3118 = vmul.f32 %v322, %v322
      %v3119 = vmul.f32 %v323, %v323
      %v3120 = vmul.f32 %v324, %v324
      %v3121 = vmul.f32 %v325, %v325
      %v3122 = vmul.f32 %v326, %v326
      %v3123 = vmul.f32 %v327, %v327
      %v3124 = vmul.f32 %v328, %v328
      %v3125 = vmul.f32 %v329, %v329
      %v3126 = vmul.f32 %v330, %v330
      %v3127 = vmul.f32 %v331, %v331
      %v3128 = vmul.f32 %v332, %v332
      %v3129 = vmul.f32 %v333, %v333
      %v3130 = vmul.f32 %v334, %v334
      %v3131 = vmul.f32 %v335, %v335
      %v3132 = vmul.f32 %v336, %v336
      %v3133 = vmul.f32 %v337, %v337
      %v3134 = vmul.f32 %v338, %v338
      %v3135 = vmul.f32 %v339, %v339
      %v3136 = vmul.f32 %v340, %v340
      %v3137 = vmul.f32 %v341, %v341
      %v3138 = vmul.f32 %v342, %v342
      %v3139 = vmul.f32 %v343, %v343
      %v3140 = vmul.f32 %v344, %v344
      %v3141 = vmul.f32 %v345, %v345
      %v3142 = vmul.f32 %v346, %v346
      %v3143 = vmul.f32 %v347, %v347
      %v3144 = vmul.f32 %v348, %v348
      %v3145 = vmul.f32 %v349, %v349
      %v3146 = vmul.f32 %v350, %v350
      %v3147 = vmul.f32 %v351, %v351
      %v3148 = vmul.f32 %v352, %v352
      %v3149 = vmul.f32 %v353, %v353
      %v3150 = vmul.f32 %v354, %v354
      %v3151 = vmul.f32 %v355, %v355
      %v3152 = vmul.f32 %v356, %v356
      %v3153 = vmul.f32 %v357, %v357
      %v3154 = vmul.f32 %v358, %v358
      %v3155 = vmul.f32 %v359, %v359
      %v3156 = vmul.f32 %v360, %v360
      %v3157 = vmul.f32 %v361, %v361
      %v3158 = vmul.f32 %v362, %v362
      %v3159 = vmul.f32 %v363, %v363
      %v3160 = vmul.f32 %v364, %v364
      %v3161 = vmul.f32 %v365, %v365
      %v3162 = vsel %vm366, %v3098, 0.0
      %3163 = vadd.xlane.f32.xlu0 %v3162
      %v3164 = vpop.xlane.xlu0 %3163
      %v3165 = vsel %vm366, %v3099, 0.0
      %3166 = vadd.xlane.f32.xlu0 %v3165
      %v3167 = vpop.xlane.xlu0 %3166
      %v3168 = vsel %vm366, %v3100, 0.0
      %3169 = vadd.xlane.f32.xlu0 %v3168
      %v3170 = vpop.xlane.xlu0 %3169
      %v3171 = vsel %vm366, %v3101, 0.0
      %3172 = vadd.xlane.f32.xlu0 %v3171
      %v3173 = vpop.xlane.xlu0 %3172
      %v3174 = vsel %vm366, %v3102, 0.0
      %3175 = vadd.xlane.f32.xlu0 %v3174
      %v3176 = vpop.xlane.xlu0 %3175
      %v3177 = vsel %vm366, %v3103, 0.0
      %3178 = vadd.xlane.f32.xlu0 %v3177
      %v3179 = vpop.xlane.xlu0 %3178
      %v3180 = vsel %vm366, %v3104, 0.0
      %3181 = vadd.xlane.f32.xlu0 %v3180
      %v3182 = vpop.xlane.xlu0 %3181
      %v3183 = vsel %vm366, %v3105, 0.0
      %3184 = vadd.xlane.f32.xlu0 %v3183
      %v3185 = vpop.xlane.xlu0 %3184
      %v3186 = vsel %vm366, %v3106, 0.0
      %3187 = vadd.xlane.f32.xlu0 %v3186
      %v3188 = vpop.xlane.xlu0 %3187
      %v3189 = vsel %vm366, %v3107, 0.0
      %3190 = vadd.xlane.f32.xlu0 %v3189
      %v3191 = vpop.xlane.xlu0 %3190
      %v3192 = vsel %vm366, %v3108, 0.0
      %3193 = vadd.xlane.f32.xlu0 %v3192
      %v3194 = vpop.xlane.xlu0 %3193
      %v3195 = vsel %vm366, %v3109, 0.0
      %3196 = vadd.xlane.f32.xlu0 %v3195
      %v3197 = vpop.xlane.xlu0 %3196
      %v3198 = vsel %vm366, %v3110, 0.0
      %3199 = vadd.xlane.f32.xlu0 %v3198
      %v3200 = vpop.xlane.xlu0 %3199
      %v3201 = vsel %vm366, %v3111, 0.0
      %3202 = vadd.xlane.f32.xlu0 %v3201
      %v3203 = vpop.xlane.xlu0 %3202
      %v3204 = vsel %vm366, %v3112, 0.0
      %3205 = vadd.xlane.f32.xlu0 %v3204
      %v3206 = vpop.xlane.xlu0 %3205
      %v3207 = vsel %vm366, %v3113, 0.0
      %3208 = vadd.xlane.f32.xlu0 %v3207
      %v3209 = vpop.xlane.xlu0 %3208
      %v3210 = vsel %vm366, %v3114, 0.0
      %3211 = vadd.xlane.f32.xlu0 %v3210
      %v3212 = vpop.xlane.xlu0 %3211
      %v3213 = vsel %vm366, %v3115, 0.0
      %3214 = vadd.xlane.f32.xlu0 %v3213
      %v3215 = vpop.xlane.xlu0 %3214
      %v3216 = vsel %vm366, %v3116, 0.0
      %3217 = vadd.xlane.f32.xlu0 %v3216
      %v3218 = vpop.xlane.xlu0 %3217
      %v3219 = vsel %vm366, %v3117, 0.0
      %3220 = vadd.xlane.f32.xlu0 %v3219
      %v3221 = vpop.xlane.xlu0 %3220
      %v3222 = vsel %vm366, %v3118, 0.0
      %3223 = vadd.xlane.f32.xlu0 %v3222
      %v3224 = vpop.xlane.xlu0 %3223
      %v3225 = vsel %vm366, %v3119, 0.0
      %3226 = vadd.xlane.f32.xlu0 %v3225
      %v3227 = vpop.xlane.xlu0 %3226
      %v3228 = vsel %vm366, %v3120, 0.0
      %3229 = vadd.xlane.f32.xlu0 %v3228
      %v3230 = vpop.xlane.xlu0 %3229
      %v3231 = vsel %vm366, %v3121, 0.0
      %3232 = vadd.xlane.f32.xlu0 %v3231
      %v3233 = vpop.xlane.xlu0 %3232
      %v3234 = vsel %vm366, %v3122, 0.0
      %3235 = vadd.xlane.f32.xlu0 %v3234
      %v3236 = vpop.xlane.xlu0 %3235
      %v3237 = vsel %vm366, %v3123, 0.0
      %3238 = vadd.xlane.f32.xlu0 %v3237
      %v3239 = vpop.xlane.xlu0 %3238
      %v3240 = vsel %vm366, %v3124, 0.0
      %3241 = vadd.xlane.f32.xlu0 %v3240
      %v3242 = vpop.xlane.xlu0 %3241
      %v3243 = vsel %vm366, %v3125, 0.0
      %3244 = vadd.xlane.f32.xlu0 %v3243
      %v3245 = vpop.xlane.xlu0 %3244
      %v3246 = vsel %vm366, %v3126, 0.0
      %3247 = vadd.xlane.f32.xlu0 %v3246
      %v3248 = vpop.xlane.xlu0 %3247
      %v3249 = vsel %vm366, %v3127, 0.0
      %3250 = vadd.xlane.f32.xlu0 %v3249
      %v3251 = vpop.xlane.xlu0 %3250
      %v3252 = vsel %vm366, %v3128, 0.0
      %3253 = vadd.xlane.f32.xlu0 %v3252
      %v3254 = vpop.xlane.xlu0 %3253
      %v3255 = vsel %vm366, %v3129, 0.0
      %3256 = vadd.xlane.f32.xlu0 %v3255
      %v3257 = vpop.xlane.xlu0 %3256
      %v3258 = vsel %vm366, %v3130, 0.0
      %3259 = vadd.xlane.f32.xlu0 %v3258
      %v3260 = vpop.xlane.xlu0 %3259
      %v3261 = vsel %vm366, %v3131, 0.0
      %3262 = vadd.xlane.f32.xlu0 %v3261
      %v3263 = vpop.xlane.xlu0 %3262
      %v3264 = vsel %vm366, %v3132, 0.0
      %3265 = vadd.xlane.f32.xlu0 %v3264
      %v3266 = vpop.xlane.xlu0 %3265
      %v3267 = vsel %vm366, %v3133, 0.0
      %3268 = vadd.xlane.f32.xlu0 %v3267
      %v3269 = vpop.xlane.xlu0 %3268
      %v3270 = vsel %vm366, %v3134, 0.0
      %3271 = vadd.xlane.f32.xlu0 %v3270
      %v3272 = vpop.xlane.xlu0 %3271
      %v3273 = vsel %vm366, %v3135, 0.0
      %3274 = vadd.xlane.f32.xlu0 %v3273
      %v3275 = vpop.xlane.xlu0 %3274
      %v3276 = vsel %vm366, %v3136, 0.0
      %3277 = vadd.xlane.f32.xlu0 %v3276
      %v3278 = vpop.xlane.xlu0 %3277
      %v3279 = vsel %vm366, %v3137, 0.0
      %3280 = vadd.xlane.f32.xlu0 %v3279
      %v3281 = vpop.xlane.xlu0 %3280
      %v3282 = vsel %vm366, %v3138, 0.0
      %3283 = vadd.xlane.f32.xlu0 %v3282
      %v3284 = vpop.xlane.xlu0 %3283
      %v3285 = vsel %vm366, %v3139, 0.0
      %3286 = vadd.xlane.f32.xlu0 %v3285
      %v3287 = vpop.xlane.xlu0 %3286
      %v3288 = vsel %vm366, %v3140, 0.0
      %3289 = vadd.xlane.f32.xlu0 %v3288
      %v3290 = vpop.xlane.xlu0 %3289
      %v3291 = vsel %vm366, %v3141, 0.0
      %3292 = vadd.xlane.f32.xlu0 %v3291
      %v3293 = vpop.xlane.xlu0 %3292
      %v3294 = vsel %vm366, %v3142, 0.0
      %3295 = vadd.xlane.f32.xlu0 %v3294
      %v3296 = vpop.xlane.xlu0 %3295
      %v3297 = vsel %vm366, %v3143, 0.0
      %3298 = vadd.xlane.f32.xlu0 %v3297
      %v3299 = vpop.xlane.xlu0 %3298
      %v3300 = vsel %vm366, %v3144, 0.0
      %3301 = vadd.xlane.f32.xlu0 %v3300
      %v3302 = vpop.xlane.xlu0 %3301
      %v3303 = vsel %vm366, %v3145, 0.0
      %3304 = vadd.xlane.f32.xlu0 %v3303
      %v3305 = vpop.xlane.xlu0 %3304
      %v3306 = vsel %vm366, %v3146, 0.0
      %3307 = vadd.xlane.f32.xlu0 %v3306
      %v3308 = vpop.xlane.xlu0 %3307
      %v3309 = vsel %vm366, %v3147, 0.0
      %3310 = vadd.xlane.f32.xlu0 %v3309
      %v3311 = vpop.xlane.xlu0 %3310
      %v3312 = vsel %vm366, %v3148, 0.0
      %3313 = vadd.xlane.f32.xlu0 %v3312
      %v3314 = vpop.xlane.xlu0 %3313
      %v3315 = vsel %vm366, %v3149, 0.0
      %3316 = vadd.xlane.f32.xlu0 %v3315
      %v3317 = vpop.xlane.xlu0 %3316
      %v3318 = vsel %vm366, %v3150, 0.0
      %3319 = vadd.xlane.f32.xlu0 %v3318
      %v3320 = vpop.xlane.xlu0 %3319
      %v3321 = vsel %vm366, %v3151, 0.0
      %3322 = vadd.xlane.f32.xlu0 %v3321
      %v3323 = vpop.xlane.xlu0 %3322
      %v3324 = vsel %vm366, %v3152, 0.0
      %3325 = vadd.xlane.f32.xlu0 %v3324
      %v3326 = vpop.xlane.xlu0 %3325
      %v3327 = vsel %vm366, %v3153, 0.0
      %3328 = vadd.xlane.f32.xlu0 %v3327
      %v3329 = vpop.xlane.xlu0 %3328
      %v3330 = vsel %vm366, %v3154, 0.0
      %3331 = vadd.xlane.f32.xlu0 %v3330
      %v3332 = vpop.xlane.xlu0 %3331
      %v3333 = vsel %vm366, %v3155, 0.0
      %3334 = vadd.xlane.f32.xlu0 %v3333
      %v3335 = vpop.xlane.xlu0 %3334
      %v3336 = vsel %vm366, %v3156, 0.0
      %3337 = vadd.xlane.f32.xlu0 %v3336
      %v3338 = vpop.xlane.xlu0 %3337
      %v3339 = vsel %vm366, %v3157, 0.0
      %3340 = vadd.xlane.f32.xlu0 %v3339
      %v3341 = vpop.xlane.xlu0 %3340
      %v3342 = vsel %vm366, %v3158, 0.0
      %3343 = vadd.xlane.f32.xlu0 %v3342
      %v3344 = vpop.xlane.xlu0 %3343
      %v3345 = vsel %vm366, %v3159, 0.0
      %3346 = vadd.xlane.f32.xlu0 %v3345
      %v3347 = vpop.xlane.xlu0 %3346
      %v3348 = vsel %vm366, %v3160, 0.0
      %3349 = vadd.xlane.f32.xlu0 %v3348
      %v3350 = vpop.xlane.xlu0 %3349
      %v3351 = vsel %vm366, %v3161, 0.0
      %3352 = vadd.xlane.f32.xlu0 %v3351
      %v3353 = vpop.xlane.xlu0 %3352
      %v3354 = vmul.f32 %v1434, 2.0
      %v3355 = vmul.f32 %v1437, 2.0
      %v3356 = vmul.f32 %v1472, 2.0
      %v3357 = vmul.f32 %v1475, 2.0
      %v3358 = vmul.f32 %v1510, 2.0
      %v3359 = vmul.f32 %v1513, 2.0
      %v3360 = vmul.f32 %v1548, 2.0
      %v3361 = vmul.f32 %v1551, 2.0
      %v3362 = vmul.f32 %v1586, 2.0
      %v3363 = vmul.f32 %v1589, 2.0
      %v3364 = vmul.f32 %v1624, 2.0
      %v3365 = vmul.f32 %v1627, 2.0
      %v3366 = vmul.f32 %v1662, 2.0
      %v3367 = vmul.f32 %v1665, 2.0
      %v3368 = vmul.f32 %v1700, 2.0
      %v3369 = vmul.f32 %v1703, 2.0
      %v3370 = vmul.f32 %v1738, 2.0
      %v3371 = vmul.f32 %v1741, 2.0
      %v3372 = vmul.f32 %v1776, 2.0
      %v3373 = vmul.f32 %v1779, 2.0
      %v3374 = vmul.f32 %v1814, 2.0
      %v3375 = vmul.f32 %v1817, 2.0
      %v3376 = vmul.f32 %v1852, 2.0
      %v3377 = vmul.f32 %v1855, 2.0
      %v3378 = vmul.f32 %v1890, 2.0
      %v3379 = vmul.f32 %v1893, 2.0
      %v3380 = vmul.f32 %v1928, 2.0
      %v3381 = vmul.f32 %v1931, 2.0
      %v3382 = vmul.f32 %v1966, 2.0
      %v3383 = vmul.f32 %v1969, 2.0
      %v3384 = vmul.f32 %v2004, 2.0
      %v3385 = vmul.f32 %v2007, 2.0
      %v3386 = vmul.f32 %v2042, 2.0
      %v3387 = vmul.f32 %v2045, 2.0
      %v3388 = vmul.f32 %v2080, 2.0
      %v3389 = vmul.f32 %v2083, 2.0
      %v3390 = vmul.f32 %v2118, 2.0
      %v3391 = vmul.f32 %v2121, 2.0
      %v3392 = vmul.f32 %v2156, 2.0
      %v3393 = vmul.f32 %v2159, 2.0
      %v3394 = vmul.f32 %v2194, 2.0
      %v3395 = vmul.f32 %v2197, 2.0
      %v3396 = vmul.f32 %v2232, 2.0
      %v3397 = vmul.f32 %v2235, 2.0
      %v3398 = vmul.f32 %v2270, 2.0
      %v3399 = vmul.f32 %v2273, 2.0
      %v3400 = vmul.f32 %v2308, 2.0
      %v3401 = vmul.f32 %v2311, 2.0
      %v3402 = vmul.f32 %v2346, 2.0
      %v3403 = vmul.f32 %v2349, 2.0
      %v3404 = vmul.f32 %v2384, 2.0
      %v3405 = vmul.f32 %v2387, 2.0
      %v3406 = vmul.f32 %v2422, 2.0
      %v3407 = vmul.f32 %v2425, 2.0
      %v3408 = vmul.f32 %v2460, 2.0
      %v3409 = vmul.f32 %v2463, 2.0
      %v3410 = vmul.f32 %v2498, 2.0
      %v3411 = vmul.f32 %v2501, 2.0
      %v3412 = vmul.f32 %v2536, 2.0
      %v3413 = vmul.f32 %v2539, 2.0
      %v3414 = vmul.f32 %v2574, 2.0
      %v3415 = vmul.f32 %v2577, 2.0
      %v3416 = vmul.f32 %v2612, 2.0
      %v3417 = vmul.f32 %v2615, 2.0
      %v3418 = vsub.f32 %v3354, %v3164
      %v3419 = vsub.f32 %v3355, %v3167
      %v3420 = vsub.f32 %v3356, %v3170
      %v3421 = vsub.f32 %v3357, %v3173
      %v3422 = vsub.f32 %v3358, %v3176
      %v3423 = vsub.f32 %v3359, %v3179
      %v3424 = vsub.f32 %v3360, %v3182
      %v3425 = vsub.f32 %v3361, %v3185
      %v3426 = vsub.f32 %v3362, %v3188
      %v3427 = vsub.f32 %v3363, %v3191
      %v3428 = vsub.f32 %v3364, %v3194
      %v3429 = vsub.f32 %v3365, %v3197
      %v3430 = vsub.f32 %v3366, %v3200
      %v3431 = vsub.f32 %v3367, %v3203
      %v3432 = vsub.f32 %v3368, %v3206
      %v3433 = vsub.f32 %v3369, %v3209
      %v3434 = vsub.f32 %v3370, %v3212
      %v3435 = vsub.f32 %v3371, %v3215
      %v3436 = vsub.f32 %v3372, %v3218
      %v3437 = vsub.f32 %v3373, %v3221
      %v3438 = vsub.f32 %v3374, %v3224
      %v3439 = vsub.f32 %v3375, %v3227
      %v3440 = vsub.f32 %v3376, %v3230
      %v3441 = vsub.f32 %v3377, %v3233
      %v3442 = vsub.f32 %v3378, %v3236
      %v3443 = vsub.f32 %v3379, %v3239
      %v3444 = vsub.f32 %v3380, %v3242
      %v3445 = vsub.f32 %v3381, %v3245
      %v3446 = vsub.f32 %v3382, %v3248
      %v3447 = vsub.f32 %v3383, %v3251
      %v3448 = vsub.f32 %v3384, %v3254
      %v3449 = vsub.f32 %v3385, %v3257
      %v3450 = vsub.f32 %v3386, %v3260
      %v3451 = vsub.f32 %v3387, %v3263
      %v3452 = vsub.f32 %v3388, %v3266
      %v3453 = vsub.f32 %v3389, %v3269
      %v3454 = vsub.f32 %v3390, %v3272
      %v3455 = vsub.f32 %v3391, %v3275
      %v3456 = vsub.f32 %v3392, %v3278
      %v3457 = vsub.f32 %v3393, %v3281
      %v3458 = vsub.f32 %v3394, %v3284
      %v3459 = vsub.f32 %v3395, %v3287
      %v3460 = vsub.f32 %v3396, %v3290
      %v3461 = vsub.f32 %v3397, %v3293
      %v3462 = vsub.f32 %v3398, %v3296
      %v3463 = vsub.f32 %v3399, %v3299
      %v3464 = vsub.f32 %v3400, %v3302
      %v3465 = vsub.f32 %v3401, %v3305
      %v3466 = vsub.f32 %v3402, %v3308
      %v3467 = vsub.f32 %v3403, %v3311
      %v3468 = vsub.f32 %v3404, %v3314
      %v3469 = vsub.f32 %v3405, %v3317
      %v3470 = vsub.f32 %v3406, %v3320
      %v3471 = vsub.f32 %v3407, %v3323
      %v3472 = vsub.f32 %v3408, %v3326
      %v3473 = vsub.f32 %v3409, %v3329
      %v3474 = vsub.f32 %v3410, %v3332
      %v3475 = vsub.f32 %v3411, %v3335
      %v3476 = vsub.f32 %v3412, %v3338
      %v3477 = vsub.f32 %v3413, %v3341
      %v3478 = vsub.f32 %v3414, %v3344
      %v3479 = vsub.f32 %v3415, %v3347
      %v3480 = vsub.f32 %v3416, %v3350
      %v3481 = vsub.f32 %v3417, %v3353
      %v3514 = vlaneseq
      %v3515 = vand.u32 %v3514, 127
      %v3516 = vperm.slane %v3004, %v3515
      %v3517 = vperm.slane %v3007, %v3515
      %v3518 = vperm.slane %v3010, %v3515
      %v3519 = vperm.slane %v3013, %v3515
      %v3520 = vperm.slane %v3016, %v3515
      %v3521 = vperm.slane %v3019, %v3515
      %v3522 = vperm.slane %v3022, %v3515
      %v3523 = vperm.slane %v3025, %v3515
      %v3524 = vperm.slane %v3028, %v3515
      %v3525 = vperm.slane %v3031, %v3515
      %v3526 = vperm.slane %v3034, %v3515
      %v3527 = vperm.slane %v3037, %v3515
      %v3528 = vperm.slane %v3040, %v3515
      %v3529 = vperm.slane %v3043, %v3515
      %v3530 = vperm.slane %v3046, %v3515
      %v3531 = vperm.slane %v3049, %v3515
      %v3532 = vperm.slane %v3052, %v3515
      %v3533 = vperm.slane %v3055, %v3515
      %v3534 = vperm.slane %v3058, %v3515
      %v3535 = vperm.slane %v3061, %v3515
      %v3536 = vperm.slane %v3064, %v3515
      %v3537 = vperm.slane %v3067, %v3515
      %v3538 = vperm.slane %v3070, %v3515
      %v3539 = vperm.slane %v3073, %v3515
      %v3540 = vperm.slane %v3076, %v3515
      %v3541 = vperm.slane %v3079, %v3515
      %v3542 = vperm.slane %v3082, %v3515
      %v3543 = vperm.slane %v3085, %v3515
      %v3544 = vperm.slane %v3088, %v3515
      %v3545 = vperm.slane %v3091, %v3515
      %v3546 = vperm.slane %v3094, %v3515
      %v3547 = vperm.slane %v3097, %v3515
      %v3548 = vsel %vm1404, %v3516, %v3516
      %v3549 = vsel %vm1406, %v3516, %v3548
      %vm3550 = vcmask 1044484
      %v3551 = vsel %vm3550, %v3516, %v3549
      %vm3552 = vcmask 1045509
      %v3553 = vsel %vm3552, %v3516, %v3551
      %vm3554 = vcmask 1046534
      %v3555 = vsel %vm3554, %v3516, %v3553
      %vm3556 = vcmask 1047559
      %v3557 = vsel %vm3556, %v3516, %v3555
      %v3558 = vsel %vm1404, %v3517, %v3517
      %v3559 = vsel %vm1406, %v3517, %v3558
      %v3560 = vsel %vm3550, %v3517, %v3559
      %v3561 = vsel %vm3552, %v3517, %v3560
      %v3562 = vsel %vm3554, %v3517, %v3561
      %v3563 = vsel %vm3556, %v3517, %v3562
      %v3564 = vsel %vm1404, %v3518, %v3518
      %v3565 = vsel %vm1406, %v3518, %v3564
      %v3566 = vsel %vm3550, %v3518, %v3565
      %v3567 = vsel %vm3552, %v3518, %v3566
      %v3568 = vsel %vm3554, %v3518, %v3567
      %v3569 = vsel %vm3556, %v3518, %v3568
      %v3570 = vsel %vm1404, %v3519, %v3519
      %v3571 = vsel %vm1406, %v3519, %v3570
      %v3572 = vsel %vm3550, %v3519, %v3571
      %v3573 = vsel %vm3552, %v3519, %v3572
      %v3574 = vsel %vm3554, %v3519, %v3573
      %v3575 = vsel %vm3556, %v3519, %v3574
      %v3576 = vsel %vm1404, %v3520, %v3520
      %v3577 = vsel %vm1406, %v3520, %v3576
      %v3578 = vsel %vm3550, %v3520, %v3577
      %v3579 = vsel %vm3552, %v3520, %v3578
      %v3580 = vsel %vm3554, %v3520, %v3579
      %v3581 = vsel %vm3556, %v3520, %v3580
      %v3582 = vsel %vm1404, %v3521, %v3521
      %v3583 = vsel %vm1406, %v3521, %v3582
      %v3584 = vsel %vm3550, %v3521, %v3583
      %v3585 = vsel %vm3552, %v3521, %v3584
      %v3586 = vsel %vm3554, %v3521, %v3585
      %v3587 = vsel %vm3556, %v3521, %v3586
      %v3588 = vsel %vm1404, %v3522, %v3522
      %v3589 = vsel %vm1406, %v3522, %v3588
      %v3590 = vsel %vm3550, %v3522, %v3589
      %v3591 = vsel %vm3552, %v3522, %v3590
      %v3592 = vsel %vm3554, %v3522, %v3591
      %v3593 = vsel %vm3556, %v3522, %v3592
      %v3594 = vsel %vm1404, %v3523, %v3523
      %v3595 = vsel %vm1406, %v3523, %v3594
      %v3596 = vsel %vm3550, %v3523, %v3595
      %v3597 = vsel %vm3552, %v3523, %v3596
      %v3598 = vsel %vm3554, %v3523, %v3597
      %v3599 = vsel %vm3556, %v3523, %v3598
      %v3600 = vsel %vm1404, %v3524, %v3524
      %v3601 = vsel %vm1406, %v3524, %v3600
      %v3602 = vsel %vm3550, %v3524, %v3601
      %v3603 = vsel %vm3552, %v3524, %v3602
      %v3604 = vsel %vm3554, %v3524, %v3603
      %v3605 = vsel %vm3556, %v3524, %v3604
      %v3606 = vsel %vm1404, %v3525, %v3525
      %v3607 = vsel %vm1406, %v3525, %v3606
      %v3608 = vsel %vm3550, %v3525, %v3607
      %v3609 = vsel %vm3552, %v3525, %v3608
      %v3610 = vsel %vm3554, %v3525, %v3609
      %v3611 = vsel %vm3556, %v3525, %v3610
      %v3612 = vsel %vm1404, %v3526, %v3526
      %v3613 = vsel %vm1406, %v3526, %v3612
      %v3614 = vsel %vm3550, %v3526, %v3613
      %v3615 = vsel %vm3552, %v3526, %v3614
      %v3616 = vsel %vm3554, %v3526, %v3615
      %v3617 = vsel %vm3556, %v3526, %v3616
      %v3618 = vsel %vm1404, %v3527, %v3527
      %v3619 = vsel %vm1406, %v3527, %v3618
      %v3620 = vsel %vm3550, %v3527, %v3619
      %v3621 = vsel %vm3552, %v3527, %v3620
      %v3622 = vsel %vm3554, %v3527, %v3621
      %v3623 = vsel %vm3556, %v3527, %v3622
      %v3624 = vsel %vm1404, %v3528, %v3528
      %v3625 = vsel %vm1406, %v3528, %v3624
      %v3626 = vsel %vm3550, %v3528, %v3625
      %v3627 = vsel %vm3552, %v3528, %v3626
      %v3628 = vsel %vm3554, %v3528, %v3627
      %v3629 = vsel %vm3556, %v3528, %v3628
      %v3630 = vsel %vm1404, %v3529, %v3529
      %v3631 = vsel %vm1406, %v3529, %v3630
      %v3632 = vsel %vm3550, %v3529, %v3631
      %v3633 = vsel %vm3552, %v3529, %v3632
      %v3634 = vsel %vm3554, %v3529, %v3633
      %v3635 = vsel %vm3556, %v3529, %v3634
      %v3636 = vsel %vm1404, %v3530, %v3530
      %v3637 = vsel %vm1406, %v3530, %v3636
      %v3638 = vsel %vm3550, %v3530, %v3637
      %v3639 = vsel %vm3552, %v3530, %v3638
      %v3640 = vsel %vm3554, %v3530, %v3639
      %v3641 = vsel %vm3556, %v3530, %v3640
      %v3642 = vsel %vm1404, %v3531, %v3531
      %v3643 = vsel %vm1406, %v3531, %v3642
      %v3644 = vsel %vm3550, %v3531, %v3643
      %v3645 = vsel %vm3552, %v3531, %v3644
      %v3646 = vsel %vm3554, %v3531, %v3645
      %v3647 = vsel %vm3556, %v3531, %v3646
      %v3648 = vsel %vm1404, %v3532, %v3532
      %v3649 = vsel %vm1406, %v3532, %v3648
      %v3650 = vsel %vm3550, %v3532, %v3649
      %v3651 = vsel %vm3552, %v3532, %v3650
      %v3652 = vsel %vm3554, %v3532, %v3651
      %v3653 = vsel %vm3556, %v3532, %v3652
      %v3654 = vsel %vm1404, %v3533, %v3533
      %v3655 = vsel %vm1406, %v3533, %v3654
      %v3656 = vsel %vm3550, %v3533, %v3655
      %v3657 = vsel %vm3552, %v3533, %v3656
      %v3658 = vsel %vm3554, %v3533, %v3657
      %v3659 = vsel %vm3556, %v3533, %v3658
      %v3660 = vsel %vm1404, %v3534, %v3534
      %v3661 = vsel %vm1406, %v3534, %v3660
      %v3662 = vsel %vm3550, %v3534, %v3661
      %v3663 = vsel %vm3552, %v3534, %v3662
      %v3664 = vsel %vm3554, %v3534, %v3663
      %v3665 = vsel %vm3556, %v3534, %v3664
      %v3666 = vsel %vm1404, %v3535, %v3535
      %v3667 = vsel %vm1406, %v3535, %v3666
      %v3668 = vsel %vm3550, %v3535, %v3667
      %v3669 = vsel %vm3552, %v3535, %v3668
      %v3670 = vsel %vm3554, %v3535, %v3669
      %v3671 = vsel %vm3556, %v3535, %v3670
      %v3672 = vsel %vm1404, %v3536, %v3536
      %v3673 = vsel %vm1406, %v3536, %v3672
      %v3674 = vsel %vm3550, %v3536, %v3673
      %v3675 = vsel %vm3552, %v3536, %v3674
      %v3676 = vsel %vm3554, %v3536, %v3675
      %v3677 = vsel %vm3556, %v3536, %v3676
      %v3678 = vsel %vm1404, %v3537, %v3537
      %v3679 = vsel %vm1406, %v3537, %v3678
      %v3680 = vsel %vm3550, %v3537, %v3679
      %v3681 = vsel %vm3552, %v3537, %v3680
      %v3682 = vsel %vm3554, %v3537, %v3681
      %v3683 = vsel %vm3556, %v3537, %v3682
      %v3684 = vsel %vm1404, %v3538, %v3538
      %v3685 = vsel %vm1406, %v3538, %v3684
      %v3686 = vsel %vm3550, %v3538, %v3685
      %v3687 = vsel %vm3552, %v3538, %v3686
      %v3688 = vsel %vm3554, %v3538, %v3687
      %v3689 = vsel %vm3556, %v3538, %v3688
      %v3690 = vsel %vm1404, %v3539, %v3539
      %v3691 = vsel %vm1406, %v3539, %v3690
      %v3692 = vsel %vm3550, %v3539, %v3691
      %v3693 = vsel %vm3552, %v3539, %v3692
      %v3694 = vsel %vm3554, %v3539, %v3693
      %v3695 = vsel %vm3556, %v3539, %v3694
      %v3696 = vsel %vm1404, %v3540, %v3540
      %v3697 = vsel %vm1406, %v3540, %v3696
      %v3698 = vsel %vm3550, %v3540, %v3697
      %v3699 = vsel %vm3552, %v3540, %v3698
      %v3700 = vsel %vm3554, %v3540, %v3699
      %v3701 = vsel %vm3556, %v3540, %v3700
      %v3702 = vsel %vm1404, %v3541, %v3541
      %v3703 = vsel %vm1406, %v3541, %v3702
      %v3704 = vsel %vm3550, %v3541, %v3703
      %v3705 = vsel %vm3552, %v3541, %v3704
      %v3706 = vsel %vm3554, %v3541, %v3705
      %v3707 = vsel %vm3556, %v3541, %v3706
      %v3708 = vsel %vm1404, %v3542, %v3542
      %v3709 = vsel %vm1406, %v3542, %v3708
      %v3710 = vsel %vm3550, %v3542, %v3709
      %v3711 = vsel %vm3552, %v3542, %v3710
      %v3712 = vsel %vm3554, %v3542, %v3711
      %v3713 = vsel %vm3556, %v3542, %v3712
      %v3714 = vsel %vm1404, %v3543, %v3543
      %v3715 = vsel %vm1406, %v3543, %v3714
      %v3716 = vsel %vm3550, %v3543, %v3715
      %v3717 = vsel %vm3552, %v3543, %v3716
      %v3718 = vsel %vm3554, %v3543, %v3717
      %v3719 = vsel %vm3556, %v3543, %v3718
      %v3720 = vsel %vm1404, %v3544, %v3544
      %v3721 = vsel %vm1406, %v3544, %v3720
      %v3722 = vsel %vm3550, %v3544, %v3721
      %v3723 = vsel %vm3552, %v3544, %v3722
      %v3724 = vsel %vm3554, %v3544, %v3723
      %v3725 = vsel %vm3556, %v3544, %v3724
      %v3726 = vsel %vm1404, %v3545, %v3545
      %v3727 = vsel %vm1406, %v3545, %v3726
      %v3728 = vsel %vm3550, %v3545, %v3727
      %v3729 = vsel %vm3552, %v3545, %v3728
      %v3730 = vsel %vm3554, %v3545, %v3729
      %v3731 = vsel %vm3556, %v3545, %v3730
      %v3732 = vsel %vm1404, %v3546, %v3546
      %v3733 = vsel %vm1406, %v3546, %v3732
      %v3734 = vsel %vm3550, %v3546, %v3733
      %v3735 = vsel %vm3552, %v3546, %v3734
      %v3736 = vsel %vm3554, %v3546, %v3735
      %v3737 = vsel %vm3556, %v3546, %v3736
      %v3738 = vsel %vm1404, %v3547, %v3547
      %v3739 = vsel %vm1406, %v3547, %v3738
      %v3740 = vsel %vm3550, %v3547, %v3739
      %v3741 = vsel %vm3552, %v3547, %v3740
      %v3742 = vsel %vm3554, %v3547, %v3741
      %v3743 = vsel %vm3556, %v3547, %v3742
      %v3776 = vsub.f32 %v3418, %v3557
      %v3777 = vsub.f32 %v3419, %v3557
      %v3778 = vsub.f32 %v3420, %v3563
      %v3779 = vsub.f32 %v3421, %v3563
      %v3780 = vsub.f32 %v3422, %v3569
      %v3781 = vsub.f32 %v3423, %v3569
      %v3782 = vsub.f32 %v3424, %v3575
      %v3783 = vsub.f32 %v3425, %v3575
      %v3784 = vsub.f32 %v3426, %v3581
      %v3785 = vsub.f32 %v3427, %v3581
      %v3786 = vsub.f32 %v3428, %v3587
      %v3787 = vsub.f32 %v3429, %v3587
      %v3788 = vsub.f32 %v3430, %v3593
      %v3789 = vsub.f32 %v3431, %v3593
      %v3790 = vsub.f32 %v3432, %v3599
      %v3791 = vsub.f32 %v3433, %v3599
      %v3792 = vsub.f32 %v3434, %v3605
      %v3793 = vsub.f32 %v3435, %v3605
      %v3794 = vsub.f32 %v3436, %v3611
      %v3795 = vsub.f32 %v3437, %v3611
      %v3796 = vsub.f32 %v3438, %v3617
      %v3797 = vsub.f32 %v3439, %v3617
      %v3798 = vsub.f32 %v3440, %v3623
      %v3799 = vsub.f32 %v3441, %v3623
      %v3800 = vsub.f32 %v3442, %v3629
      %v3801 = vsub.f32 %v3443, %v3629
      %v3802 = vsub.f32 %v3444, %v3635
      %v3803 = vsub.f32 %v3445, %v3635
      %v3804 = vsub.f32 %v3446, %v3641
      %v3805 = vsub.f32 %v3447, %v3641
      %v3806 = vsub.f32 %v3448, %v3647
      %v3807 = vsub.f32 %v3449, %v3647
      %v3808 = vsub.f32 %v3450, %v3653
      %v3809 = vsub.f32 %v3451, %v3653
      %v3810 = vsub.f32 %v3452, %v3659
      %v3811 = vsub.f32 %v3453, %v3659
      %v3812 = vsub.f32 %v3454, %v3665
      %v3813 = vsub.f32 %v3455, %v3665
      %v3814 = vsub.f32 %v3456, %v3671
      %v3815 = vsub.f32 %v3457, %v3671
      %v3816 = vsub.f32 %v3458, %v3677
      %v3817 = vsub.f32 %v3459, %v3677
      %v3818 = vsub.f32 %v3460, %v3683
      %v3819 = vsub.f32 %v3461, %v3683
      %v3820 = vsub.f32 %v3462, %v3689
      %v3821 = vsub.f32 %v3463, %v3689
      %v3822 = vsub.f32 %v3464, %v3695
      %v3823 = vsub.f32 %v3465, %v3695
      %v3824 = vsub.f32 %v3466, %v3701
      %v3825 = vsub.f32 %v3467, %v3701
      %v3826 = vsub.f32 %v3468, %v3707
      %v3827 = vsub.f32 %v3469, %v3707
      %v3828 = vsub.f32 %v3470, %v3713
      %v3829 = vsub.f32 %v3471, %v3713
      %v3830 = vsub.f32 %v3472, %v3719
      %v3831 = vsub.f32 %v3473, %v3719
      %v3832 = vsub.f32 %v3474, %v3725
      %v3833 = vsub.f32 %v3475, %v3725
      %v3834 = vsub.f32 %v3476, %v3731
      %v3835 = vsub.f32 %v3477, %v3731
      %v3836 = vsub.f32 %v3478, %v3737
      %v3837 = vsub.f32 %v3479, %v3737
      %v3838 = vsub.f32 %v3480, %v3743
      %v3839 = vsub.f32 %v3481, %v3743
      %vm3840 = vcmask 31744
      %3841 = vst.msk [vmem:[%s173] sm:$0xff] %vm3840, %v3776
      %3842 = vst.msk [vmem:[%s173 + $0x8] sm:$0xff] %vm3840, %v3777
      %3845 = vrot.lane.b32.xlu0 %v3778, 4
      %v3846 = vpop.permute.xlu0 %3845
      %3847 = vrot.lane.b32.xlu0 %v3779, 4
      %v3848 = vpop.permute.xlu0 %3847
      %vm3851 = vcmask 64544
      %3852 = vst.msk [vmem:[%s173] sm:$0xff] %vm3851, %v3846
      %3853 = vst.msk [vmem:[%s173 + $0x8] sm:$0xff] %vm3851, %v3848
      %3856 = vrot.lane.b32.xlu0 %v3780, 8
      %v3857 = vpop.permute.xlu0 %3856
      %3858 = vrot.lane.b32.xlu0 %v3781, 8
      %v3859 = vpop.permute.xlu0 %3858
      %vm3862 = vcmask 97344
      %3863 = vst.msk [vmem:[%s173] sm:$0xff] %vm3862, %v3857
      %3864 = vst.msk [vmem:[%s173 + $0x8] sm:$0xff] %vm3862, %v3859
      %3867 = vrot.lane.b32.xlu0 %v3782, 12
      %v3868 = vpop.permute.xlu0 %3867
      %3869 = vrot.lane.b32.xlu0 %v3783, 12
      %v3870 = vpop.permute.xlu0 %3869
      %vm3873 = vcmask 130144
      %3874 = vst.msk [vmem:[%s173] sm:$0xff] %vm3873, %v3868
      %3875 = vst.msk [vmem:[%s173 + $0x8] sm:$0xff] %vm3873, %v3870
      %3878 = vrot.lane.b32.xlu0 %v3784, 16
      %v3879 = vpop.permute.xlu0 %3878
      %3880 = vrot.lane.b32.xlu0 %v3785, 16
      %v3881 = vpop.permute.xlu0 %3880
      %vm3884 = vcmask 162944
      %3885 = vst.msk [vmem:[%s173] sm:$0xff] %vm3884, %v3879
      %3886 = vst.msk [vmem:[%s173 + $0x8] sm:$0xff] %vm3884, %v3881
      %3889 = vrot.lane.b32.xlu0 %v3786, 20
      %v3890 = vpop.permute.xlu0 %3889
      %3891 = vrot.lane.b32.xlu0 %v3787, 20
      %v3892 = vpop.permute.xlu0 %3891
      %vm3895 = vcmask 195744
      %3896 = vst.msk [vmem:[%s173] sm:$0xff] %vm3895, %v3890
      %3897 = vst.msk [vmem:[%s173 + $0x8] sm:$0xff] %vm3895, %v3892
      %3900 = vrot.lane.b32.xlu0 %v3788, 24
      %v3901 = vpop.permute.xlu0 %3900
      %3902 = vrot.lane.b32.xlu0 %v3789, 24
      %v3903 = vpop.permute.xlu0 %3902
      %vm3906 = vcmask 228544
      %3907 = vst.msk [vmem:[%s173] sm:$0xff] %vm3906, %v3901
      %3908 = vst.msk [vmem:[%s173 + $0x8] sm:$0xff] %vm3906, %v3903
      %3911 = vrot.lane.b32.xlu0 %v3790, 28
      %v3912 = vpop.permute.xlu0 %3911
      %3913 = vrot.lane.b32.xlu0 %v3791, 28
      %v3914 = vpop.permute.xlu0 %3913
      %vm3917 = vcmask 261344
      %3918 = vst.msk [vmem:[%s173] sm:$0xff] %vm3917, %v3912
      %3919 = vst.msk [vmem:[%s173 + $0x8] sm:$0xff] %vm3917, %v3914
      %3922 = vrot.lane.b32.xlu0 %v3792, 32
      %v3923 = vpop.permute.xlu0 %3922
      %3924 = vrot.lane.b32.xlu0 %v3793, 32
      %v3925 = vpop.permute.xlu0 %3924
      %vm3928 = vcmask 294144
      %3929 = vst.msk [vmem:[%s173] sm:$0xff] %vm3928, %v3923
      %3930 = vst.msk [vmem:[%s173 + $0x8] sm:$0xff] %vm3928, %v3925
      %3933 = vrot.lane.b32.xlu0 %v3794, 36
      %v3934 = vpop.permute.xlu0 %3933
      %3935 = vrot.lane.b32.xlu0 %v3795, 36
      %v3936 = vpop.permute.xlu0 %3935
      %vm3939 = vcmask 326944
      %3940 = vst.msk [vmem:[%s173] sm:$0xff] %vm3939, %v3934
      %3941 = vst.msk [vmem:[%s173 + $0x8] sm:$0xff] %vm3939, %v3936
      %3944 = vrot.lane.b32.xlu0 %v3796, 40
      %v3945 = vpop.permute.xlu0 %3944
      %3946 = vrot.lane.b32.xlu0 %v3797, 40
      %v3947 = vpop.permute.xlu0 %3946
      %vm3950 = vcmask 359744
      %3951 = vst.msk [vmem:[%s173] sm:$0xff] %vm3950, %v3945
      %3952 = vst.msk [vmem:[%s173 + $0x8] sm:$0xff] %vm3950, %v3947
      %3955 = vrot.lane.b32.xlu0 %v3798, 44
      %v3956 = vpop.permute.xlu0 %3955
      %3957 = vrot.lane.b32.xlu0 %v3799, 44
      %v3958 = vpop.permute.xlu0 %3957
      %vm3961 = vcmask 392544
      %3962 = vst.msk [vmem:[%s173] sm:$0xff] %vm3961, %v3956
      %3963 = vst.msk [vmem:[%s173 + $0x8] sm:$0xff] %vm3961, %v3958
      %3966 = vrot.lane.b32.xlu0 %v3800, 48
      %v3967 = vpop.permute.xlu0 %3966
      %3968 = vrot.lane.b32.xlu0 %v3801, 48
      %v3969 = vpop.permute.xlu0 %3968
      %vm3972 = vcmask 425344
      %3973 = vst.msk [vmem:[%s173] sm:$0xff] %vm3972, %v3967
      %3974 = vst.msk [vmem:[%s173 + $0x8] sm:$0xff] %vm3972, %v3969
      %3977 = vrot.lane.b32.xlu0 %v3802, 52
      %v3978 = vpop.permute.xlu0 %3977
      %3979 = vrot.lane.b32.xlu0 %v3803, 52
      %v3980 = vpop.permute.xlu0 %3979
      %vm3983 = vcmask 458144
      %3984 = vst.msk [vmem:[%s173] sm:$0xff] %vm3983, %v3978
      %3985 = vst.msk [vmem:[%s173 + $0x8] sm:$0xff] %vm3983, %v3980
      %3988 = vrot.lane.b32.xlu0 %v3804, 56
      %v3989 = vpop.permute.xlu0 %3988
      %3990 = vrot.lane.b32.xlu0 %v3805, 56
      %v3991 = vpop.permute.xlu0 %3990
      %vm3994 = vcmask 490944
      %3995 = vst.msk [vmem:[%s173] sm:$0xff] %vm3994, %v3989
      %3996 = vst.msk [vmem:[%s173 + $0x8] sm:$0xff] %vm3994, %v3991
      %3999 = vrot.lane.b32.xlu0 %v3806, 60
      %v4000 = vpop.permute.xlu0 %3999
      %4001 = vrot.lane.b32.xlu0 %v3807, 60
      %v4002 = vpop.permute.xlu0 %4001
      %vm4005 = vcmask 523744
      %4006 = vst.msk [vmem:[%s173] sm:$0xff] %vm4005, %v4000
      %4007 = vst.msk [vmem:[%s173 + $0x8] sm:$0xff] %vm4005, %v4002
      %4010 = vrot.lane.b32.xlu0 %v3808, 64
      %v4011 = vpop.permute.xlu0 %4010
      %4012 = vrot.lane.b32.xlu0 %v3809, 64
      %v4013 = vpop.permute.xlu0 %4012
      %vm4016 = vcmask 556544
      %4017 = vst.msk [vmem:[%s173] sm:$0xff] %vm4016, %v4011
      %4018 = vst.msk [vmem:[%s173 + $0x8] sm:$0xff] %vm4016, %v4013
      %4021 = vrot.lane.b32.xlu0 %v3810, 68
      %v4022 = vpop.permute.xlu0 %4021
      %4023 = vrot.lane.b32.xlu0 %v3811, 68
      %v4024 = vpop.permute.xlu0 %4023
      %vm4027 = vcmask 589344
      %4028 = vst.msk [vmem:[%s173] sm:$0xff] %vm4027, %v4022
      %4029 = vst.msk [vmem:[%s173 + $0x8] sm:$0xff] %vm4027, %v4024
      %4032 = vrot.lane.b32.xlu0 %v3812, 72
      %v4033 = vpop.permute.xlu0 %4032
      %4034 = vrot.lane.b32.xlu0 %v3813, 72
      %v4035 = vpop.permute.xlu0 %4034
      %vm4038 = vcmask 622144
      %4039 = vst.msk [vmem:[%s173] sm:$0xff] %vm4038, %v4033
      %4040 = vst.msk [vmem:[%s173 + $0x8] sm:$0xff] %vm4038, %v4035
      %4043 = vrot.lane.b32.xlu0 %v3814, 76
      %v4044 = vpop.permute.xlu0 %4043
      %4045 = vrot.lane.b32.xlu0 %v3815, 76
      %v4046 = vpop.permute.xlu0 %4045
      %vm4049 = vcmask 654944
      %4050 = vst.msk [vmem:[%s173] sm:$0xff] %vm4049, %v4044
      %4051 = vst.msk [vmem:[%s173 + $0x8] sm:$0xff] %vm4049, %v4046
      %4054 = vrot.lane.b32.xlu0 %v3816, 80
      %v4055 = vpop.permute.xlu0 %4054
      %4056 = vrot.lane.b32.xlu0 %v3817, 80
      %v4057 = vpop.permute.xlu0 %4056
      %vm4060 = vcmask 687744
      %4061 = vst.msk [vmem:[%s173] sm:$0xff] %vm4060, %v4055
      %4062 = vst.msk [vmem:[%s173 + $0x8] sm:$0xff] %vm4060, %v4057
      %4065 = vrot.lane.b32.xlu0 %v3818, 84
      %v4066 = vpop.permute.xlu0 %4065
      %4067 = vrot.lane.b32.xlu0 %v3819, 84
      %v4068 = vpop.permute.xlu0 %4067
      %vm4071 = vcmask 720544
      %4072 = vst.msk [vmem:[%s173] sm:$0xff] %vm4071, %v4066
      %4073 = vst.msk [vmem:[%s173 + $0x8] sm:$0xff] %vm4071, %v4068
      %4076 = vrot.lane.b32.xlu0 %v3820, 88
      %v4077 = vpop.permute.xlu0 %4076
      %4078 = vrot.lane.b32.xlu0 %v3821, 88
      %v4079 = vpop.permute.xlu0 %4078
      %vm4082 = vcmask 753344
      %4083 = vst.msk [vmem:[%s173] sm:$0xff] %vm4082, %v4077
      %4084 = vst.msk [vmem:[%s173 + $0x8] sm:$0xff] %vm4082, %v4079
      %4087 = vrot.lane.b32.xlu0 %v3822, 92
      %v4088 = vpop.permute.xlu0 %4087
      %4089 = vrot.lane.b32.xlu0 %v3823, 92
      %v4090 = vpop.permute.xlu0 %4089
      %vm4093 = vcmask 786144
      %4094 = vst.msk [vmem:[%s173] sm:$0xff] %vm4093, %v4088
      %4095 = vst.msk [vmem:[%s173 + $0x8] sm:$0xff] %vm4093, %v4090
      %4098 = vrot.lane.b32.xlu0 %v3824, 96
      %v4099 = vpop.permute.xlu0 %4098
      %4100 = vrot.lane.b32.xlu0 %v3825, 96
      %v4101 = vpop.permute.xlu0 %4100
      %vm4104 = vcmask 818944
      %4105 = vst.msk [vmem:[%s173] sm:$0xff] %vm4104, %v4099
      %4106 = vst.msk [vmem:[%s173 + $0x8] sm:$0xff] %vm4104, %v4101
      %4109 = vrot.lane.b32.xlu0 %v3826, 100
      %v4110 = vpop.permute.xlu0 %4109
      %4111 = vrot.lane.b32.xlu0 %v3827, 100
      %v4112 = vpop.permute.xlu0 %4111
      %vm4115 = vcmask 851744
      %4116 = vst.msk [vmem:[%s173] sm:$0xff] %vm4115, %v4110
      %4117 = vst.msk [vmem:[%s173 + $0x8] sm:$0xff] %vm4115, %v4112
      %4120 = vrot.lane.b32.xlu0 %v3828, 104
      %v4121 = vpop.permute.xlu0 %4120
      %4122 = vrot.lane.b32.xlu0 %v3829, 104
      %v4123 = vpop.permute.xlu0 %4122
      %vm4126 = vcmask 884544
      %4127 = vst.msk [vmem:[%s173] sm:$0xff] %vm4126, %v4121
      %4128 = vst.msk [vmem:[%s173 + $0x8] sm:$0xff] %vm4126, %v4123
      %4131 = vrot.lane.b32.xlu0 %v3830, 108
      %v4132 = vpop.permute.xlu0 %4131
      %4133 = vrot.lane.b32.xlu0 %v3831, 108
      %v4134 = vpop.permute.xlu0 %4133
      %vm4137 = vcmask 917344
      %4138 = vst.msk [vmem:[%s173] sm:$0xff] %vm4137, %v4132
      %4139 = vst.msk [vmem:[%s173 + $0x8] sm:$0xff] %vm4137, %v4134
      %4142 = vrot.lane.b32.xlu0 %v3832, 112
      %v4143 = vpop.permute.xlu0 %4142
      %4144 = vrot.lane.b32.xlu0 %v3833, 112
      %v4145 = vpop.permute.xlu0 %4144
      %vm4148 = vcmask 950144
      %4149 = vst.msk [vmem:[%s173] sm:$0xff] %vm4148, %v4143
      %4150 = vst.msk [vmem:[%s173 + $0x8] sm:$0xff] %vm4148, %v4145
      %4153 = vrot.lane.b32.xlu0 %v3834, 116
      %v4154 = vpop.permute.xlu0 %4153
      %4155 = vrot.lane.b32.xlu0 %v3835, 116
      %v4156 = vpop.permute.xlu0 %4155
      %vm4159 = vcmask 982944
      %4160 = vst.msk [vmem:[%s173] sm:$0xff] %vm4159, %v4154
      %4161 = vst.msk [vmem:[%s173 + $0x8] sm:$0xff] %vm4159, %v4156
      %4164 = vrot.lane.b32.xlu0 %v3836, 120
      %v4165 = vpop.permute.xlu0 %4164
      %4166 = vrot.lane.b32.xlu0 %v3837, 120
      %v4167 = vpop.permute.xlu0 %4166
      %vm4170 = vcmask 1015744
      %4171 = vst.msk [vmem:[%s173] sm:$0xff] %vm4170, %v4165
      %4172 = vst.msk [vmem:[%s173 + $0x8] sm:$0xff] %vm4170, %v4167
      %4175 = vrot.lane.b32.xlu0 %v3838, 124
      %v4176 = vpop.permute.xlu0 %4175
      %4177 = vrot.lane.b32.xlu0 %v3839, 124
      %v4178 = vpop.permute.xlu0 %4177
      %vm4181 = vcmask 1048544
      %4182 = vst.msk [vmem:[%s173] sm:$0xff] %vm4181, %v4176
      %4183 = vst.msk [vmem:[%s173 + $0x8] sm:$0xff] %vm4181, %v4178
      %p4184 = scmp.lt.s32.totalorder %s13, 1
      %s4185 = scalar_select %p4184, %s13, 1
      %s4186 = smul.addr %s4185, 2
      %s4187 = smul.addr %s4186, 8
      %s4188 = scalar_lea.vmem %s2, %s4187
      // Predicated region
      $region29: #{meta_metric_forward.1} parent=27 // pred_check
        %p4189 = pneg %p83
      $region30: #{meta_metric_forward.1} parent=27 // pred_check_branch
        %4191 = sbr.rel (%p4189) target = $region32
      $region31: #{meta_metric_forward.1} parent=27 // pred_region
        _
      $region32: #{meta_metric_forward.1} parent=27 // pred_fallthru
        _
    $region28: #{meta_metric_forward.1} parent=5 // pred_fallthru
      _
    %p4192 = scmp.le.s32.totalorder 2, %s8
    // Predicated region
    $region33: #{meta_metric_forward.1} parent=5 // pred_check
      %p4193 = pneg %p4192
    $region34: #{meta_metric_forward.1} parent=5 // pred_check_branch
      %4195 = sbr.rel (%p4193) target = $region36
    $region35: #{meta_metric_forward.1} parent=5 // pred_region
      %s4196 = ssub.s32 %s8, 2
      // Predicated region
      $region37: #{meta_metric_forward.1} parent=35 // pred_check
        %p4197 = pneg %p89
      $region38: #{meta_metric_forward.1} parent=35 // pred_check_branch
        %4199 = sbr.rel (%p4197) target = $region40
      $region39: #{meta_metric_forward.1} parent=35 // pred_region
        %p4200 = scmp.lt.s32.totalorder %s14, 1
        %s4201 = scalar_select %p4200, %s14, 1
        %s4202 = smul.addr %s4201, 2
        %s4203 = smul.addr %s4202, 8
        %s4204 = scalar_lea.vmem %s2, %s4203
      $region40: #{meta_metric_forward.1} parent=35 // pred_fallthru
        _
    $region36: #{meta_metric_forward.1} parent=5 // pred_fallthru
      _
  $region6: #{meta_metric_forward.1} parent=0 // loop_footer
    %s12 = sadd.s32 1, %s8
  $region7: #{meta_metric_forward.1} parent=0 // loop_footer_branch
    %7 = sbr.rel target = $region3
  $region8: #{meta_metric_forward.1} parent=0 // loop_exit
    _

</llo_original>
